<compile_context>
chip_gen: v7x
topology: tpu7x:2x2x1
jax: 0.10.0
libtpu: 0.0.40
codegen_flags: <defaults>
</compile_context>

<pallas_src>
import functools
import math
from typing import NamedTuple, Any

import jax
import jax.numpy as jnp
from jax.experimental import pallas as pl
from jax.experimental.pallas import tpu as pltpu


# ---------------------------------------------------------------------------
# Pallas kernel: tiled GEMM (bf16 x bf16 -> f32 acc) + bias + LeakyReLU
# ---------------------------------------------------------------------------
def _gemm_bias_act_kernel(x_ref, w_ref, b_ref, o_ref, acc_ref, *,
                          apply_lrelu, slope):
    k = pl.program_id(2)

    @pl.when(k == 0)
    def _init():
        acc_ref[...] = jnp.zeros_like(acc_ref)

    acc_ref[...] += jnp.dot(x_ref[...], w_ref[...],
                            preferred_element_type=jnp.float32)

    @pl.when(k == pl.num_programs(2) - 1)
    def _finalize():
        acc = acc_ref[...] + b_ref[...]          # (1, tn) f32 broadcasts over M
        if apply_lrelu:
            acc = jnp.where(acc >= 0.0, acc, slope * acc)
        o_ref[...] = acc.astype(o_ref.dtype)


def _round_up(x, m):
    return ((x + m - 1) // m) * m


def _pad_axis(x, target, axis):
    pad = target - x.shape[axis]
    if pad == 0:
        return x
    widths = [(0, 0)] * x.ndim
    widths[axis] = (0, pad)
    return jnp.pad(x, widths)


def gemm_bias_act(patches, w_mat, b_row, apply_lrelu, out_dtype, slope=0.01):
    """patches: (M, K) bf16, w_mat: (K, N) bf16, b_row: (1, N) f32 -> (M, N)."""
    M, K = patches.shape
    Kw, N = w_mat.shape
    assert K == Kw

    # ---- tile selection (kept well under 32 MiB scoped VMEM, incl. 2x
    #      double-buffering of every input block) -------------------------
    tm = min(512, _round_up(M, 16))          # 16-row aligned (bf16 sublane tile)
    if N <= 256:
        tn, Np = N, N                        # full-N block: no lane padding
    else:
        tn = 256                             # v5e-friendly output width
        Np = _round_up(N, tn)
    if K <= 4096:
        tk, Kp = K, K                        # single reduction step, no K pad
    else:
        tk = 2048
        Kp = _round_up(K, tk)
    Mp = _round_up(M, tm)

    x_p = _pad_axis(_pad_axis(patches, Mp, 0), Kp, 1)
    w_p = _pad_axis(_pad_axis(w_mat, Kp, 0), Np, 1)
    b_p = _pad_axis(b_row, Np, 1)

    grid = (Mp // tm, Np // tn, Kp // tk)

    kernel = functools.partial(_gemm_bias_act_kernel,
                               apply_lrelu=apply_lrelu, slope=slope)

    out = pl.pallas_call(
        kernel,
        out_shape=jax.ShapeDtypeStruct((Mp, Np), out_dtype),
        grid_spec=pltpu.PrefetchScalarGridSpec(
            num_scalar_prefetch=0,
            grid=grid,
            in_specs=[
                pl.BlockSpec((tm, tk), lambda i, j, k: (i, k)),
                pl.BlockSpec((tk, tn), lambda i, j, k: (k, j)),
                pl.BlockSpec((1, tn), lambda i, j, k: (0, j)),
            ],
            out_specs=pl.BlockSpec((tm, tn), lambda i, j, k: (i, j)),
            scratch_shapes=[pltpu.VMEM((tm, tn), jnp.float32)],
        ),
        compiler_params=pltpu.CompilerParams(
            dimension_semantics=("parallel", "parallel", "arbitrary"),
            vmem_limit_bytes=32 * 1024 * 1024,
        ),
    )(x_p, w_p, b_p)

    if (Mp, Np) != (M, N):
        out = out[:M, :N]
    return out


# ---------------------------------------------------------------------------
# Conv2d = im2col (XLA glue) + Pallas GEMM
# ---------------------------------------------------------------------------
def _im2col(x_nhwc, kh, kw, stride, padding):
    B, H, W, C = x_nhwc.shape
    if padding:
        x_nhwc = jnp.pad(
            x_nhwc, ((0, 0), (padding, padding), (padding, padding), (0, 0)))
    Ho = (H + 2 * padding - kh) // stride + 1
    Wo = (W + 2 * padding - kw) // stride + 1
    cols = []
    for i in range(kh):
        for j in range(kw):
            cols.append(
                x_nhwc[:, i:i + stride * Ho:stride, j:j + stride * Wo:stride, :])
    cols = jnp.concatenate(cols, axis=-1)      # (B, Ho, Wo, kh*kw*C), (kh,kw,C) order
    return cols.reshape(B * Ho * Wo, kh * kw * C), Ho, Wo


class ConvCfg(NamedTuple):
    kh: int
    kw: int
    stride: int
    padding: int
    apply_lrelu: bool
    out_dtype: Any


# ---------------------------------------------------------------------------
# Parameter init (PyTorch Conv2d default-style) and one-time prep
# ---------------------------------------------------------------------------
def init_discriminator_params(key, img_shape=(3, 16, 16), n_attrs=5, n_strided=3):
    channels, img_size, _ = img_shape
    blocks = []
    in_c, out_c = channels, 64
    for _ in range(n_strided):
        key, kw_, kb_ = jax.random.split(key, 3)
        fan_in = in_c * 4 * 4
        bound = 1.0 / math.sqrt(fan_in)
        w = jax.random.uniform(kw_, (out_c, in_c, 4, 4), jnp.float32, -bound, bound)
        b = jax.random.uniform(kb_, (out_c,), jnp.float32, -bound, bound)
        blocks.append({"w": w, "b": b})
        in_c, out_c = out_c, out_c * 2
    curr = in_c

    key, k1, k2 = jax.random.split(key, 3)
    bound1 = 1.0 / math.sqrt(curr * 3 * 3)
    w_out1 = jax.random.uniform(k1, (1, curr, 3, 3), jnp.float32, -bound1, bound1)

    k_size = img_size // (2 ** n_strided)
    bound2 = 1.0 / math.sqrt(curr * k_size * k_size)
    w_out2 = jax.random.uniform(k2, (n_attrs, curr, k_size, k_size),
                                jnp.float32, -bound2, bound2)
    return {"blocks": blocks, "out1": w_out1, "out2": w_out2}


def prepare_discriminator(params):
    """Hoist weight re-layout / bias row / bf16 cast out of the forward pass."""
    weights, cfgs = [], []

    def prep(w_oikk, b, stride, padding, lrelu, out_dtype):
        C_out, C_in, kh, kw = w_oikk.shape
        w_mat = jnp.transpose(w_oikk, (2, 3, 1, 0)).reshape(kh * kw * C_in, C_out)
        w_mat = w_mat.astype(jnp.bfloat16)
        if b is None:
            b = jnp.zeros((C_out,), jnp.float32)
        b_row = b.reshape(1, C_out).astype(jnp.float32)
        weights.append({"w": w_mat, "b": b_row})
        cfgs.append(ConvCfg(kh, kw, stride, padding, lrelu, out_dtype))

    for blk in params["blocks"]:
        prep(blk["w"], blk["b"], stride=2, padding=1, lrelu=True,
             out_dtype=jnp.bfloat16)                       # feeds next conv
    prep(params["out1"], None, stride=1, padding=1, lrelu=False,
         out_dtype=jnp.float32)
    prep(params["out2"], None, stride=1, padding=0, lrelu=False,
         out_dtype=jnp.float32)
    return weights, tuple(cfgs)


# ---------------------------------------------------------------------------
# Forward pass (matches Discriminator.forward semantics)
# ---------------------------------------------------------------------------
def make_forward(cfgs):
    n_strided = len(cfgs) - 2

    @jax.jit
    def forward(weights, img_nchw):
        x = jnp.transpose(img_nchw, (0, 2, 3, 1)).astype(jnp.bfloat16)  # NHWC
        B = x.shape[0]

        def run(idx, x_in):
            cfg = cfgs[idx]
            w = weights[idx]
            patches, Ho, Wo = _im2col(x_in, cfg.kh, cfg.kw, cfg.stride, cfg.padding)
            out = gemm_bias_act(patches, w["w"], w["b"],
                                cfg.apply_lrelu, cfg.out_dtype)
            return out.reshape(B, Ho, Wo, -1)

        for idx in range(n_strided):
            x = run(idx, x)
        out_adv = run(n_strided, x)                 # (B, feat, feat, 1)
        out_cls = run(n_strided + 1, x)             # (B, 1, 1, n_attrs)
        out_adv = jnp.transpose(out_adv, (0, 3, 1, 2))      # -> NCHW
        out_cls = out_cls.reshape(out_cls.shape[0], -1)     # == view(B, -1)
        return out_adv, out_cls

    return forward


if __name__ == "__main__":
    key = jax.random.PRNGKey(0)
    k_img, k_par = jax.random.split(key)

    # Small, architecture-consistent config: 16x16 RGB, n_strided=3
    # (16 // 2**3 = 2, valid), 5 attribute classes.
    B, C, S = 2, 3, 16
    n_strided, n_attrs = 3, 5

    img = jax.random.normal(k_img, (B, C, S, S), jnp.float32)
    params = init_discriminator_params(k_par, img_shape=(C, S, S),
                                       n_attrs=n_attrs, n_strided=n_strided)
    weights, cfgs = prepare_discriminator(params)
    forward = make_forward(cfgs)

    out_adv, out_cls = forward(weights, img)
    jax.block_until_ready((out_adv, out_cls))

    feat = S // (2 ** n_strided)
    assert out_adv.shape == (B, 1, feat, feat), out_adv.shape
    assert out_cls.shape == (B, n_attrs), out_cls.shape
    print("KERNEL_OK")
</pallas_src>

<mosaic_0001>
module attributes {stable_mosaic.version = 11 : i64} {
  func.func @_gemm_bias_act_kernel(%arg0: i32, %arg1: i32, %arg2: i32, %arg3: memref<128x48xbf16, #tpu.memory_space<vmem>>, %arg4: memref<48x64xbf16, #tpu.memory_space<vmem>>, %arg5: memref<1x64xf32, #tpu.memory_space<vmem>>, %arg6: memref<128x64xbf16, #tpu.memory_space<vmem>>, %arg7: memref<128x64xf32, #tpu.memory_space<vmem>>) attributes {dimension_semantics = [#tpu.dimension_semantics<parallel>, #tpu.dimension_semantics<parallel>, #tpu.dimension_semantics<arbitrary>], iteration_bounds = array<i64: 1, 1, 1>, scalar_prefetch = 0 : i64, scratch_operands = 1 : i64, tpu.core_type = #tpu.core_type<tc>, window_params = [{transform_indices = @transform_0, window_bounds = array<i64: 128, 48>}, {transform_indices = @transform_1, window_bounds = array<i64: 48, 64>}, {transform_indices = @transform_2, window_bounds = array<i64: 1, 64>}, {transform_indices = @transform_3, window_bounds = array<i64: 128, 64>}]} {
    %c0_i32 = arith.constant 0 : i32
    %0 = arith.cmpi eq, %arg2, %c0_i32 : i32
    %1 = arith.extui %0 : i1 to i32
    %c0_i32_0 = arith.constant 0 : i32
    %2 = arith.cmpi ne, %1, %c0_i32_0 : i32
    scf.if %2 {
      %cst_10 = arith.constant 0.000000e+00 : f32
      %12 = vector.broadcast %cst_10 : f32 to vector<128x64xf32>
      %c0_11 = arith.constant 0 : index
      %c0_12 = arith.constant 0 : index
      %13 = vector.load %arg7[%c0_11, %c0_12] : memref<128x64xf32, #tpu.memory_space<vmem>>, vector<128x64xf32>
      tpu.vector_store %arg7[%c0_11, %c0_12], %12 {strides = array<i32>} : memref<128x64xf32, #tpu.memory_space<vmem>>, vector<128x64xf32>,
    } else {
    }
    %c0 = arith.constant 0 : index
    %c0_1 = arith.constant 0 : index
    %3 = vector.load %arg7[%c0, %c0_1] : memref<128x64xf32, #tpu.memory_space<vmem>>, vector<128x64xf32>
    %c0_2 = arith.constant 0 : index
    %c0_3 = arith.constant 0 : index
    %4 = vector.load %arg3[%c0_2, %c0_3] : memref<128x48xbf16, #tpu.memory_space<vmem>>, vector<128x48xbf16>
    %c0_4 = arith.constant 0 : index
    %c0_5 = arith.constant 0 : index
    %5 = vector.load %arg4[%c0_4, %c0_5] : memref<48x64xbf16, #tpu.memory_space<vmem>>, vector<48x64xbf16>
    %cst = arith.constant dense<0.000000e+00> : vector<128x64xf32>
    %6 = tpu.matmul %4, %5, %cst {dimension_numbers = #tpu.dot_dimension_numbers<[1], [0], [0], [1], [0, 0, 1, 1], [], []>} : vector<128x48xbf16>, vector<48x64xbf16>, vector<128x64xf32> -> vector<128x64xf32>
    %7 = arith.addf %3, %6 : vector<128x64xf32>
    %c0_6 = arith.constant 0 : index
    %c0_7 = arith.constant 0 : index
    %8 = vector.load %arg7[%c0_6, %c0_7] : memref<128x64xf32, #tpu.memory_space<vmem>>, vector<128x64xf32>
    tpu.vector_store %arg7[%c0_6, %c0_7], %7 {strides = array<i32>} : memref<128x64xf32, #tpu.memory_space<vmem>>, vector<128x64xf32>,
    %c0_i32_8 = arith.constant 0 : i32
    %9 = arith.cmpi eq, %arg2, %c0_i32_8 : i32
    %10 = arith.extui %9 : i1 to i32
    %c0_i32_9 = arith.constant 0 : i32
    %11 = arith.cmpi ne, %10, %c0_i32_9 : i32
    scf.if %11 {
      %c0_10 = arith.constant 0 : index
      %c0_11 = arith.constant 0 : index
      %12 = vector.load %arg7[%c0_10, %c0_11] : memref<128x64xf32, #tpu.memory_space<vmem>>, vector<128x64xf32>
      %c0_12 = arith.constant 0 : index
      %c0_13 = arith.constant 0 : index
      %13 = vector.load %arg5[%c0_12, %c0_13] : memref<1x64xf32, #tpu.memory_space<vmem>>, vector<1x64xf32>
      %14 = vector.broadcast %13 : vector<1x64xf32> to vector<128x64xf32>
      %15 = arith.addf %12, %14 : vector<128x64xf32>
      %cst_14 = arith.constant 0.000000e+00 : f32
      %16 = vector.broadcast %cst_14 : f32 to vector<128x64xf32>
      %17 = arith.cmpf oge, %15, %16 : vector<128x64xf32>
      %cst_15 = arith.constant 0.00999999977 : f32
      %18 = vector.broadcast %cst_15 : f32 to vector<128x64xf32>
      %19 = arith.mulf %18, %15 : vector<128x64xf32>
      %20 = arith.select %17, %15, %19 : vector<128x64xi1>, vector<128x64xf32>
      %21 = arith.truncf %20 : vector<128x64xf32> to vector<128x64xbf16>
      %c0_16 = arith.constant 0 : index
      %c0_17 = arith.constant 0 : index
      %22 = vector.load %arg6[%c0_16, %c0_17] : memref<128x64xbf16, #tpu.memory_space<vmem>>, vector<128x64xbf16>
      tpu.vector_store %arg6[%c0_16, %c0_17], %21 {strides = array<i32>} : memref<128x64xbf16, #tpu.memory_space<vmem>>, vector<128x64xbf16>,
    } else {
    }
    return
  }
  func.func @transform_0(%arg0: i32, %arg1: i32, %arg2: i32) -> (i32, i32) {
    %c0_i32 = arith.constant 0 : i32
    return %arg0, %arg2 : i32, i32
  }
  func.func @transform_1(%arg0: i32, %arg1: i32, %arg2: i32) -> (i32, i32) {
    %c0_i32 = arith.constant 0 : i32
    return %arg2, %arg1 : i32, i32
  }
  func.func @transform_2(%arg0: i32, %arg1: i32, %arg2: i32) -> (i32, i32) {
    %c0_i32 = arith.constant 0 : i32
    %c0_i32_0 = arith.constant 0 : i32
    return %c0_i32, %arg1 : i32, i32
  }
  func.func @transform_3(%arg0: i32, %arg1: i32, %arg2: i32) -> (i32, i32) {
    %c0_i32 = arith.constant 0 : i32
    return %arg0, %arg1 : i32, i32
  }
}

module attributes {stable_mosaic.version = 11 : i64} {
  func.func @_gemm_bias_act_kernel(%arg0: i32, %arg1: i32, %arg2: i32, %arg3: memref<32x1024xbf16, #tpu.memory_space<vmem>>, %arg4: memref<1024x128xbf16, #tpu.memory_space<vmem>>, %arg5: memref<1x128xf32, #tpu.memory_space<vmem>>, %arg6: memref<32x128xbf16, #tpu.memory_space<vmem>>, %arg7: memref<32x128xf32, #tpu.memory_space<vmem>>) attributes {dimension_semantics = [#tpu.dimension_semantics<parallel>, #tpu.dimension_semantics<parallel>, #tpu.dimension_semantics<arbitrary>], iteration_bounds = array<i64: 1, 1, 1>, scalar_prefetch = 0 : i64, scratch_operands = 1 : i64, tpu.core_type = #tpu.core_type<tc>, window_params = [{transform_indices = @transform_0, window_bounds = array<i64: 32, 1024>}, {transform_indices = @transform_1, window_bounds = array<i64: 1024, 128>}, {transform_indices = @transform_2, window_bounds = array<i64: 1, 128>}, {transform_indices = @transform_3, window_bounds = array<i64: 32, 128>}]} {
    %c0_i32 = arith.constant 0 : i32
    %0 = arith.cmpi eq, %arg2, %c0_i32 : i32
    %1 = arith.extui %0 : i1 to i32
    %c0_i32_0 = arith.constant 0 : i32
    %2 = arith.cmpi ne, %1, %c0_i32_0 : i32
    scf.if %2 {
      %cst_10 = arith.constant 0.000000e+00 : f32
      %12 = vector.broadcast %cst_10 : f32 to vector<32x128xf32>
      %c0_11 = arith.constant 0 : index
      %c0_12 = arith.constant 0 : index
      %13 = vector.load %arg7[%c0_11, %c0_12] : memref<32x128xf32, #tpu.memory_space<vmem>>, vector<32x128xf32>
      tpu.vector_store %arg7[%c0_11, %c0_12], %12 {strides = array<i32>} : memref<32x128xf32, #tpu.memory_space<vmem>>, vector<32x128xf32>,
    } else {
    }
    %c0 = arith.constant 0 : index
    %c0_1 = arith.constant 0 : index
    %3 = vector.load %arg7[%c0, %c0_1] : memref<32x128xf32, #tpu.memory_space<vmem>>, vector<32x128xf32>
    %c0_2 = arith.constant 0 : index
    %c0_3 = arith.constant 0 : index
    %4 = vector.load %arg3[%c0_2, %c0_3] : memref<32x1024xbf16, #tpu.memory_space<vmem>>, vector<32x1024xbf16>
    %c0_4 = arith.constant 0 : index
    %c0_5 = arith.constant 0 : index
    %5 = vector.load %arg4[%c0_4, %c0_5] : memref<1024x128xbf16, #tpu.memory_space<vmem>>, vector<1024x128xbf16>
    %cst = arith.constant dense<0.000000e+00> : vector<32x128xf32>
    %6 = tpu.matmul %4, %5, %cst {dimension_numbers = #tpu.dot_dimension_numbers<[1], [0], [0], [1], [0, 0, 1, 1], [], []>} : vector<32x1024xbf16>, vector<1024x128xbf16>, vector<32x128xf32> -> vector<32x128xf32>
    %7 = arith.addf %3, %6 : vector<32x128xf32>
    %c0_6 = arith.constant 0 : index
    %c0_7 = arith.constant 0 : index
    %8 = vector.load %arg7[%c0_6, %c0_7] : memref<32x128xf32, #tpu.memory_space<vmem>>, vector<32x128xf32>
    tpu.vector_store %arg7[%c0_6, %c0_7], %7 {strides = array<i32>} : memref<32x128xf32, #tpu.memory_space<vmem>>, vector<32x128xf32>,
    %c0_i32_8 = arith.constant 0 : i32
    %9 = arith.cmpi eq, %arg2, %c0_i32_8 : i32
    %10 = arith.extui %9 : i1 to i32
    %c0_i32_9 = arith.constant 0 : i32
    %11 = arith.cmpi ne, %10, %c0_i32_9 : i32
    scf.if %11 {
      %c0_10 = arith.constant 0 : index
      %c0_11 = arith.constant 0 : index
      %12 = vector.load %arg7[%c0_10, %c0_11] : memref<32x128xf32, #tpu.memory_space<vmem>>, vector<32x128xf32>
      %c0_12 = arith.constant 0 : index
      %c0_13 = arith.constant 0 : index
      %13 = vector.load %arg5[%c0_12, %c0_13] : memref<1x128xf32, #tpu.memory_space<vmem>>, vector<1x128xf32>
      %14 = vector.broadcast %13 : vector<1x128xf32> to vector<32x128xf32>
      %15 = arith.addf %12, %14 : vector<32x128xf32>
      %cst_14 = arith.constant 0.000000e+00 : f32
      %16 = vector.broadcast %cst_14 : f32 to vector<32x128xf32>
      %17 = arith.cmpf oge, %15, %16 : vector<32x128xf32>
      %cst_15 = arith.constant 0.00999999977 : f32
      %18 = vector.broadcast %cst_15 : f32 to vector<32x128xf32>
      %19 = arith.mulf %18, %15 : vector<32x128xf32>
      %20 = arith.select %17, %15, %19 : vector<32x128xi1>, vector<32x128xf32>
      %21 = arith.truncf %20 : vector<32x128xf32> to vector<32x128xbf16>
      %c0_16 = arith.constant 0 : index
      %c0_17 = arith.constant 0 : index
      %22 = vector.load %arg6[%c0_16, %c0_17] : memref<32x128xbf16, #tpu.memory_space<vmem>>, vector<32x128xbf16>
      tpu.vector_store %arg6[%c0_16, %c0_17], %21 {strides = array<i32>} : memref<32x128xbf16, #tpu.memory_space<vmem>>, vector<32x128xbf16>,
    } else {
    }
    return
  }
  func.func @transform_0(%arg0: i32, %arg1: i32, %arg2: i32) -> (i32, i32) {
    %c0_i32 = arith.constant 0 : i32
    return %arg0, %arg2 : i32, i32
  }
  func.func @transform_1(%arg0: i32, %arg1: i32, %arg2: i32) -> (i32, i32) {
    %c0_i32 = arith.constant 0 : i32
    return %arg2, %arg1 : i32, i32
  }
  func.func @transform_2(%arg0: i32, %arg1: i32, %arg2: i32) -> (i32, i32) {
    %c0_i32 = arith.constant 0 : i32
    %c0_i32_0 = arith.constant 0 : i32
    return %c0_i32, %arg1 : i32, i32
  }
  func.func @transform_3(%arg0: i32, %arg1: i32, %arg2: i32) -> (i32, i32) {
    %c0_i32 = arith.constant 0 : i32
    return %arg0, %arg1 : i32, i32
  }
}

module attributes {stable_mosaic.version = 11 : i64} {
  func.func @_gemm_bias_act_kernel(%arg0: i32, %arg1: i32, %arg2: i32, %arg3: memref<16x2048xbf16, #tpu.memory_space<vmem>>, %arg4: memref<2048x256xbf16, #tpu.memory_space<vmem>>, %arg5: memref<1x256xf32, #tpu.memory_space<vmem>>, %arg6: memref<16x256xbf16, #tpu.memory_space<vmem>>, %arg7: memref<16x256xf32, #tpu.memory_space<vmem>>) attributes {dimension_semantics = [#tpu.dimension_semantics<parallel>, #tpu.dimension_semantics<parallel>, #tpu.dimension_semantics<arbitrary>], iteration_bounds = array<i64: 1, 1, 1>, scalar_prefetch = 0 : i64, scratch_operands = 1 : i64, tpu.core_type = #tpu.core_type<tc>, window_params = [{transform_indices = @transform_0, window_bounds = array<i64: 16, 2048>}, {transform_indices = @transform_1, window_bounds = array<i64: 2048, 256>}, {transform_indices = @transform_2, window_bounds = array<i64: 1, 256>}, {transform_indices = @transform_3, window_bounds = array<i64: 16, 256>}]} {
    %c0_i32 = arith.constant 0 : i32
    %0 = arith.cmpi eq, %arg2, %c0_i32 : i32
    %1 = arith.extui %0 : i1 to i32
    %c0_i32_0 = arith.constant 0 : i32
    %2 = arith.cmpi ne, %1, %c0_i32_0 : i32
    scf.if %2 {
      %cst_10 = arith.constant 0.000000e+00 : f32
      %12 = vector.broadcast %cst_10 : f32 to vector<16x256xf32>
      %c0_11 = arith.constant 0 : index
      %c0_12 = arith.constant 0 : index
      %13 = vector.load %arg7[%c0_11, %c0_12] : memref<16x256xf32, #tpu.memory_space<vmem>>, vector<16x256xf32>
      tpu.vector_store %arg7[%c0_11, %c0_12], %12 {strides = array<i32>} : memref<16x256xf32, #tpu.memory_space<vmem>>, vector<16x256xf32>,
    } else {
    }
    %c0 = arith.constant 0 : index
    %c0_1 = arith.constant 0 : index
    %3 = vector.load %arg7[%c0, %c0_1] : memref<16x256xf32, #tpu.memory_space<vmem>>, vector<16x256xf32>
    %c0_2 = arith.constant 0 : index
    %c0_3 = arith.constant 0 : index
    %4 = vector.load %arg3[%c0_2, %c0_3] : memref<16x2048xbf16, #tpu.memory_space<vmem>>, vector<16x2048xbf16>
    %c0_4 = arith.constant 0 : index
    %c0_5 = arith.constant 0 : index
    %5 = vector.load %arg4[%c0_4, %c0_5] : memref<2048x256xbf16, #tpu.memory_space<vmem>>, vector<2048x256xbf16>
    %cst = arith.constant dense<0.000000e+00> : vector<16x256xf32>
    %6 = tpu.matmul %4, %5, %cst {dimension_numbers = #tpu.dot_dimension_numbers<[1], [0], [0], [1], [0, 0, 1, 1], [], []>} : vector<16x2048xbf16>, vector<2048x256xbf16>, vector<16x256xf32> -> vector<16x256xf32>
    %7 = arith.addf %3, %6 : vector<16x256xf32>
    %c0_6 = arith.constant 0 : index
    %c0_7 = arith.constant 0 : index
    %8 = vector.load %arg7[%c0_6, %c0_7] : memref<16x256xf32, #tpu.memory_space<vmem>>, vector<16x256xf32>
    tpu.vector_store %arg7[%c0_6, %c0_7], %7 {strides = array<i32>} : memref<16x256xf32, #tpu.memory_space<vmem>>, vector<16x256xf32>,
    %c0_i32_8 = arith.constant 0 : i32
    %9 = arith.cmpi eq, %arg2, %c0_i32_8 : i32
    %10 = arith.extui %9 : i1 to i32
    %c0_i32_9 = arith.constant 0 : i32
    %11 = arith.cmpi ne, %10, %c0_i32_9 : i32
    scf.if %11 {
      %c0_10 = arith.constant 0 : index
      %c0_11 = arith.constant 0 : index
      %12 = vector.load %arg7[%c0_10, %c0_11] : memref<16x256xf32, #tpu.memory_space<vmem>>, vector<16x256xf32>
      %c0_12 = arith.constant 0 : index
      %c0_13 = arith.constant 0 : index
      %13 = vector.load %arg5[%c0_12, %c0_13] : memref<1x256xf32, #tpu.memory_space<vmem>>, vector<1x256xf32>
      %14 = vector.broadcast %13 : vector<1x256xf32> to vector<16x256xf32>
      %15 = arith.addf %12, %14 : vector<16x256xf32>
      %cst_14 = arith.constant 0.000000e+00 : f32
      %16 = vector.broadcast %cst_14 : f32 to vector<16x256xf32>
      %17 = arith.cmpf oge, %15, %16 : vector<16x256xf32>
      %cst_15 = arith.constant 0.00999999977 : f32
      %18 = vector.broadcast %cst_15 : f32 to vector<16x256xf32>
      %19 = arith.mulf %18, %15 : vector<16x256xf32>
      %20 = arith.select %17, %15, %19 : vector<16x256xi1>, vector<16x256xf32>
      %21 = arith.truncf %20 : vector<16x256xf32> to vector<16x256xbf16>
      %c0_16 = arith.constant 0 : index
      %c0_17 = arith.constant 0 : index
      %22 = vector.load %arg6[%c0_16, %c0_17] : memref<16x256xbf16, #tpu.memory_space<vmem>>, vector<16x256xbf16>
      tpu.vector_store %arg6[%c0_16, %c0_17], %21 {strides = array<i32>} : memref<16x256xbf16, #tpu.memory_space<vmem>>, vector<16x256xbf16>,
    } else {
    }
    return
  }
  func.func @transform_0(%arg0: i32, %arg1: i32, %arg2: i32) -> (i32, i32) {
    %c0_i32 = arith.constant 0 : i32
    return %arg0, %arg2 : i32, i32
  }
  func.func @transform_1(%arg0: i32, %arg1: i32, %arg2: i32) -> (i32, i32) {
    %c0_i32 = arith.constant 0 : i32
    return %arg2, %arg1 : i32, i32
  }
  func.func @transform_2(%arg0: i32, %arg1: i32, %arg2: i32) -> (i32, i32) {
    %c0_i32 = arith.constant 0 : i32
    %c0_i32_0 = arith.constant 0 : i32
    return %c0_i32, %arg1 : i32, i32
  }
  func.func @transform_3(%arg0: i32, %arg1: i32, %arg2: i32) -> (i32, i32) {
    %c0_i32 = arith.constant 0 : i32
    return %arg0, %arg1 : i32, i32
  }
}

module attributes {stable_mosaic.version = 11 : i64} {
  func.func @_gemm_bias_act_kernel(%arg0: i32, %arg1: i32, %arg2: i32, %arg3: memref<16x1024xbf16, #tpu.memory_space<vmem>>, %arg4: memref<1024x5xbf16, #tpu.memory_space<vmem>>, %arg5: memref<1x5xf32, #tpu.memory_space<vmem>>, %arg6: memref<16x5xf32, #tpu.memory_space<vmem>>, %arg7: memref<16x5xf32, #tpu.memory_space<vmem>>) attributes {dimension_semantics = [#tpu.dimension_semantics<parallel>, #tpu.dimension_semantics<parallel>, #tpu.dimension_semantics<arbitrary>], iteration_bounds = array<i64: 1, 1, 1>, scalar_prefetch = 0 : i64, scratch_operands = 1 : i64, tpu.core_type = #tpu.core_type<tc>, window_params = [{transform_indices = @transform_0, window_bounds = array<i64: 16, 1024>}, {transform_indices = @transform_1, window_bounds = array<i64: 1024, 5>}, {transform_indices = @transform_2, window_bounds = array<i64: 1, 5>}, {transform_indices = @transform_3, window_bounds = array<i64: 16, 5>}]} {
    %c0_i32 = arith.constant 0 : i32
    %0 = arith.cmpi eq, %arg2, %c0_i32 : i32
    %1 = arith.extui %0 : i1 to i32
    %c0_i32_0 = arith.constant 0 : i32
    %2 = arith.cmpi ne, %1, %c0_i32_0 : i32
    scf.if %2 {
      %cst_10 = arith.constant 0.000000e+00 : f32
      %12 = vector.broadcast %cst_10 : f32 to vector<16x5xf32>
      %c0_11 = arith.constant 0 : index
      %c0_12 = arith.constant 0 : index
      %13 = vector.load %arg7[%c0_11, %c0_12] : memref<16x5xf32, #tpu.memory_space<vmem>>, vector<16x5xf32>
      tpu.vector_store %arg7[%c0_11, %c0_12], %12 {strides = array<i32>} : memref<16x5xf32, #tpu.memory_space<vmem>>, vector<16x5xf32>,
    } else {
    }
    %c0 = arith.constant 0 : index
    %c0_1 = arith.constant 0 : index
    %3 = vector.load %arg7[%c0, %c0_1] : memref<16x5xf32, #tpu.memory_space<vmem>>, vector<16x5xf32>
    %c0_2 = arith.constant 0 : index
    %c0_3 = arith.constant 0 : index
    %4 = vector.load %arg3[%c0_2, %c0_3] : memref<16x1024xbf16, #tpu.memory_space<vmem>>, vector<16x1024xbf16>
    %c0_4 = arith.constant 0 : index
    %c0_5 = arith.constant 0 : index
    %5 = vector.load %arg4[%c0_4, %c0_5] : memref<1024x5xbf16, #tpu.memory_space<vmem>>, vector<1024x5xbf16>
    %cst = arith.constant dense<0.000000e+00> : vector<16x5xf32>
    %6 = tpu.matmul %4, %5, %cst {dimension_numbers = #tpu.dot_dimension_numbers<[1], [0], [0], [1], [0, 0, 1, 1], [], []>} : vector<16x1024xbf16>, vector<1024x5xbf16>, vector<16x5xf32> -> vector<16x5xf32>
    %7 = arith.addf %3, %6 : vector<16x5xf32>
    %c0_6 = arith.constant 0 : index
    %c0_7 = arith.constant 0 : index
    %8 = vector.load %arg7[%c0_6, %c0_7] : memref<16x5xf32, #tpu.memory_space<vmem>>, vector<16x5xf32>
    tpu.vector_store %arg7[%c0_6, %c0_7], %7 {strides = array<i32>} : memref<16x5xf32, #tpu.memory_space<vmem>>, vector<16x5xf32>,
    %c0_i32_8 = arith.constant 0 : i32
    %9 = arith.cmpi eq, %arg2, %c0_i32_8 : i32
    %10 = arith.extui %9 : i1 to i32
    %c0_i32_9 = arith.constant 0 : i32
    %11 = arith.cmpi ne, %10, %c0_i32_9 : i32
    scf.if %11 {
      %c0_10 = arith.constant 0 : index
      %c0_11 = arith.constant 0 : index
      %12 = vector.load %arg7[%c0_10, %c0_11] : memref<16x5xf32, #tpu.memory_space<vmem>>, vector<16x5xf32>
      %c0_12 = arith.constant 0 : index
      %c0_13 = arith.constant 0 : index
      %13 = vector.load %arg5[%c0_12, %c0_13] : memref<1x5xf32, #tpu.memory_space<vmem>>, vector<1x5xf32>
      %14 = vector.broadcast %13 : vector<1x5xf32> to vector<16x5xf32>
      %15 = arith.addf %12, %14 : vector<16x5xf32>
      %c0_14 = arith.constant 0 : index
      %c0_15 = arith.constant 0 : index
      %16 = vector.load %arg6[%c0_14, %c0_15] : memref<16x5xf32, #tpu.memory_space<vmem>>, vector<16x5xf32>
      tpu.vector_store %arg6[%c0_14, %c0_15], %15 {strides = array<i32>} : memref<16x5xf32, #tpu.memory_space<vmem>>, vector<16x5xf32>,
    } else {
    }
    return
  }
  func.func @transform_0(%arg0: i32, %arg1: i32, %arg2: i32) -> (i32, i32) {
    %c0_i32 = arith.constant 0 : i32
    return %arg0, %arg2 : i32, i32
  }
  func.func @transform_1(%arg0: i32, %arg1: i32, %arg2: i32) -> (i32, i32) {
    %c0_i32 = arith.constant 0 : i32
    return %arg2, %arg1 : i32, i32
  }
  func.func @transform_2(%arg0: i32, %arg1: i32, %arg2: i32) -> (i32, i32) {
    %c0_i32 = arith.constant 0 : i32
    %c0_i32_0 = arith.constant 0 : i32
    return %c0_i32, %arg1 : i32, i32
  }
  func.func @transform_3(%arg0: i32, %arg1: i32, %arg2: i32) -> (i32, i32) {
    %c0_i32 = arith.constant 0 : i32
    return %arg0, %arg1 : i32, i32
  }
}

module attributes {stable_mosaic.version = 11 : i64} {
  func.func @_gemm_bias_act_kernel(%arg0: i32, %arg1: i32, %arg2: i32, %arg3: memref<16x2304xbf16, #tpu.memory_space<vmem>>, %arg4: memref<2304x1xbf16, #tpu.memory_space<vmem>>, %arg5: memref<1x1xf32, #tpu.memory_space<vmem>>, %arg6: memref<16x1xf32, #tpu.memory_space<vmem>>, %arg7: memref<16x1xf32, #tpu.memory_space<vmem>>) attributes {dimension_semantics = [#tpu.dimension_semantics<parallel>, #tpu.dimension_semantics<parallel>, #tpu.dimension_semantics<arbitrary>], iteration_bounds = array<i64: 1, 1, 1>, scalar_prefetch = 0 : i64, scratch_operands = 1 : i64, tpu.core_type = #tpu.core_type<tc>, window_params = [{transform_indices = @transform_0, window_bounds = array<i64: 16, 2304>}, {transform_indices = @transform_1, window_bounds = array<i64: 2304, 1>}, {transform_indices = @transform_2, window_bounds = array<i64: 1, 1>}, {transform_indices = @transform_3, window_bounds = array<i64: 16, 1>}]} {
    %c0_i32 = arith.constant 0 : i32
    %0 = arith.cmpi eq, %arg2, %c0_i32 : i32
    %1 = arith.extui %0 : i1 to i32
    %c0_i32_0 = arith.constant 0 : i32
    %2 = arith.cmpi ne, %1, %c0_i32_0 : i32
    scf.if %2 {
      %cst_10 = arith.constant 0.000000e+00 : f32
      %12 = vector.broadcast %cst_10 : f32 to vector<16x1xf32>
      %c0_11 = arith.constant 0 : index
      %c0_12 = arith.constant 0 : index
      %13 = vector.load %arg7[%c0_11, %c0_12] : memref<16x1xf32, #tpu.memory_space<vmem>>, vector<16x1xf32>
      tpu.vector_store %arg7[%c0_11, %c0_12], %12 {strides = array<i32>} : memref<16x1xf32, #tpu.memory_space<vmem>>, vector<16x1xf32>,
    } else {
    }
    %c0 = arith.constant 0 : index
    %c0_1 = arith.constant 0 : index
    %3 = vector.load %arg7[%c0, %c0_1] : memref<16x1xf32, #tpu.memory_space<vmem>>, vector<16x1xf32>
    %c0_2 = arith.constant 0 : index
    %c0_3 = arith.constant 0 : index
    %4 = vector.load %arg3[%c0_2, %c0_3] : memref<16x2304xbf16, #tpu.memory_space<vmem>>, vector<16x2304xbf16>
    %c0_4 = arith.constant 0 : index
    %c0_5 = arith.constant 0 : index
    %5 = vector.load %arg4[%c0_4, %c0_5] : memref<2304x1xbf16, #tpu.memory_space<vmem>>, vector<2304x1xbf16>
    %cst = arith.constant dense<0.000000e+00> : vector<16x1xf32>
    %6 = tpu.matmul %4, %5, %cst {dimension_numbers = #tpu.dot_dimension_numbers<[1], [0], [0], [1], [0, 0, 1, 1], [], []>} : vector<16x2304xbf16>, vector<2304x1xbf16>, vector<16x1xf32> -> vector<16x1xf32>
    %7 = arith.addf %3, %6 : vector<16x1xf32>
    %c0_6 = arith.constant 0 : index
    %c0_7 = arith.constant 0 : index
    %8 = vector.load %arg7[%c0_6, %c0_7] : memref<16x1xf32, #tpu.memory_space<vmem>>, vector<16x1xf32>
    tpu.vector_store %arg7[%c0_6, %c0_7], %7 {strides = array<i32>} : memref<16x1xf32, #tpu.memory_space<vmem>>, vector<16x1xf32>,
    %c0_i32_8 = arith.constant 0 : i32
    %9 = arith.cmpi eq, %arg2, %c0_i32_8 : i32
    %10 = arith.extui %9 : i1 to i32
    %c0_i32_9 = arith.constant 0 : i32
    %11 = arith.cmpi ne, %10, %c0_i32_9 : i32
    scf.if %11 {
      %c0_10 = arith.constant 0 : index
      %c0_11 = arith.constant 0 : index
      %12 = vector.load %arg7[%c0_10, %c0_11] : memref<16x1xf32, #tpu.memory_space<vmem>>, vector<16x1xf32>
      %c0_12 = arith.constant 0 : index
      %c0_13 = arith.constant 0 : index
      %13 = vector.load %arg5[%c0_12, %c0_13] : memref<1x1xf32, #tpu.memory_space<vmem>>, vector<1x1xf32>
      %14 = vector.broadcast %13 : vector<1x1xf32> to vector<16x1xf32>
      %15 = arith.addf %12, %14 : vector<16x1xf32>
      %c0_14 = arith.constant 0 : index
      %c0_15 = arith.constant 0 : index
      %16 = vector.load %arg6[%c0_14, %c0_15] : memref<16x1xf32, #tpu.memory_space<vmem>>, vector<16x1xf32>
      tpu.vector_store %arg6[%c0_14, %c0_15], %15 {strides = array<i32>} : memref<16x1xf32, #tpu.memory_space<vmem>>, vector<16x1xf32>,
    } else {
    }
    return
  }
  func.func @transform_0(%arg0: i32, %arg1: i32, %arg2: i32) -> (i32, i32) {
    %c0_i32 = arith.constant 0 : i32
    return %arg0, %arg2 : i32, i32
  }
  func.func @transform_1(%arg0: i32, %arg1: i32, %arg2: i32) -> (i32, i32) {
    %c0_i32 = arith.constant 0 : i32
    return %arg2, %arg1 : i32, i32
  }
  func.func @transform_2(%arg0: i32, %arg1: i32, %arg2: i32) -> (i32, i32) {
    %c0_i32 = arith.constant 0 : i32
    %c0_i32_0 = arith.constant 0 : i32
    return %c0_i32, %arg1 : i32, i32
  }
  func.func @transform_3(%arg0: i32, %arg1: i32, %arg2: i32) -> (i32, i32) {
    %c0_i32 = arith.constant 0 : i32
    return %arg0, %arg1 : i32, i32
  }
}

</mosaic_0001>

<llo_original>
// kernel: forward.5
$region0: #{forward.5}
  #allocation0 [shape = 'u32[]', space=smem, size = 0x4, offset = 0x4, fixed_abs, tag = 'smem constant byte address 0x4 - core index']
  #allocation1 [shape = 'u32[144,128]{1,0:T(1,128)}', space=vmem, size = 0x12000, scoped, tag = 'internal scratch']
  #allocation2 [shape = 'f32[128,64]{1,0:T(8,128)}', space=vmem, size = 0x10000, scoped, tag = 'scratch operand']
  %s0 = inlined_call_operand.vmem [shape: bf16[128,48], index: 0, kind: input, shape index: {}]
  %s1 = inlined_call_operand.vmem [shape: bf16[48,64], index: 1, kind: input, shape index: {}]
  %s2 = inlined_call_operand.vmem [shape: f32[1,64], index: 2, kind: input, shape index: {}]
  %s3 = inlined_call_operand.vmem [shape: bf16[128,64], index: 3, kind: output, shape index: {}]
  %s4 = sld [smem:[#allocation0]]
  $region30: #{forward.5} parent=0
    _
  %s6 = ssub.s32 1, %s4
  %s7 = scalar_select 0, %s6, %s4
  // Predicated region
  $region2: #{forward.5} parent=0 // pred_check
    _
  $region3: #{forward.5} parent=0 // pred_check_branch
    %9 = sbr.rel (0) target = $region5
  $region4: #{forward.5} parent=0 // pred_region
    _
  $region5: #{forward.5} parent=0 // pred_fallthru
    _
  // Predicated region
  $region6: #{forward.5} parent=0 // pred_check
    _
  $region7: #{forward.5} parent=0 // pred_check_branch
    %11 = sbr.rel (0) target = $region9
  $region8: #{forward.5} parent=0 // pred_region
    _
  $region9: #{forward.5} parent=0 // pred_fallthru
    _
  // Predicated region
  $region10: #{forward.5} parent=0 // pred_check
    _
  $region11: #{forward.5} parent=0 // pred_check_branch
    %13 = sbr.rel (0) target = $region13
  $region12: #{forward.5} parent=0 // pred_region
    _
  $region13: #{forward.5} parent=0 // pred_fallthru
    _
  %p15 = scmp.eq.s32.totalorder 0, 0
  // Predicated region
  $region14: #{forward.5} parent=0 // pred_check
    %p16 = pneg %p15
  $region15: #{forward.5} parent=0 // pred_check_branch
    %18 = sbr.rel (%p16) target = $region17
  $region16: #{forward.5} parent=0 // pred_region
    %vm19 = vcmask 523264
    %20 = vst.msk [vmem:[#allocation2] sm:$0xff] %vm19, 0.0
    %21 = vst.msk [vmem:[#allocation2 + $0x8] sm:$0xff] %vm19, 0.0
    %22 = vst.msk [vmem:[#allocation2 + $0x10] sm:$0xff] %vm19, 0.0
    %23 = vst.msk [vmem:[#allocation2 + $0x18] sm:$0xff] %vm19, 0.0
    %24 = vst.msk [vmem:[#allocation2 + $0x20] sm:$0xff] %vm19, 0.0
    %25 = vst.msk [vmem:[#allocation2 + $0x28] sm:$0xff] %vm19, 0.0
    %26 = vst.msk [vmem:[#allocation2 + $0x30] sm:$0xff] %vm19, 0.0
    %27 = vst.msk [vmem:[#allocation2 + $0x38] sm:$0xff] %vm19, 0.0
    %28 = vst.msk [vmem:[#allocation2 + $0x40] sm:$0xff] %vm19, 0.0
    %29 = vst.msk [vmem:[#allocation2 + $0x48] sm:$0xff] %vm19, 0.0
    %30 = vst.msk [vmem:[#allocation2 + $0x50] sm:$0xff] %vm19, 0.0
    %31 = vst.msk [vmem:[#allocation2 + $0x58] sm:$0xff] %vm19, 0.0
    %32 = vst.msk [vmem:[#allocation2 + $0x60] sm:$0xff] %vm19, 0.0
    %33 = vst.msk [vmem:[#allocation2 + $0x68] sm:$0xff] %vm19, 0.0
    %34 = vst.msk [vmem:[#allocation2 + $0x70] sm:$0xff] %vm19, 0.0
    %35 = vst.msk [vmem:[#allocation2 + $0x78] sm:$0xff] %vm19, 0.0
  $region17: #{forward.5} parent=0 // pred_fallthru
    _
  %v36 = vld [vmem:[#allocation2] sm:$0xff]
  %v37 = vld [vmem:[#allocation2 + $0x8] sm:$0xff]
  %v38 = vld [vmem:[#allocation2 + $0x10] sm:$0xff]
  %v39 = vld [vmem:[#allocation2 + $0x18] sm:$0xff]
  %v40 = vld [vmem:[#allocation2 + $0x20] sm:$0xff]
  %v41 = vld [vmem:[#allocation2 + $0x28] sm:$0xff]
  %v42 = vld [vmem:[#allocation2 + $0x30] sm:$0xff]
  %v43 = vld [vmem:[#allocation2 + $0x38] sm:$0xff]
  %v44 = vld [vmem:[#allocation2 + $0x40] sm:$0xff]
  %v45 = vld [vmem:[#allocation2 + $0x48] sm:$0xff]
  %v46 = vld [vmem:[#allocation2 + $0x50] sm:$0xff]
  %v47 = vld [vmem:[#allocation2 + $0x58] sm:$0xff]
  %v48 = vld [vmem:[#allocation2 + $0x60] sm:$0xff]
  %v49 = vld [vmem:[#allocation2 + $0x68] sm:$0xff]
  %v50 = vld [vmem:[#allocation2 + $0x70] sm:$0xff]
  %v51 = vld [vmem:[#allocation2 + $0x78] sm:$0xff]
  %v52 = vld [vmem:[%s0] sm:$0xf]
  %v53 = vld [vmem:[%s0 + $0x4] sm:$0xf]
  %v54 = vld [vmem:[%s0 + $0x8] sm:$0xf]
  %v55 = vld [vmem:[%s0 + $0xc] sm:$0xf]
  %v56 = vld [vmem:[%s0 + $0x10] sm:$0xf]
  %v57 = vld [vmem:[%s0 + $0x14] sm:$0xf]
  %v58 = vld [vmem:[%s0 + $0x18] sm:$0xf]
  %v59 = vld [vmem:[%s0 + $0x1c] sm:$0xf]
  %v60 = vld [vmem:[%s0 + $0x20] sm:$0xf]
  %v61 = vld [vmem:[%s0 + $0x24] sm:$0xf]
  %v62 = vld [vmem:[%s0 + $0x28] sm:$0xf]
  %v63 = vld [vmem:[%s0 + $0x2c] sm:$0xf]
  %v64 = vld [vmem:[%s0 + $0x30] sm:$0xf]
  %v65 = vld [vmem:[%s0 + $0x34] sm:$0xf]
  %v66 = vld [vmem:[%s0 + $0x38] sm:$0xf]
  %v67 = vld [vmem:[%s0 + $0x3c] sm:$0xf]
  %v68 = vld [vmem:[%s1] sm:$0xf]
  %v69 = vld [vmem:[%s1 + $0x4] sm:$0xf]
  %v70 = vld [vmem:[%s1 + $0x8] sm:$0xf]
  %v71 = vld [vmem:[%s1 + $0xc] sm:$0xf]
  %v72 = vld [vmem:[%s1 + $0x10] sm:$0xf]
  %v73 = vld [vmem:[%s1 + $0x14] sm:$0xf]
  %v90 = vunpack.c.l.b16 %v52
  %v91 = vunpack.c.l.b16 %v53
  %v92 = vunpack.c.l.b16 %v54
  %v93 = vunpack.c.l.b16 %v55
  %v94 = vunpack.c.l.b16 %v56
  %v95 = vunpack.c.l.b16 %v57
  %v96 = vunpack.c.l.b16 %v58
  %v97 = vunpack.c.l.b16 %v59
  %v98 = vunpack.c.l.b16 %v60
  %v99 = vunpack.c.l.b16 %v61
  %v100 = vunpack.c.l.b16 %v62
  %v101 = vunpack.c.l.b16 %v63
  %v102 = vunpack.c.l.b16 %v64
  %v103 = vunpack.c.l.b16 %v65
  %v104 = vunpack.c.l.b16 %v66
  %v105 = vunpack.c.l.b16 %v67
  %v106 = vpack.c.b16 %v91, %v90
  %v107 = vpack.c.b16 %v93, %v92
  %v108 = vpack.c.b16 %v95, %v94
  %v109 = vpack.c.b16 %v97, %v96
  %v110 = vpack.c.b16 %v99, %v98
  %v111 = vpack.c.b16 %v101, %v100
  %v112 = vpack.c.b16 %v103, %v102
  %v113 = vpack.c.b16 %v105, %v104
  %v120 = vunpack.c.l.b16 %v68
  %v121 = vunpack.c.l.b16 %v69
  %v122 = vunpack.c.l.b16 %v70
  %v123 = vunpack.c.l.b16 %v71
  %v124 = vunpack.c.l.b16 %v72
  %v125 = vunpack.c.l.b16 %v73
  %v126 = vpack.c.b16 %v121, %v120
  %v127 = vpack.c.b16 %v123, %v122
  %v128 = vpack.c.b16 %v125, %v124
  %vm132 = vcmask 392192
  %v134 = vsel %vm132, %v106, 0
  %v137 = vsel %vm132, %v107, 0
  %v140 = vsel %vm132, %v108, 0
  %v143 = vsel %vm132, %v109, 0
  %v146 = vsel %vm132, %v110, 0
  %v149 = vsel %vm132, %v111, 0
  %v152 = vsel %vm132, %v112, 0
  %v155 = vsel %vm132, %v113, 0
  %157 = vmatprep.subr.bf16.mxu0 0
  %158 = vmatpush1.bf16.msra.mxu0 %v126
  %159 = vmatprep.subr.bf16.mxu0 0
  %160 = vmatpush1.bf16.msra.mxu0 %v127
  %161 = vmatprep.subr.bf16.mxu0 0
  %162 = vmatpush1.bf16.msra.mxu0 %v128
  %163 = vmatprep.subr.bf16.mxu0 0
  %164 = vmatpush1.bf16.msra.mxu0 0
  %165 = vmatprep.subr.bf16.mxu0 0
  %166 = vmatpush1.bf16.msra.mxu0 0
  %167 = vmatprep.subr.bf16.mxu0 0
  %168 = vmatpush1.bf16.msra.mxu0 0
  %169 = vmatprep.subr.bf16.mxu0 0
  %170 = vmatpush1.bf16.msra.mxu0 0
  %171 = vmatprep.subr.bf16.mxu0 0
  %172 = vmatpush1.bf16.msra.mxu0 0
  %173 = vmatprep.subr.bf16.mxu0 0
  %174 = vmatpush1.bf16.msra.mxu0 0
  %175 = vmatprep.subr.bf16.mxu0 0
  %176 = vmatpush1.bf16.msra.mxu0 0
  %177 = vmatprep.subr.bf16.mxu0 0
  %178 = vmatpush1.bf16.msra.mxu0 0
  %179 = vmatprep.subr.bf16.mxu0 0
  %180 = vmatpush1.bf16.msra.mxu0 0
  %181 = vmatprep.subr.bf16.mxu0 0
  %182 = vmatpush1.bf16.msra.mxu0 0
  %183 = vmatprep.subr.bf16.mxu0 0
  %184 = vmatpush1.bf16.msra.mxu0 0
  %185 = vmatprep.subr.bf16.mxu0 0
  %186 = vmatpush1.bf16.msra.mxu0 0
  %187 = vmatprep.subr.bf16.mxu0 0
  %188 = vmatpush1.bf16.msra.mxu0 0
  %189 = vmatprep.mubr.bf16.mxu0 0
  %190 = vmatmul.mubr.bf16.gmra.mrb[0].mxu0 %v134
  %v191 = vpop.f32.mrb[0].mxu0
  %v192 = vadd.f32 0.0, %v191
  %v193 = vpop.f32.mrb[0].mxu0
  %v194 = vpop.f32.mrb[0].mxu0
  %v195 = vadd.f32 0.0, %v194
  %v196 = vpop.f32.mrb[0].mxu0
  %197 = vmatprep.mubr.bf16.mxu0 0
  %198 = vmatmul.mubr.bf16.gmra.mrb[0].mxu0 %v137
  %v199 = vpop.f32.mrb[0].mxu0
  %v200 = vadd.f32 0.0, %v199
  %v201 = vpop.f32.mrb[0].mxu0
  %v202 = vpop.f32.mrb[0].mxu0
  %v203 = vadd.f32 0.0, %v202
  %v204 = vpop.f32.mrb[0].mxu0
  %205 = vmatprep.mubr.bf16.mxu0 0
  %206 = vmatmul.mubr.bf16.gmra.mrb[0].mxu0 %v140
  %v207 = vpop.f32.mrb[0].mxu0
  %v208 = vadd.f32 0.0, %v207
  %v209 = vpop.f32.mrb[0].mxu0
  %v210 = vpop.f32.mrb[0].mxu0
  %v211 = vadd.f32 0.0, %v210
  %v212 = vpop.f32.mrb[0].mxu0
  %213 = vmatprep.mubr.bf16.mxu0 0
  %214 = vmatmul.mubr.bf16.gmra.mrb[0].mxu0 %v143
  %v215 = vpop.f32.mrb[0].mxu0
  %v216 = vadd.f32 0.0, %v215
  %v217 = vpop.f32.mrb[0].mxu0
  %v218 = vpop.f32.mrb[0].mxu0
  %v219 = vadd.f32 0.0, %v218
  %v220 = vpop.f32.mrb[0].mxu0
  %221 = vmatprep.mubr.bf16.mxu0 0
  %222 = vmatmul.mubr.bf16.gmra.mrb[0].mxu0 %v146
  %v223 = vpop.f32.mrb[0].mxu0
  %v224 = vadd.f32 0.0, %v223
  %v225 = vpop.f32.mrb[0].mxu0
  %v226 = vpop.f32.mrb[0].mxu0
  %v227 = vadd.f32 0.0, %v226
  %v228 = vpop.f32.mrb[0].mxu0
  %229 = vmatprep.mubr.bf16.mxu0 0
  %230 = vmatmul.mubr.bf16.gmra.mrb[0].mxu0 %v149
  %v231 = vpop.f32.mrb[0].mxu0
  %v232 = vadd.f32 0.0, %v231
  %v233 = vpop.f32.mrb[0].mxu0
  %v234 = vpop.f32.mrb[0].mxu0
  %v235 = vadd.f32 0.0, %v234
  %v236 = vpop.f32.mrb[0].mxu0
  %237 = vmatprep.mubr.bf16.mxu0 0
  %238 = vmatmul.mubr.bf16.gmra.mrb[0].mxu0 %v152
  %v239 = vpop.f32.mrb[0].mxu0
  %v240 = vadd.f32 0.0, %v239
  %v241 = vpop.f32.mrb[0].mxu0
  %v242 = vpop.f32.mrb[0].mxu0
  %v243 = vadd.f32 0.0, %v242
  %v244 = vpop.f32.mrb[0].mxu0
  %245 = vmatprep.mubr.bf16.mxu0 0
  %246 = vmatmul.mubr.bf16.gmra.mrb[0].mxu0 %v155
  %v247 = vpop.f32.mrb[0].mxu0
  %v248 = vadd.f32 0.0, %v247
  %v249 = vpop.f32.mrb[0].mxu0
  %v250 = vpop.f32.mrb[0].mxu0
  %v251 = vadd.f32 0.0, %v250
  %v252 = vpop.f32.mrb[0].mxu0
  %253 = vdwg.mxu0
  %v254 = vadd.f32 %v36, %v192
  %v255 = vadd.f32 %v37, %v195
  %v256 = vadd.f32 %v38, %v200
  %v257 = vadd.f32 %v39, %v203
  %v258 = vadd.f32 %v40, %v208
  %v259 = vadd.f32 %v41, %v211
  %v260 = vadd.f32 %v42, %v216
  %v261 = vadd.f32 %v43, %v219
  %v262 = vadd.f32 %v44, %v224
  %v263 = vadd.f32 %v45, %v227
  %v264 = vadd.f32 %v46, %v232
  %v265 = vadd.f32 %v47, %v235
  %v266 = vadd.f32 %v48, %v240
  %v267 = vadd.f32 %v49, %v243
  %v268 = vadd.f32 %v50, %v248
  %v269 = vadd.f32 %v51, %v251
  %vm270 = vcmask 523264
  %271 = vst.msk [vmem:[#allocation2] sm:$0xff] %vm270, %v254
  %272 = vst.msk [vmem:[#allocation2 + $0x8] sm:$0xff] %vm270, %v255
  %273 = vst.msk [vmem:[#allocation2 + $0x10] sm:$0xff] %vm270, %v256
  %274 = vst.msk [vmem:[#allocation2 + $0x18] sm:$0xff] %vm270, %v257
  %275 = vst.msk [vmem:[#allocation2 + $0x20] sm:$0xff] %vm270, %v258
  %276 = vst.msk [vmem:[#allocation2 + $0x28] sm:$0xff] %vm270, %v259
  %277 = vst.msk [vmem:[#allocation2 + $0x30] sm:$0xff] %vm270, %v260
  %278 = vst.msk [vmem:[#allocation2 + $0x38] sm:$0xff] %vm270, %v261
  %279 = vst.msk [vmem:[#allocation2 + $0x40] sm:$0xff] %vm270, %v262
  %280 = vst.msk [vmem:[#allocation2 + $0x48] sm:$0xff] %vm270, %v263
  %281 = vst.msk [vmem:[#allocation2 + $0x50] sm:$0xff] %vm270, %v264
  %282 = vst.msk [vmem:[#allocation2 + $0x58] sm:$0xff] %vm270, %v265
  %283 = vst.msk [vmem:[#allocation2 + $0x60] sm:$0xff] %vm270, %v266
  %284 = vst.msk [vmem:[#allocation2 + $0x68] sm:$0xff] %vm270, %v267
  %285 = vst.msk [vmem:[#allocation2 + $0x70] sm:$0xff] %vm270, %v268
  %286 = vst.msk [vmem:[#allocation2 + $0x78] sm:$0xff] %vm270, %v269
  // Predicated region
  $region18: #{forward.5} parent=0 // pred_check
    %p287 = pneg %p15
  $region19: #{forward.5} parent=0 // pred_check_branch
    %289 = sbr.rel (%p287) target = $region21
  $region20: #{forward.5} parent=0 // pred_region
    %v290 = vld [vmem:[#allocation2] sm:$0xff]
    %v291 = vld [vmem:[#allocation2 + $0x8] sm:$0xff]
    %v292 = vld [vmem:[#allocation2 + $0x10] sm:$0xff]
    %v293 = vld [vmem:[#allocation2 + $0x18] sm:$0xff]
    %v294 = vld [vmem:[#allocation2 + $0x20] sm:$0xff]
    %v295 = vld [vmem:[#allocation2 + $0x28] sm:$0xff]
    %v296 = vld [vmem:[#allocation2 + $0x30] sm:$0xff]
    %v297 = vld [vmem:[#allocation2 + $0x38] sm:$0xff]
    %v298 = vld [vmem:[#allocation2 + $0x40] sm:$0xff]
    %v299 = vld [vmem:[#allocation2 + $0x48] sm:$0xff]
    %v300 = vld [vmem:[#allocation2 + $0x50] sm:$0xff]
    %v301 = vld [vmem:[#allocation2 + $0x58] sm:$0xff]
    %v302 = vld [vmem:[#allocation2 + $0x60] sm:$0xff]
    %v303 = vld [vmem:[#allocation2 + $0x68] sm:$0xff]
    %v304 = vld [vmem:[#allocation2 + $0x70] sm:$0xff]
    %v305 = vld [vmem:[#allocation2 + $0x78] sm:$0xff]
    %v306 = vld [vmem:[%s2] sm:$0x1]
    %v308 = vlaneseq
    %v309 = vshrl.u32 %v308, 7
    %v310 = vsub.s32 0, %v309
    %v311 = vrot.slane %v306, %v310
    %v313 = vadd.f32 %v290, %v311
    %v314 = vadd.f32 %v291, %v311
    %v315 = vadd.f32 %v292, %v311
    %v316 = vadd.f32 %v293, %v311
    %v317 = vadd.f32 %v294, %v311
    %v318 = vadd.f32 %v295, %v311
    %v319 = vadd.f32 %v296, %v311
    %v320 = vadd.f32 %v297, %v311
    %v321 = vadd.f32 %v298, %v311
    %v322 = vadd.f32 %v299, %v311
    %v323 = vadd.f32 %v300, %v311
    %v324 = vadd.f32 %v301, %v311
    %v325 = vadd.f32 %v302, %v311
    %v326 = vadd.f32 %v303, %v311
    %v327 = vadd.f32 %v304, %v311
    %v328 = vadd.f32 %v305, %v311
    %vm329 = vcmp.ge.f32.partialorder %v313, 0.0
    %vm330 = vcmp.ge.f32.partialorder %v314, 0.0
    %vm331 = vcmp.ge.f32.partialorder %v315, 0.0
    %vm332 = vcmp.ge.f32.partialorder %v316, 0.0
    %vm333 = vcmp.ge.f32.partialorder %v317, 0.0
    %vm334 = vcmp.ge.f32.partialorder %v318, 0.0
    %vm335 = vcmp.ge.f32.partialorder %v319, 0.0
    %vm336 = vcmp.ge.f32.partialorder %v320, 0.0
    %vm337 = vcmp.ge.f32.partialorder %v321, 0.0
    %vm338 = vcmp.ge.f32.partialorder %v322, 0.0
    %vm339 = vcmp.ge.f32.partialorder %v323, 0.0
    %vm340 = vcmp.ge.f32.partialorder %v324, 0.0
    %vm341 = vcmp.ge.f32.partialorder %v325, 0.0
    %vm342 = vcmp.ge.f32.partialorder %v326, 0.0
    %vm343 = vcmp.ge.f32.partialorder %v327, 0.0
    %vm344 = vcmp.ge.f32.partialorder %v328, 0.0
    %v345 = vmul.f32 %v313, 0.01
    %v346 = vmul.f32 %v314, 0.01
    %v347 = vmul.f32 %v315, 0.01
    %v348 = vmul.f32 %v316, 0.01
    %v349 = vmul.f32 %v317, 0.01
    %v350 = vmul.f32 %v318, 0.01
    %v351 = vmul.f32 %v319, 0.01
    %v352 = vmul.f32 %v320, 0.01
    %v353 = vmul.f32 %v321, 0.01
    %v354 = vmul.f32 %v322, 0.01
    %v355 = vmul.f32 %v323, 0.01
    %v356 = vmul.f32 %v324, 0.01
    %v357 = vmul.f32 %v325, 0.01
    %v358 = vmul.f32 %v326, 0.01
    %v359 = vmul.f32 %v327, 0.01
    %v360 = vmul.f32 %v328, 0.01
    %v361 = vsel %vm329, %v313, %v345
    %v362 = vsel %vm330, %v314, %v346
    %v363 = vsel %vm331, %v315, %v347
    %v364 = vsel %vm332, %v316, %v348
    %v365 = vsel %vm333, %v317, %v349
    %v366 = vsel %vm334, %v318, %v350
    %v367 = vsel %vm335, %v319, %v351
    %v368 = vsel %vm336, %v320, %v352
    %v369 = vsel %vm337, %v321, %v353
    %v370 = vsel %vm338, %v322, %v354
    %v371 = vsel %vm339, %v323, %v355
    %v372 = vsel %vm340, %v324, %v356
    %v373 = vsel %vm341, %v325, %v357
    %v374 = vsel %vm342, %v326, %v358
    %v375 = vsel %vm343, %v327, %v359
    %v376 = vsel %vm344, %v328, %v360
    %v377 = vpack.c.bf16 %v362, %v361
    %v378 = vpack.c.bf16 %v364, %v363
    %v379 = vpack.c.bf16 %v366, %v365
    %v380 = vpack.c.bf16 %v368, %v367
    %v381 = vpack.c.bf16 %v370, %v369
    %v382 = vpack.c.bf16 %v372, %v371
    %v383 = vpack.c.bf16 %v374, %v373
    %v384 = vpack.c.bf16 %v376, %v375
    %v393 = vunpack.c.l.b16 %v377
    %v394 = vunpack.c.h.b16 %v377
    %v395 = vunpack.c.l.b16 %v378
    %v396 = vunpack.c.h.b16 %v378
    %v397 = vunpack.c.l.b16 %v379
    %v398 = vunpack.c.h.b16 %v379
    %v399 = vunpack.c.l.b16 %v380
    %v400 = vunpack.c.h.b16 %v380
    %v401 = vunpack.c.l.b16 %v381
    %v402 = vunpack.c.h.b16 %v381
    %v403 = vunpack.c.l.b16 %v382
    %v404 = vunpack.c.h.b16 %v382
    %v405 = vunpack.c.l.b16 %v383
    %v406 = vunpack.c.h.b16 %v383
    %v407 = vunpack.c.l.b16 %v384
    %v408 = vunpack.c.h.b16 %v384
    %v409 = vpack.c.b16 %v393, %v393
    %v410 = vpack.c.b16 %v394, %v394
    %v411 = vpack.c.b16 %v395, %v395
    %v412 = vpack.c.b16 %v396, %v396
    %v413 = vpack.c.b16 %v397, %v397
    %v414 = vpack.c.b16 %v398, %v398
    %v415 = vpack.c.b16 %v399, %v399
    %v416 = vpack.c.b16 %v400, %v400
    %v417 = vpack.c.b16 %v401, %v401
    %v418 = vpack.c.b16 %v402, %v402
    %v419 = vpack.c.b16 %v403, %v403
    %v420 = vpack.c.b16 %v404, %v404
    %v421 = vpack.c.b16 %v405, %v405
    %v422 = vpack.c.b16 %v406, %v406
    %v423 = vpack.c.b16 %v407, %v407
    %v424 = vpack.c.b16 %v408, %v408
    %vm441 = vcmask 519168
    %442 = vst.msk [vmem:[%s3] sm:$0xf] %vm441, %v409
    %443 = vst.msk [vmem:[%s3 + $0x4] sm:$0xf] %vm441, %v410
    %444 = vst.msk [vmem:[%s3 + $0x8] sm:$0xf] %vm441, %v411
    %445 = vst.msk [vmem:[%s3 + $0xc] sm:$0xf] %vm441, %v412
    %446 = vst.msk [vmem:[%s3 + $0x10] sm:$0xf] %vm441, %v413
    %447 = vst.msk [vmem:[%s3 + $0x14] sm:$0xf] %vm441, %v414
    %448 = vst.msk [vmem:[%s3 + $0x18] sm:$0xf] %vm441, %v415
    %449 = vst.msk [vmem:[%s3 + $0x1c] sm:$0xf] %vm441, %v416
    %450 = vst.msk [vmem:[%s3 + $0x20] sm:$0xf] %vm441, %v417
    %451 = vst.msk [vmem:[%s3 + $0x24] sm:$0xf] %vm441, %v418
    %452 = vst.msk [vmem:[%s3 + $0x28] sm:$0xf] %vm441, %v419
    %453 = vst.msk [vmem:[%s3 + $0x2c] sm:$0xf] %vm441, %v420
    %454 = vst.msk [vmem:[%s3 + $0x30] sm:$0xf] %vm441, %v421
    %455 = vst.msk [vmem:[%s3 + $0x34] sm:$0xf] %vm441, %v422
    %456 = vst.msk [vmem:[%s3 + $0x38] sm:$0xf] %vm441, %v423
    %457 = vst.msk [vmem:[%s3 + $0x3c] sm:$0xf] %vm441, %v424
  $region21: #{forward.5} parent=0 // pred_fallthru
    _
  // Predicated region
  $region22: #{forward.5} parent=0 // pred_check
    _
  $region23: #{forward.5} parent=0 // pred_check_branch
    %459 = sbr.rel (0) target = $region25
  $region24: #{forward.5} parent=0 // pred_region
    _
  $region25: #{forward.5} parent=0 // pred_fallthru
    _
  // Predicated region
  $region26: #{forward.5} parent=0 // pred_check
    _
  $region27: #{forward.5} parent=0 // pred_check_branch
    %461 = sbr.rel (0) target = $region29
  $region28: #{forward.5} parent=0 // pred_region
    _
  $region29: #{forward.5} parent=0 // pred_fallthru
    _

// kernel: forward.6
$region0: #{forward.6}
  #allocation0 [shape = 'u32[]', space=smem, size = 0x4, offset = 0x4, fixed_abs, tag = 'smem constant byte address 0x4 - core index']
  #allocation1 [shape = 'u32[144,128]{1,0:T(1,128)}', space=vmem, size = 0x12000, scoped, tag = 'internal scratch']
  #allocation2 [shape = 'f32[32,128]{1,0:T(8,128)}', space=vmem, size = 0x4000, scoped, tag = 'scratch operand']
  %s0 = inlined_call_operand.vmem [shape: bf16[32,1024], index: 0, kind: input, shape index: {}]
  %s1 = inlined_call_operand.vmem [shape: bf16[1024,128], index: 1, kind: input, shape index: {}]
  %s2 = inlined_call_operand.vmem [shape: f32[1,128], index: 2, kind: input, shape index: {}]
  %s3 = inlined_call_operand.vmem [shape: bf16[32,128], index: 3, kind: output, shape index: {}]
  %s4 = sld [smem:[#allocation0]]
  $region30: #{forward.6} parent=0
    _
  %s6 = ssub.s32 1, %s4
  %s7 = scalar_select 0, %s6, %s4
  // Predicated region
  $region2: #{forward.6} parent=0 // pred_check
    _
  $region3: #{forward.6} parent=0 // pred_check_branch
    %9 = sbr.rel (0) target = $region5
  $region4: #{forward.6} parent=0 // pred_region
    _
  $region5: #{forward.6} parent=0 // pred_fallthru
    _
  // Predicated region
  $region6: #{forward.6} parent=0 // pred_check
    _
  $region7: #{forward.6} parent=0 // pred_check_branch
    %11 = sbr.rel (0) target = $region9
  $region8: #{forward.6} parent=0 // pred_region
    _
  $region9: #{forward.6} parent=0 // pred_fallthru
    _
  // Predicated region
  $region10: #{forward.6} parent=0 // pred_check
    _
  $region11: #{forward.6} parent=0 // pred_check_branch
    %13 = sbr.rel (0) target = $region13
  $region12: #{forward.6} parent=0 // pred_region
    _
  $region13: #{forward.6} parent=0 // pred_fallthru
    _
  %p15 = scmp.eq.s32.totalorder 0, 0
  // Predicated region
  $region14: #{forward.6} parent=0 // pred_check
    %p16 = pneg %p15
  $region15: #{forward.6} parent=0 // pred_check_branch
    %18 = sbr.rel (%p16) target = $region17
  $region16: #{forward.6} parent=0 // pred_region
    %19 = vst [vmem:[#allocation2] sm:$0xff] 0.0
    %20 = vst [vmem:[#allocation2 + $0x8] sm:$0xff] 0.0
    %21 = vst [vmem:[#allocation2 + $0x10] sm:$0xff] 0.0
    %22 = vst [vmem:[#allocation2 + $0x18] sm:$0xff] 0.0
  $region17: #{forward.6} parent=0 // pred_fallthru
    _
  %v23 = vld [vmem:[#allocation2] sm:$0xff]
  %v24 = vld [vmem:[#allocation2 + $0x8] sm:$0xff]
  %v25 = vld [vmem:[#allocation2 + $0x10] sm:$0xff]
  %v26 = vld [vmem:[#allocation2 + $0x18] sm:$0xff]
  %v27 = vld [vmem:[%s0] sm:$0xff]
  %v28 = vld [vmem:[%s0 + $0x8] sm:$0xff]
  %v29 = vld [vmem:[%s0 + $0x10] sm:$0xff]
  %v30 = vld [vmem:[%s0 + $0x18] sm:$0xff]
  %v31 = vld [vmem:[%s0 + $0x20] sm:$0xff]
  %v32 = vld [vmem:[%s0 + $0x28] sm:$0xff]
  %v33 = vld [vmem:[%s0 + $0x30] sm:$0xff]
  %v34 = vld [vmem:[%s0 + $0x38] sm:$0xff]
  %v35 = vld [vmem:[%s0 + $0x40] sm:$0xff]
  %v36 = vld [vmem:[%s0 + $0x48] sm:$0xff]
  %v37 = vld [vmem:[%s0 + $0x50] sm:$0xff]
  %v38 = vld [vmem:[%s0 + $0x58] sm:$0xff]
  %v39 = vld [vmem:[%s0 + $0x60] sm:$0xff]
  %v40 = vld [vmem:[%s0 + $0x68] sm:$0xff]
  %v41 = vld [vmem:[%s0 + $0x70] sm:$0xff]
  %v42 = vld [vmem:[%s0 + $0x78] sm:$0xff]
  %v43 = vld [vmem:[%s1] sm:$0xf]
  %v44 = vld [vmem:[%s1 + $0x4] sm:$0xf]
  %v45 = vld [vmem:[%s1 + $0x8] sm:$0xf]
  %v46 = vld [vmem:[%s1 + $0xc] sm:$0xf]
  %v47 = vld [vmem:[%s1 + $0x10] sm:$0xf]
  %v48 = vld [vmem:[%s1 + $0x14] sm:$0xf]
  %v49 = vld [vmem:[%s1 + $0x18] sm:$0xf]
  %v50 = vld [vmem:[%s1 + $0x1c] sm:$0xf]
  %v51 = vld [vmem:[%s1 + $0x20] sm:$0xf]
  %v52 = vld [vmem:[%s1 + $0x24] sm:$0xf]
  %v53 = vld [vmem:[%s1 + $0x28] sm:$0xf]
  %v54 = vld [vmem:[%s1 + $0x2c] sm:$0xf]
  %v55 = vld [vmem:[%s1 + $0x30] sm:$0xf]
  %v56 = vld [vmem:[%s1 + $0x34] sm:$0xf]
  %v57 = vld [vmem:[%s1 + $0x38] sm:$0xf]
  %v58 = vld [vmem:[%s1 + $0x3c] sm:$0xf]
  %v59 = vld [vmem:[%s1 + $0x40] sm:$0xf]
  %v60 = vld [vmem:[%s1 + $0x44] sm:$0xf]
  %v61 = vld [vmem:[%s1 + $0x48] sm:$0xf]
  %v62 = vld [vmem:[%s1 + $0x4c] sm:$0xf]
  %v63 = vld [vmem:[%s1 + $0x50] sm:$0xf]
  %v64 = vld [vmem:[%s1 + $0x54] sm:$0xf]
  %v65 = vld [vmem:[%s1 + $0x58] sm:$0xf]
  %v66 = vld [vmem:[%s1 + $0x5c] sm:$0xf]
  %v67 = vld [vmem:[%s1 + $0x60] sm:$0xf]
  %v68 = vld [vmem:[%s1 + $0x64] sm:$0xf]
  %v69 = vld [vmem:[%s1 + $0x68] sm:$0xf]
  %v70 = vld [vmem:[%s1 + $0x6c] sm:$0xf]
  %v71 = vld [vmem:[%s1 + $0x70] sm:$0xf]
  %v72 = vld [vmem:[%s1 + $0x74] sm:$0xf]
  %v73 = vld [vmem:[%s1 + $0x78] sm:$0xf]
  %v74 = vld [vmem:[%s1 + $0x7c] sm:$0xf]
  %v75 = vld [vmem:[%s1 + $0x80] sm:$0xf]
  %v76 = vld [vmem:[%s1 + $0x84] sm:$0xf]
  %v77 = vld [vmem:[%s1 + $0x88] sm:$0xf]
  %v78 = vld [vmem:[%s1 + $0x8c] sm:$0xf]
  %v79 = vld [vmem:[%s1 + $0x90] sm:$0xf]
  %v80 = vld [vmem:[%s1 + $0x94] sm:$0xf]
  %v81 = vld [vmem:[%s1 + $0x98] sm:$0xf]
  %v82 = vld [vmem:[%s1 + $0x9c] sm:$0xf]
  %v83 = vld [vmem:[%s1 + $0xa0] sm:$0xf]
  %v84 = vld [vmem:[%s1 + $0xa4] sm:$0xf]
  %v85 = vld [vmem:[%s1 + $0xa8] sm:$0xf]
  %v86 = vld [vmem:[%s1 + $0xac] sm:$0xf]
  %v87 = vld [vmem:[%s1 + $0xb0] sm:$0xf]
  %v88 = vld [vmem:[%s1 + $0xb4] sm:$0xf]
  %v89 = vld [vmem:[%s1 + $0xb8] sm:$0xf]
  %v90 = vld [vmem:[%s1 + $0xbc] sm:$0xf]
  %v91 = vld [vmem:[%s1 + $0xc0] sm:$0xf]
  %v92 = vld [vmem:[%s1 + $0xc4] sm:$0xf]
  %v93 = vld [vmem:[%s1 + $0xc8] sm:$0xf]
  %v94 = vld [vmem:[%s1 + $0xcc] sm:$0xf]
  %v95 = vld [vmem:[%s1 + $0xd0] sm:$0xf]
  %v96 = vld [vmem:[%s1 + $0xd4] sm:$0xf]
  %v97 = vld [vmem:[%s1 + $0xd8] sm:$0xf]
  %v98 = vld [vmem:[%s1 + $0xdc] sm:$0xf]
  %v99 = vld [vmem:[%s1 + $0xe0] sm:$0xf]
  %v100 = vld [vmem:[%s1 + $0xe4] sm:$0xf]
  %v101 = vld [vmem:[%s1 + $0xe8] sm:$0xf]
  %v102 = vld [vmem:[%s1 + $0xec] sm:$0xf]
  %v103 = vld [vmem:[%s1 + $0xf0] sm:$0xf]
  %v104 = vld [vmem:[%s1 + $0xf4] sm:$0xf]
  %v105 = vld [vmem:[%s1 + $0xf8] sm:$0xf]
  %v106 = vld [vmem:[%s1 + $0xfc] sm:$0xf]
  %v107 = vld [vmem:[%s1 + $0x100] sm:$0xf]
  %v108 = vld [vmem:[%s1 + $0x104] sm:$0xf]
  %v109 = vld [vmem:[%s1 + $0x108] sm:$0xf]
  %v110 = vld [vmem:[%s1 + $0x10c] sm:$0xf]
  %v111 = vld [vmem:[%s1 + $0x110] sm:$0xf]
  %v112 = vld [vmem:[%s1 + $0x114] sm:$0xf]
  %v113 = vld [vmem:[%s1 + $0x118] sm:$0xf]
  %v114 = vld [vmem:[%s1 + $0x11c] sm:$0xf]
  %v115 = vld [vmem:[%s1 + $0x120] sm:$0xf]
  %v116 = vld [vmem:[%s1 + $0x124] sm:$0xf]
  %v117 = vld [vmem:[%s1 + $0x128] sm:$0xf]
  %v118 = vld [vmem:[%s1 + $0x12c] sm:$0xf]
  %v119 = vld [vmem:[%s1 + $0x130] sm:$0xf]
  %v120 = vld [vmem:[%s1 + $0x134] sm:$0xf]
  %v121 = vld [vmem:[%s1 + $0x138] sm:$0xf]
  %v122 = vld [vmem:[%s1 + $0x13c] sm:$0xf]
  %v123 = vld [vmem:[%s1 + $0x140] sm:$0xf]
  %v124 = vld [vmem:[%s1 + $0x144] sm:$0xf]
  %v125 = vld [vmem:[%s1 + $0x148] sm:$0xf]
  %v126 = vld [vmem:[%s1 + $0x14c] sm:$0xf]
  %v127 = vld [vmem:[%s1 + $0x150] sm:$0xf]
  %v128 = vld [vmem:[%s1 + $0x154] sm:$0xf]
  %v129 = vld [vmem:[%s1 + $0x158] sm:$0xf]
  %v130 = vld [vmem:[%s1 + $0x15c] sm:$0xf]
  %v131 = vld [vmem:[%s1 + $0x160] sm:$0xf]
  %v132 = vld [vmem:[%s1 + $0x164] sm:$0xf]
  %v133 = vld [vmem:[%s1 + $0x168] sm:$0xf]
  %v134 = vld [vmem:[%s1 + $0x16c] sm:$0xf]
  %v135 = vld [vmem:[%s1 + $0x170] sm:$0xf]
  %v136 = vld [vmem:[%s1 + $0x174] sm:$0xf]
  %v137 = vld [vmem:[%s1 + $0x178] sm:$0xf]
  %v138 = vld [vmem:[%s1 + $0x17c] sm:$0xf]
  %v139 = vld [vmem:[%s1 + $0x180] sm:$0xf]
  %v140 = vld [vmem:[%s1 + $0x184] sm:$0xf]
  %v141 = vld [vmem:[%s1 + $0x188] sm:$0xf]
  %v142 = vld [vmem:[%s1 + $0x18c] sm:$0xf]
  %v143 = vld [vmem:[%s1 + $0x190] sm:$0xf]
  %v144 = vld [vmem:[%s1 + $0x194] sm:$0xf]
  %v145 = vld [vmem:[%s1 + $0x198] sm:$0xf]
  %v146 = vld [vmem:[%s1 + $0x19c] sm:$0xf]
  %v147 = vld [vmem:[%s1 + $0x1a0] sm:$0xf]
  %v148 = vld [vmem:[%s1 + $0x1a4] sm:$0xf]
  %v149 = vld [vmem:[%s1 + $0x1a8] sm:$0xf]
  %v150 = vld [vmem:[%s1 + $0x1ac] sm:$0xf]
  %v151 = vld [vmem:[%s1 + $0x1b0] sm:$0xf]
  %v152 = vld [vmem:[%s1 + $0x1b4] sm:$0xf]
  %v153 = vld [vmem:[%s1 + $0x1b8] sm:$0xf]
  %v154 = vld [vmem:[%s1 + $0x1bc] sm:$0xf]
  %v155 = vld [vmem:[%s1 + $0x1c0] sm:$0xf]
  %v156 = vld [vmem:[%s1 + $0x1c4] sm:$0xf]
  %v157 = vld [vmem:[%s1 + $0x1c8] sm:$0xf]
  %v158 = vld [vmem:[%s1 + $0x1cc] sm:$0xf]
  %v159 = vld [vmem:[%s1 + $0x1d0] sm:$0xf]
  %v160 = vld [vmem:[%s1 + $0x1d4] sm:$0xf]
  %v161 = vld [vmem:[%s1 + $0x1d8] sm:$0xf]
  %v162 = vld [vmem:[%s1 + $0x1dc] sm:$0xf]
  %v163 = vld [vmem:[%s1 + $0x1e0] sm:$0xf]
  %v164 = vld [vmem:[%s1 + $0x1e4] sm:$0xf]
  %v165 = vld [vmem:[%s1 + $0x1e8] sm:$0xf]
  %v166 = vld [vmem:[%s1 + $0x1ec] sm:$0xf]
  %v167 = vld [vmem:[%s1 + $0x1f0] sm:$0xf]
  %v168 = vld [vmem:[%s1 + $0x1f4] sm:$0xf]
  %v169 = vld [vmem:[%s1 + $0x1f8] sm:$0xf]
  %v170 = vld [vmem:[%s1 + $0x1fc] sm:$0xf]
  %v187 = vunpack.c.l.b16 %v27
  %v188 = vunpack.c.h.b16 %v27
  %v189 = vunpack.c.l.b16 %v28
  %v190 = vunpack.c.h.b16 %v28
  %v191 = vunpack.c.l.b16 %v29
  %v192 = vunpack.c.h.b16 %v29
  %v193 = vunpack.c.l.b16 %v30
  %v194 = vunpack.c.h.b16 %v30
  %v195 = vunpack.c.l.b16 %v31
  %v196 = vunpack.c.h.b16 %v31
  %v197 = vunpack.c.l.b16 %v32
  %v198 = vunpack.c.h.b16 %v32
  %v199 = vunpack.c.l.b16 %v33
  %v200 = vunpack.c.h.b16 %v33
  %v201 = vunpack.c.l.b16 %v34
  %v202 = vunpack.c.h.b16 %v34
  %v203 = vunpack.c.l.b16 %v35
  %v204 = vunpack.c.h.b16 %v35
  %v205 = vunpack.c.l.b16 %v36
  %v206 = vunpack.c.h.b16 %v36
  %v207 = vunpack.c.l.b16 %v37
  %v208 = vunpack.c.h.b16 %v37
  %v209 = vunpack.c.l.b16 %v38
  %v210 = vunpack.c.h.b16 %v38
  %v211 = vunpack.c.l.b16 %v39
  %v212 = vunpack.c.h.b16 %v39
  %v213 = vunpack.c.l.b16 %v40
  %v214 = vunpack.c.h.b16 %v40
  %v215 = vunpack.c.l.b16 %v41
  %v216 = vunpack.c.h.b16 %v41
  %v217 = vunpack.c.l.b16 %v42
  %v218 = vunpack.c.h.b16 %v42
  %v219 = vpack.c.b16 %v195, %v187
  %v220 = vpack.c.b16 %v196, %v188
  %v221 = vpack.c.b16 %v197, %v189
  %v222 = vpack.c.b16 %v198, %v190
  %v223 = vpack.c.b16 %v199, %v191
  %v224 = vpack.c.b16 %v200, %v192
  %v225 = vpack.c.b16 %v201, %v193
  %v226 = vpack.c.b16 %v202, %v194
  %v227 = vpack.c.b16 %v211, %v203
  %v228 = vpack.c.b16 %v212, %v204
  %v229 = vpack.c.b16 %v213, %v205
  %v230 = vpack.c.b16 %v214, %v206
  %v231 = vpack.c.b16 %v215, %v207
  %v232 = vpack.c.b16 %v216, %v208
  %v233 = vpack.c.b16 %v217, %v209
  %v234 = vpack.c.b16 %v218, %v210
  %v379 = vunpack.c.l.b16 %v43
  %v380 = vunpack.c.l.b16 %v44
  %v381 = vunpack.c.l.b16 %v45
  %v382 = vunpack.c.l.b16 %v46
  %v383 = vunpack.c.l.b16 %v47
  %v384 = vunpack.c.l.b16 %v48
  %v385 = vunpack.c.l.b16 %v49
  %v386 = vunpack.c.l.b16 %v50
  %v387 = vunpack.c.l.b16 %v51
  %v388 = vunpack.c.l.b16 %v52
  %v389 = vunpack.c.l.b16 %v53
  %v390 = vunpack.c.l.b16 %v54
  %v391 = vunpack.c.l.b16 %v55
  %v392 = vunpack.c.l.b16 %v56
  %v393 = vunpack.c.l.b16 %v57
  %v394 = vunpack.c.l.b16 %v58
  %v395 = vunpack.c.l.b16 %v59
  %v396 = vunpack.c.l.b16 %v60
  %v397 = vunpack.c.l.b16 %v61
  %v398 = vunpack.c.l.b16 %v62
  %v399 = vunpack.c.l.b16 %v63
  %v400 = vunpack.c.l.b16 %v64
  %v401 = vunpack.c.l.b16 %v65
  %v402 = vunpack.c.l.b16 %v66
  %v403 = vunpack.c.l.b16 %v67
  %v404 = vunpack.c.l.b16 %v68
  %v405 = vunpack.c.l.b16 %v69
  %v406 = vunpack.c.l.b16 %v70
  %v407 = vunpack.c.l.b16 %v71
  %v408 = vunpack.c.l.b16 %v72
  %v409 = vunpack.c.l.b16 %v73
  %v410 = vunpack.c.l.b16 %v74
  %v411 = vunpack.c.l.b16 %v75
  %v412 = vunpack.c.l.b16 %v76
  %v413 = vunpack.c.l.b16 %v77
  %v414 = vunpack.c.l.b16 %v78
  %v415 = vunpack.c.l.b16 %v79
  %v416 = vunpack.c.l.b16 %v80
  %v417 = vunpack.c.l.b16 %v81
  %v418 = vunpack.c.l.b16 %v82
  %v419 = vunpack.c.l.b16 %v83
  %v420 = vunpack.c.l.b16 %v84
  %v421 = vunpack.c.l.b16 %v85
  %v422 = vunpack.c.l.b16 %v86
  %v423 = vunpack.c.l.b16 %v87
  %v424 = vunpack.c.l.b16 %v88
  %v425 = vunpack.c.l.b16 %v89
  %v426 = vunpack.c.l.b16 %v90
  %v427 = vunpack.c.l.b16 %v91
  %v428 = vunpack.c.l.b16 %v92
  %v429 = vunpack.c.l.b16 %v93
  %v430 = vunpack.c.l.b16 %v94
  %v431 = vunpack.c.l.b16 %v95
  %v432 = vunpack.c.l.b16 %v96
  %v433 = vunpack.c.l.b16 %v97
  %v434 = vunpack.c.l.b16 %v98
  %v435 = vunpack.c.l.b16 %v99
  %v436 = vunpack.c.l.b16 %v100
  %v437 = vunpack.c.l.b16 %v101
  %v438 = vunpack.c.l.b16 %v102
  %v439 = vunpack.c.l.b16 %v103
  %v440 = vunpack.c.l.b16 %v104
  %v441 = vunpack.c.l.b16 %v105
  %v442 = vunpack.c.l.b16 %v106
  %v443 = vunpack.c.l.b16 %v107
  %v444 = vunpack.c.l.b16 %v108
  %v445 = vunpack.c.l.b16 %v109
  %v446 = vunpack.c.l.b16 %v110
  %v447 = vunpack.c.l.b16 %v111
  %v448 = vunpack.c.l.b16 %v112
  %v449 = vunpack.c.l.b16 %v113
  %v450 = vunpack.c.l.b16 %v114
  %v451 = vunpack.c.l.b16 %v115
  %v452 = vunpack.c.l.b16 %v116
  %v453 = vunpack.c.l.b16 %v117
  %v454 = vunpack.c.l.b16 %v118
  %v455 = vunpack.c.l.b16 %v119
  %v456 = vunpack.c.l.b16 %v120
  %v457 = vunpack.c.l.b16 %v121
  %v458 = vunpack.c.l.b16 %v122
  %v459 = vunpack.c.l.b16 %v123
  %v460 = vunpack.c.l.b16 %v124
  %v461 = vunpack.c.l.b16 %v125
  %v462 = vunpack.c.l.b16 %v126
  %v463 = vunpack.c.l.b16 %v127
  %v464 = vunpack.c.l.b16 %v128
  %v465 = vunpack.c.l.b16 %v129
  %v466 = vunpack.c.l.b16 %v130
  %v467 = vunpack.c.l.b16 %v131
  %v468 = vunpack.c.l.b16 %v132
  %v469 = vunpack.c.l.b16 %v133
  %v470 = vunpack.c.l.b16 %v134
  %v471 = vunpack.c.l.b16 %v135
  %v472 = vunpack.c.l.b16 %v136
  %v473 = vunpack.c.l.b16 %v137
  %v474 = vunpack.c.l.b16 %v138
  %v475 = vunpack.c.l.b16 %v139
  %v476 = vunpack.c.l.b16 %v140
  %v477 = vunpack.c.l.b16 %v141
  %v478 = vunpack.c.l.b16 %v142
  %v479 = vunpack.c.l.b16 %v143
  %v480 = vunpack.c.l.b16 %v144
  %v481 = vunpack.c.l.b16 %v145
  %v482 = vunpack.c.l.b16 %v146
  %v483 = vunpack.c.l.b16 %v147
  %v484 = vunpack.c.l.b16 %v148
  %v485 = vunpack.c.l.b16 %v149
  %v486 = vunpack.c.l.b16 %v150
  %v487 = vunpack.c.l.b16 %v151
  %v488 = vunpack.c.l.b16 %v152
  %v489 = vunpack.c.l.b16 %v153
  %v490 = vunpack.c.l.b16 %v154
  %v491 = vunpack.c.l.b16 %v155
  %v492 = vunpack.c.l.b16 %v156
  %v493 = vunpack.c.l.b16 %v157
  %v494 = vunpack.c.l.b16 %v158
  %v495 = vunpack.c.l.b16 %v159
  %v496 = vunpack.c.l.b16 %v160
  %v497 = vunpack.c.l.b16 %v161
  %v498 = vunpack.c.l.b16 %v162
  %v499 = vunpack.c.l.b16 %v163
  %v500 = vunpack.c.l.b16 %v164
  %v501 = vunpack.c.l.b16 %v165
  %v502 = vunpack.c.l.b16 %v166
  %v503 = vunpack.c.l.b16 %v167
  %v504 = vunpack.c.l.b16 %v168
  %v505 = vunpack.c.l.b16 %v169
  %v506 = vunpack.c.l.b16 %v170
  %v507 = vpack.c.b16 %v380, %v379
  %v508 = vpack.c.b16 %v382, %v381
  %v509 = vpack.c.b16 %v384, %v383
  %v510 = vpack.c.b16 %v386, %v385
  %v511 = vpack.c.b16 %v388, %v387
  %v512 = vpack.c.b16 %v390, %v389
  %v513 = vpack.c.b16 %v392, %v391
  %v514 = vpack.c.b16 %v394, %v393
  %v515 = vpack.c.b16 %v396, %v395
  %v516 = vpack.c.b16 %v398, %v397
  %v517 = vpack.c.b16 %v400, %v399
  %v518 = vpack.c.b16 %v402, %v401
  %v519 = vpack.c.b16 %v404, %v403
  %v520 = vpack.c.b16 %v406, %v405
  %v521 = vpack.c.b16 %v408, %v407
  %v522 = vpack.c.b16 %v410, %v409
  %v523 = vpack.c.b16 %v412, %v411
  %v524 = vpack.c.b16 %v414, %v413
  %v525 = vpack.c.b16 %v416, %v415
  %v526 = vpack.c.b16 %v418, %v417
  %v527 = vpack.c.b16 %v420, %v419
  %v528 = vpack.c.b16 %v422, %v421
  %v529 = vpack.c.b16 %v424, %v423
  %v530 = vpack.c.b16 %v426, %v425
  %v531 = vpack.c.b16 %v428, %v427
  %v532 = vpack.c.b16 %v430, %v429
  %v533 = vpack.c.b16 %v432, %v431
  %v534 = vpack.c.b16 %v434, %v433
  %v535 = vpack.c.b16 %v436, %v435
  %v536 = vpack.c.b16 %v438, %v437
  %v537 = vpack.c.b16 %v440, %v439
  %v538 = vpack.c.b16 %v442, %v441
  %v539 = vpack.c.b16 %v444, %v443
  %v540 = vpack.c.b16 %v446, %v445
  %v541 = vpack.c.b16 %v448, %v447
  %v542 = vpack.c.b16 %v450, %v449
  %v543 = vpack.c.b16 %v452, %v451
  %v544 = vpack.c.b16 %v454, %v453
  %v545 = vpack.c.b16 %v456, %v455
  %v546 = vpack.c.b16 %v458, %v457
  %v547 = vpack.c.b16 %v460, %v459
  %v548 = vpack.c.b16 %v462, %v461
  %v549 = vpack.c.b16 %v464, %v463
  %v550 = vpack.c.b16 %v466, %v465
  %v551 = vpack.c.b16 %v468, %v467
  %v552 = vpack.c.b16 %v470, %v469
  %v553 = vpack.c.b16 %v472, %v471
  %v554 = vpack.c.b16 %v474, %v473
  %v555 = vpack.c.b16 %v476, %v475
  %v556 = vpack.c.b16 %v478, %v477
  %v557 = vpack.c.b16 %v480, %v479
  %v558 = vpack.c.b16 %v482, %v481
  %v559 = vpack.c.b16 %v484, %v483
  %v560 = vpack.c.b16 %v486, %v485
  %v561 = vpack.c.b16 %v488, %v487
  %v562 = vpack.c.b16 %v490, %v489
  %v563 = vpack.c.b16 %v492, %v491
  %v564 = vpack.c.b16 %v494, %v493
  %v565 = vpack.c.b16 %v496, %v495
  %v566 = vpack.c.b16 %v498, %v497
  %v567 = vpack.c.b16 %v500, %v499
  %v568 = vpack.c.b16 %v502, %v501
  %v569 = vpack.c.b16 %v504, %v503
  %v570 = vpack.c.b16 %v506, %v505
  %635 = vmatprep.subr.bf16.mxu0 0
  %636 = vmatpush1.bf16.msra.mxu0 %v507
  %637 = vmatprep.subr.bf16.mxu0 0
  %638 = vmatpush1.bf16.msra.mxu0 %v508
  %639 = vmatprep.subr.bf16.mxu0 0
  %640 = vmatpush1.bf16.msra.mxu0 %v509
  %641 = vmatprep.subr.bf16.mxu0 0
  %642 = vmatpush1.bf16.msra.mxu0 %v510
  %643 = vmatprep.subr.bf16.mxu0 0
  %644 = vmatpush1.bf16.msra.mxu0 %v511
  %645 = vmatprep.subr.bf16.mxu0 0
  %646 = vmatpush1.bf16.msra.mxu0 %v512
  %647 = vmatprep.subr.bf16.mxu0 0
  %648 = vmatpush1.bf16.msra.mxu0 %v513
  %649 = vmatprep.subr.bf16.mxu0 0
  %650 = vmatpush1.bf16.msra.mxu0 %v514
  %651 = vmatprep.subr.bf16.mxu0 0
  %652 = vmatpush1.bf16.msra.mxu0 %v515
  %653 = vmatprep.subr.bf16.mxu0 0
  %654 = vmatpush1.bf16.msra.mxu0 %v516
  %655 = vmatprep.subr.bf16.mxu0 0
  %656 = vmatpush1.bf16.msra.mxu0 %v517
  %657 = vmatprep.subr.bf16.mxu0 0
  %658 = vmatpush1.bf16.msra.mxu0 %v518
  %659 = vmatprep.subr.bf16.mxu0 0
  %660 = vmatpush1.bf16.msra.mxu0 %v519
  %661 = vmatprep.subr.bf16.mxu0 0
  %662 = vmatpush1.bf16.msra.mxu0 %v520
  %663 = vmatprep.subr.bf16.mxu0 0
  %664 = vmatpush1.bf16.msra.mxu0 %v521
  %665 = vmatprep.subr.bf16.mxu0 0
  %666 = vmatpush1.bf16.msra.mxu0 %v522
  %667 = vmatprep.mubr.bf16.mxu0 %v220
  %668 = vmatmul.mubr.bf16.gmra.mrb[0].mxu0 %v219
  %v669 = vpop.f32.mrb[0].mxu0
  %v670 = vadd.f32 0.0, %v669
  %v671 = vpop.f32.mrb[0].mxu0
  %v672 = vpop.f32.mrb[0].mxu0
  %v673 = vadd.f32 0.0, %v672
  %v674 = vpop.f32.mrb[0].mxu0
  %675 = vmatprep.mubr.bf16.mxu0 %v228
  %676 = vmatmul.mubr.bf16.gmra.mrb[0].mxu0 %v227
  %v677 = vpop.f32.mrb[0].mxu0
  %v678 = vadd.f32 0.0, %v677
  %v679 = vpop.f32.mrb[0].mxu0
  %v680 = vpop.f32.mrb[0].mxu0
  %v681 = vadd.f32 0.0, %v680
  %v682 = vpop.f32.mrb[0].mxu0
  %683 = vdwg.mxu0
  %684 = vmatprep.subr.bf16.mxu0 0
  %685 = vmatpush1.bf16.msra.mxu0 %v523
  %686 = vmatprep.subr.bf16.mxu0 0
  %687 = vmatpush1.bf16.msra.mxu0 %v524
  %688 = vmatprep.subr.bf16.mxu0 0
  %689 = vmatpush1.bf16.msra.mxu0 %v525
  %690 = vmatprep.subr.bf16.mxu0 0
  %691 = vmatpush1.bf16.msra.mxu0 %v526
  %692 = vmatprep.subr.bf16.mxu0 0
  %693 = vmatpush1.bf16.msra.mxu0 %v527
  %694 = vmatprep.subr.bf16.mxu0 0
  %695 = vmatpush1.bf16.msra.mxu0 %v528
  %696 = vmatprep.subr.bf16.mxu0 0
  %697 = vmatpush1.bf16.msra.mxu0 %v529
  %698 = vmatprep.subr.bf16.mxu0 0
  %699 = vmatpush1.bf16.msra.mxu0 %v530
  %700 = vmatprep.subr.bf16.mxu0 0
  %701 = vmatpush1.bf16.msra.mxu0 %v531
  %702 = vmatprep.subr.bf16.mxu0 0
  %703 = vmatpush1.bf16.msra.mxu0 %v532
  %704 = vmatprep.subr.bf16.mxu0 0
  %705 = vmatpush1.bf16.msra.mxu0 %v533
  %706 = vmatprep.subr.bf16.mxu0 0
  %707 = vmatpush1.bf16.msra.mxu0 %v534
  %708 = vmatprep.subr.bf16.mxu0 0
  %709 = vmatpush1.bf16.msra.mxu0 %v535
  %710 = vmatprep.subr.bf16.mxu0 0
  %711 = vmatpush1.bf16.msra.mxu0 %v536
  %712 = vmatprep.subr.bf16.mxu0 0
  %713 = vmatpush1.bf16.msra.mxu0 %v537
  %714 = vmatprep.subr.bf16.mxu0 0
  %715 = vmatpush1.bf16.msra.mxu0 %v538
  %716 = vmatprep.mubr.bf16.mxu0 %v222
  %717 = vmatmul.mubr.bf16.gmra.mrb[0].mxu0 %v221
  %v718 = vpop.f32.mrb[0].mxu0
  %v719 = vadd.f32 %v670, %v718
  %v720 = vpop.f32.mrb[0].mxu0
  %v721 = vpop.f32.mrb[0].mxu0
  %v722 = vadd.f32 %v673, %v721
  %v723 = vpop.f32.mrb[0].mxu0
  %724 = vmatprep.mubr.bf16.mxu0 %v230
  %725 = vmatmul.mubr.bf16.gmra.mrb[0].mxu0 %v229
  %v726 = vpop.f32.mrb[0].mxu0
  %v727 = vadd.f32 %v678, %v726
  %v728 = vpop.f32.mrb[0].mxu0
  %v729 = vpop.f32.mrb[0].mxu0
  %v730 = vadd.f32 %v681, %v729
  %v731 = vpop.f32.mrb[0].mxu0
  %732 = vdwg.mxu0
  %733 = vmatprep.subr.bf16.mxu0 0
  %734 = vmatpush1.bf16.msra.mxu0 %v539
  %735 = vmatprep.subr.bf16.mxu0 0
  %736 = vmatpush1.bf16.msra.mxu0 %v540
  %737 = vmatprep.subr.bf16.mxu0 0
  %738 = vmatpush1.bf16.msra.mxu0 %v541
  %739 = vmatprep.subr.bf16.mxu0 0
  %740 = vmatpush1.bf16.msra.mxu0 %v542
  %741 = vmatprep.subr.bf16.mxu0 0
  %742 = vmatpush1.bf16.msra.mxu0 %v543
  %743 = vmatprep.subr.bf16.mxu0 0
  %744 = vmatpush1.bf16.msra.mxu0 %v544
  %745 = vmatprep.subr.bf16.mxu0 0
  %746 = vmatpush1.bf16.msra.mxu0 %v545
  %747 = vmatprep.subr.bf16.mxu0 0
  %748 = vmatpush1.bf16.msra.mxu0 %v546
  %749 = vmatprep.subr.bf16.mxu0 0
  %750 = vmatpush1.bf16.msra.mxu0 %v547
  %751 = vmatprep.subr.bf16.mxu0 0
  %752 = vmatpush1.bf16.msra.mxu0 %v548
  %753 = vmatprep.subr.bf16.mxu0 0
  %754 = vmatpush1.bf16.msra.mxu0 %v549
  %755 = vmatprep.subr.bf16.mxu0 0
  %756 = vmatpush1.bf16.msra.mxu0 %v550
  %757 = vmatprep.subr.bf16.mxu0 0
  %758 = vmatpush1.bf16.msra.mxu0 %v551
  %759 = vmatprep.subr.bf16.mxu0 0
  %760 = vmatpush1.bf16.msra.mxu0 %v552
  %761 = vmatprep.subr.bf16.mxu0 0
  %762 = vmatpush1.bf16.msra.mxu0 %v553
  %763 = vmatprep.subr.bf16.mxu0 0
  %764 = vmatpush1.bf16.msra.mxu0 %v554
  %765 = vmatprep.mubr.bf16.mxu0 %v224
  %766 = vmatmul.mubr.bf16.gmra.mrb[0].mxu0 %v223
  %v767 = vpop.f32.mrb[0].mxu0
  %v768 = vadd.f32 %v719, %v767
  %v769 = vpop.f32.mrb[0].mxu0
  %v770 = vpop.f32.mrb[0].mxu0
  %v771 = vadd.f32 %v722, %v770
  %v772 = vpop.f32.mrb[0].mxu0
  %773 = vmatprep.mubr.bf16.mxu0 %v232
  %774 = vmatmul.mubr.bf16.gmra.mrb[0].mxu0 %v231
  %v775 = vpop.f32.mrb[0].mxu0
  %v776 = vadd.f32 %v727, %v775
  %v777 = vpop.f32.mrb[0].mxu0
  %v778 = vpop.f32.mrb[0].mxu0
  %v779 = vadd.f32 %v730, %v778
  %v780 = vpop.f32.mrb[0].mxu0
  %781 = vdwg.mxu0
  %782 = vmatprep.subr.bf16.mxu0 0
  %783 = vmatpush1.bf16.msra.mxu0 %v555
  %784 = vmatprep.subr.bf16.mxu0 0
  %785 = vmatpush1.bf16.msra.mxu0 %v556
  %786 = vmatprep.subr.bf16.mxu0 0
  %787 = vmatpush1.bf16.msra.mxu0 %v557
  %788 = vmatprep.subr.bf16.mxu0 0
  %789 = vmatpush1.bf16.msra.mxu0 %v558
  %790 = vmatprep.subr.bf16.mxu0 0
  %791 = vmatpush1.bf16.msra.mxu0 %v559
  %792 = vmatprep.subr.bf16.mxu0 0
  %793 = vmatpush1.bf16.msra.mxu0 %v560
  %794 = vmatprep.subr.bf16.mxu0 0
  %795 = vmatpush1.bf16.msra.mxu0 %v561
  %796 = vmatprep.subr.bf16.mxu0 0
  %797 = vmatpush1.bf16.msra.mxu0 %v562
  %798 = vmatprep.subr.bf16.mxu0 0
  %799 = vmatpush1.bf16.msra.mxu0 %v563
  %800 = vmatprep.subr.bf16.mxu0 0
  %801 = vmatpush1.bf16.msra.mxu0 %v564
  %802 = vmatprep.subr.bf16.mxu0 0
  %803 = vmatpush1.bf16.msra.mxu0 %v565
  %804 = vmatprep.subr.bf16.mxu0 0
  %805 = vmatpush1.bf16.msra.mxu0 %v566
  %806 = vmatprep.subr.bf16.mxu0 0
  %807 = vmatpush1.bf16.msra.mxu0 %v567
  %808 = vmatprep.subr.bf16.mxu0 0
  %809 = vmatpush1.bf16.msra.mxu0 %v568
  %810 = vmatprep.subr.bf16.mxu0 0
  %811 = vmatpush1.bf16.msra.mxu0 %v569
  %812 = vmatprep.subr.bf16.mxu0 0
  %813 = vmatpush1.bf16.msra.mxu0 %v570
  %814 = vmatprep.mubr.bf16.mxu0 %v226
  %815 = vmatmul.mubr.bf16.gmra.mrb[0].mxu0 %v225
  %v816 = vpop.f32.mrb[0].mxu0
  %v817 = vadd.f32 %v768, %v816
  %v818 = vpop.f32.mrb[0].mxu0
  %v819 = vpop.f32.mrb[0].mxu0
  %v820 = vadd.f32 %v771, %v819
  %v821 = vpop.f32.mrb[0].mxu0
  %822 = vmatprep.mubr.bf16.mxu0 %v234
  %823 = vmatmul.mubr.bf16.gmra.mrb[0].mxu0 %v233
  %v824 = vpop.f32.mrb[0].mxu0
  %v825 = vadd.f32 %v776, %v824
  %v826 = vpop.f32.mrb[0].mxu0
  %v827 = vpop.f32.mrb[0].mxu0
  %v828 = vadd.f32 %v779, %v827
  %v829 = vpop.f32.mrb[0].mxu0
  %830 = vdwg.mxu0
  %v831 = vadd.f32 %v23, %v817
  %v832 = vadd.f32 %v24, %v820
  %v833 = vadd.f32 %v25, %v825
  %v834 = vadd.f32 %v26, %v828
  %835 = vst [vmem:[#allocation2] sm:$0xff] %v831
  %836 = vst [vmem:[#allocation2 + $0x8] sm:$0xff] %v832
  %837 = vst [vmem:[#allocation2 + $0x10] sm:$0xff] %v833
  %838 = vst [vmem:[#allocation2 + $0x18] sm:$0xff] %v834
  // Predicated region
  $region18: #{forward.6} parent=0 // pred_check
    %p839 = pneg %p15
  $region19: #{forward.6} parent=0 // pred_check_branch
    %841 = sbr.rel (%p839) target = $region21
  $region20: #{forward.6} parent=0 // pred_region
    %v842 = vld [vmem:[#allocation2] sm:$0xff]
    %v843 = vld [vmem:[#allocation2 + $0x8] sm:$0xff]
    %v844 = vld [vmem:[#allocation2 + $0x10] sm:$0xff]
    %v845 = vld [vmem:[#allocation2 + $0x18] sm:$0xff]
    %v846 = vld [vmem:[%s2] sm:$0x1]
    %v848 = vlaneseq
    %v849 = vshrl.u32 %v848, 7
    %v850 = vsub.s32 0, %v849
    %v851 = vrot.slane %v846, %v850
    %v853 = vadd.f32 %v842, %v851
    %v854 = vadd.f32 %v843, %v851
    %v855 = vadd.f32 %v844, %v851
    %v856 = vadd.f32 %v845, %v851
    %vm857 = vcmp.ge.f32.partialorder %v853, 0.0
    %vm858 = vcmp.ge.f32.partialorder %v854, 0.0
    %vm859 = vcmp.ge.f32.partialorder %v855, 0.0
    %vm860 = vcmp.ge.f32.partialorder %v856, 0.0
    %v861 = vmul.f32 %v853, 0.01
    %v862 = vmul.f32 %v854, 0.01
    %v863 = vmul.f32 %v855, 0.01
    %v864 = vmul.f32 %v856, 0.01
    %v865 = vsel %vm857, %v853, %v861
    %v866 = vsel %vm858, %v854, %v862
    %v867 = vsel %vm859, %v855, %v863
    %v868 = vsel %vm860, %v856, %v864
    %v869 = vpack.c.bf16 %v866, %v865
    %v870 = vpack.c.bf16 %v868, %v867
    %v873 = vunpack.c.l.b16 %v869
    %v874 = vunpack.c.h.b16 %v869
    %v875 = vunpack.c.l.b16 %v870
    %v876 = vunpack.c.h.b16 %v870
    %v877 = vpack.c.b16 %v873, %v873
    %v878 = vpack.c.b16 %v874, %v874
    %v879 = vpack.c.b16 %v875, %v875
    %v880 = vpack.c.b16 %v876, %v876
    %885 = vst [vmem:[%s3] sm:$0xf] %v877
    %886 = vst [vmem:[%s3 + $0x4] sm:$0xf] %v878
    %887 = vst [vmem:[%s3 + $0x8] sm:$0xf] %v879
    %888 = vst [vmem:[%s3 + $0xc] sm:$0xf] %v880
  $region21: #{forward.6} parent=0 // pred_fallthru
    _
  // Predicated region
  $region22: #{forward.6} parent=0 // pred_check
    _
  $region23: #{forward.6} parent=0 // pred_check_branch
    %890 = sbr.rel (0) target = $region25
  $region24: #{forward.6} parent=0 // pred_region
    _
  $region25: #{forward.6} parent=0 // pred_fallthru
    _
  // Predicated region
  $region26: #{forward.6} parent=0 // pred_check
    _
  $region27: #{forward.6} parent=0 // pred_check_branch
    %892 = sbr.rel (0) target = $region29
  $region28: #{forward.6} parent=0 // pred_region
    _
  $region29: #{forward.6} parent=0 // pred_fallthru
    _

// kernel: forward.9
$region0: #{forward.9}
  #allocation0 [shape = 'u32[]', space=smem, size = 0x4, offset = 0x4, fixed_abs, tag = 'smem constant byte address 0x4 - core index']
  #allocation1 [shape = 'u32[144,128]{1,0:T(1,128)}', space=vmem, size = 0x12000, scoped, tag = 'internal scratch']
  #allocation2 [shape = 'f32[16,5]{1,0:T(8,128)}', space=vmem, size = 0x2000, scoped, tag = 'scratch operand']
  %s0 = inlined_call_operand.vmem [shape: bf16[16,1024], index: 0, kind: input, shape index: {}]
  %s1 = inlined_call_operand.vmem [shape: bf16[1024,5], index: 1, kind: input, shape index: {}]
  %s2 = inlined_call_operand.vmem [shape: f32[1,5], index: 2, kind: input, shape index: {}]
  %s3 = inlined_call_operand.vmem [shape: f32[16,5], index: 3, kind: output, shape index: {}]
  %s4 = sld [smem:[#allocation0]]
  $region30: #{forward.9} parent=0
    _
  %s6 = ssub.s32 1, %s4
  %s7 = scalar_select 0, %s6, %s4
  // Predicated region
  $region2: #{forward.9} parent=0 // pred_check
    _
  $region3: #{forward.9} parent=0 // pred_check_branch
    %9 = sbr.rel (0) target = $region5
  $region4: #{forward.9} parent=0 // pred_region
    _
  $region5: #{forward.9} parent=0 // pred_fallthru
    _
  // Predicated region
  $region6: #{forward.9} parent=0 // pred_check
    _
  $region7: #{forward.9} parent=0 // pred_check_branch
    %11 = sbr.rel (0) target = $region9
  $region8: #{forward.9} parent=0 // pred_region
    _
  $region9: #{forward.9} parent=0 // pred_fallthru
    _
  // Predicated region
  $region10: #{forward.9} parent=0 // pred_check
    _
  $region11: #{forward.9} parent=0 // pred_check_branch
    %13 = sbr.rel (0) target = $region13
  $region12: #{forward.9} parent=0 // pred_region
    _
  $region13: #{forward.9} parent=0 // pred_fallthru
    _
  %p15 = scmp.eq.s32.totalorder 0, 0
  // Predicated region
  $region14: #{forward.9} parent=0 // pred_check
    %p16 = pneg %p15
  $region15: #{forward.9} parent=0 // pred_check_branch
    %18 = sbr.rel (%p16) target = $region17
  $region16: #{forward.9} parent=0 // pred_region
    %vm19 = vcmask 39936
    %20 = vst.msk [vmem:[#allocation2] sm:$0xff] %vm19, 0.0
    %21 = vst.msk [vmem:[#allocation2 + $0x8] sm:$0xff] %vm19, 0.0
  $region17: #{forward.9} parent=0 // pred_fallthru
    _
  %v22 = vld [vmem:[#allocation2] sm:$0xff]
  %v23 = vld [vmem:[#allocation2 + $0x8] sm:$0xff]
  %v24 = vld [vmem:[%s0] sm:$0xff]
  %v25 = vld [vmem:[%s0 + $0x8] sm:$0xff]
  %v26 = vld [vmem:[%s0 + $0x10] sm:$0xff]
  %v27 = vld [vmem:[%s0 + $0x18] sm:$0xff]
  %v28 = vld [vmem:[%s0 + $0x20] sm:$0xff]
  %v29 = vld [vmem:[%s0 + $0x28] sm:$0xff]
  %v30 = vld [vmem:[%s0 + $0x30] sm:$0xff]
  %v31 = vld [vmem:[%s0 + $0x38] sm:$0xff]
  %v32 = vld [vmem:[%s1] sm:$0xf]
  %v33 = vld [vmem:[%s1 + $0x4] sm:$0xf]
  %v34 = vld [vmem:[%s1 + $0x8] sm:$0xf]
  %v35 = vld [vmem:[%s1 + $0xc] sm:$0xf]
  %v36 = vld [vmem:[%s1 + $0x10] sm:$0xf]
  %v37 = vld [vmem:[%s1 + $0x14] sm:$0xf]
  %v38 = vld [vmem:[%s1 + $0x18] sm:$0xf]
  %v39 = vld [vmem:[%s1 + $0x1c] sm:$0xf]
  %v40 = vld [vmem:[%s1 + $0x20] sm:$0xf]
  %v41 = vld [vmem:[%s1 + $0x24] sm:$0xf]
  %v42 = vld [vmem:[%s1 + $0x28] sm:$0xf]
  %v43 = vld [vmem:[%s1 + $0x2c] sm:$0xf]
  %v44 = vld [vmem:[%s1 + $0x30] sm:$0xf]
  %v45 = vld [vmem:[%s1 + $0x34] sm:$0xf]
  %v46 = vld [vmem:[%s1 + $0x38] sm:$0xf]
  %v47 = vld [vmem:[%s1 + $0x3c] sm:$0xf]
  %v48 = vld [vmem:[%s1 + $0x40] sm:$0xf]
  %v49 = vld [vmem:[%s1 + $0x44] sm:$0xf]
  %v50 = vld [vmem:[%s1 + $0x48] sm:$0xf]
  %v51 = vld [vmem:[%s1 + $0x4c] sm:$0xf]
  %v52 = vld [vmem:[%s1 + $0x50] sm:$0xf]
  %v53 = vld [vmem:[%s1 + $0x54] sm:$0xf]
  %v54 = vld [vmem:[%s1 + $0x58] sm:$0xf]
  %v55 = vld [vmem:[%s1 + $0x5c] sm:$0xf]
  %v56 = vld [vmem:[%s1 + $0x60] sm:$0xf]
  %v57 = vld [vmem:[%s1 + $0x64] sm:$0xf]
  %v58 = vld [vmem:[%s1 + $0x68] sm:$0xf]
  %v59 = vld [vmem:[%s1 + $0x6c] sm:$0xf]
  %v60 = vld [vmem:[%s1 + $0x70] sm:$0xf]
  %v61 = vld [vmem:[%s1 + $0x74] sm:$0xf]
  %v62 = vld [vmem:[%s1 + $0x78] sm:$0xf]
  %v63 = vld [vmem:[%s1 + $0x7c] sm:$0xf]
  %v64 = vld [vmem:[%s1 + $0x80] sm:$0xf]
  %v65 = vld [vmem:[%s1 + $0x84] sm:$0xf]
  %v66 = vld [vmem:[%s1 + $0x88] sm:$0xf]
  %v67 = vld [vmem:[%s1 + $0x8c] sm:$0xf]
  %v68 = vld [vmem:[%s1 + $0x90] sm:$0xf]
  %v69 = vld [vmem:[%s1 + $0x94] sm:$0xf]
  %v70 = vld [vmem:[%s1 + $0x98] sm:$0xf]
  %v71 = vld [vmem:[%s1 + $0x9c] sm:$0xf]
  %v72 = vld [vmem:[%s1 + $0xa0] sm:$0xf]
  %v73 = vld [vmem:[%s1 + $0xa4] sm:$0xf]
  %v74 = vld [vmem:[%s1 + $0xa8] sm:$0xf]
  %v75 = vld [vmem:[%s1 + $0xac] sm:$0xf]
  %v76 = vld [vmem:[%s1 + $0xb0] sm:$0xf]
  %v77 = vld [vmem:[%s1 + $0xb4] sm:$0xf]
  %v78 = vld [vmem:[%s1 + $0xb8] sm:$0xf]
  %v79 = vld [vmem:[%s1 + $0xbc] sm:$0xf]
  %v80 = vld [vmem:[%s1 + $0xc0] sm:$0xf]
  %v81 = vld [vmem:[%s1 + $0xc4] sm:$0xf]
  %v82 = vld [vmem:[%s1 + $0xc8] sm:$0xf]
  %v83 = vld [vmem:[%s1 + $0xcc] sm:$0xf]
  %v84 = vld [vmem:[%s1 + $0xd0] sm:$0xf]
  %v85 = vld [vmem:[%s1 + $0xd4] sm:$0xf]
  %v86 = vld [vmem:[%s1 + $0xd8] sm:$0xf]
  %v87 = vld [vmem:[%s1 + $0xdc] sm:$0xf]
  %v88 = vld [vmem:[%s1 + $0xe0] sm:$0xf]
  %v89 = vld [vmem:[%s1 + $0xe4] sm:$0xf]
  %v90 = vld [vmem:[%s1 + $0xe8] sm:$0xf]
  %v91 = vld [vmem:[%s1 + $0xec] sm:$0xf]
  %v92 = vld [vmem:[%s1 + $0xf0] sm:$0xf]
  %v93 = vld [vmem:[%s1 + $0xf4] sm:$0xf]
  %v94 = vld [vmem:[%s1 + $0xf8] sm:$0xf]
  %v95 = vld [vmem:[%s1 + $0xfc] sm:$0xf]
  %v96 = vld [vmem:[%s1 + $0x100] sm:$0xf]
  %v97 = vld [vmem:[%s1 + $0x104] sm:$0xf]
  %v98 = vld [vmem:[%s1 + $0x108] sm:$0xf]
  %v99 = vld [vmem:[%s1 + $0x10c] sm:$0xf]
  %v100 = vld [vmem:[%s1 + $0x110] sm:$0xf]
  %v101 = vld [vmem:[%s1 + $0x114] sm:$0xf]
  %v102 = vld [vmem:[%s1 + $0x118] sm:$0xf]
  %v103 = vld [vmem:[%s1 + $0x11c] sm:$0xf]
  %v104 = vld [vmem:[%s1 + $0x120] sm:$0xf]
  %v105 = vld [vmem:[%s1 + $0x124] sm:$0xf]
  %v106 = vld [vmem:[%s1 + $0x128] sm:$0xf]
  %v107 = vld [vmem:[%s1 + $0x12c] sm:$0xf]
  %v108 = vld [vmem:[%s1 + $0x130] sm:$0xf]
  %v109 = vld [vmem:[%s1 + $0x134] sm:$0xf]
  %v110 = vld [vmem:[%s1 + $0x138] sm:$0xf]
  %v111 = vld [vmem:[%s1 + $0x13c] sm:$0xf]
  %v112 = vld [vmem:[%s1 + $0x140] sm:$0xf]
  %v113 = vld [vmem:[%s1 + $0x144] sm:$0xf]
  %v114 = vld [vmem:[%s1 + $0x148] sm:$0xf]
  %v115 = vld [vmem:[%s1 + $0x14c] sm:$0xf]
  %v116 = vld [vmem:[%s1 + $0x150] sm:$0xf]
  %v117 = vld [vmem:[%s1 + $0x154] sm:$0xf]
  %v118 = vld [vmem:[%s1 + $0x158] sm:$0xf]
  %v119 = vld [vmem:[%s1 + $0x15c] sm:$0xf]
  %v120 = vld [vmem:[%s1 + $0x160] sm:$0xf]
  %v121 = vld [vmem:[%s1 + $0x164] sm:$0xf]
  %v122 = vld [vmem:[%s1 + $0x168] sm:$0xf]
  %v123 = vld [vmem:[%s1 + $0x16c] sm:$0xf]
  %v124 = vld [vmem:[%s1 + $0x170] sm:$0xf]
  %v125 = vld [vmem:[%s1 + $0x174] sm:$0xf]
  %v126 = vld [vmem:[%s1 + $0x178] sm:$0xf]
  %v127 = vld [vmem:[%s1 + $0x17c] sm:$0xf]
  %v128 = vld [vmem:[%s1 + $0x180] sm:$0xf]
  %v129 = vld [vmem:[%s1 + $0x184] sm:$0xf]
  %v130 = vld [vmem:[%s1 + $0x188] sm:$0xf]
  %v131 = vld [vmem:[%s1 + $0x18c] sm:$0xf]
  %v132 = vld [vmem:[%s1 + $0x190] sm:$0xf]
  %v133 = vld [vmem:[%s1 + $0x194] sm:$0xf]
  %v134 = vld [vmem:[%s1 + $0x198] sm:$0xf]
  %v135 = vld [vmem:[%s1 + $0x19c] sm:$0xf]
  %v136 = vld [vmem:[%s1 + $0x1a0] sm:$0xf]
  %v137 = vld [vmem:[%s1 + $0x1a4] sm:$0xf]
  %v138 = vld [vmem:[%s1 + $0x1a8] sm:$0xf]
  %v139 = vld [vmem:[%s1 + $0x1ac] sm:$0xf]
  %v140 = vld [vmem:[%s1 + $0x1b0] sm:$0xf]
  %v141 = vld [vmem:[%s1 + $0x1b4] sm:$0xf]
  %v142 = vld [vmem:[%s1 + $0x1b8] sm:$0xf]
  %v143 = vld [vmem:[%s1 + $0x1bc] sm:$0xf]
  %v144 = vld [vmem:[%s1 + $0x1c0] sm:$0xf]
  %v145 = vld [vmem:[%s1 + $0x1c4] sm:$0xf]
  %v146 = vld [vmem:[%s1 + $0x1c8] sm:$0xf]
  %v147 = vld [vmem:[%s1 + $0x1cc] sm:$0xf]
  %v148 = vld [vmem:[%s1 + $0x1d0] sm:$0xf]
  %v149 = vld [vmem:[%s1 + $0x1d4] sm:$0xf]
  %v150 = vld [vmem:[%s1 + $0x1d8] sm:$0xf]
  %v151 = vld [vmem:[%s1 + $0x1dc] sm:$0xf]
  %v152 = vld [vmem:[%s1 + $0x1e0] sm:$0xf]
  %v153 = vld [vmem:[%s1 + $0x1e4] sm:$0xf]
  %v154 = vld [vmem:[%s1 + $0x1e8] sm:$0xf]
  %v155 = vld [vmem:[%s1 + $0x1ec] sm:$0xf]
  %v156 = vld [vmem:[%s1 + $0x1f0] sm:$0xf]
  %v157 = vld [vmem:[%s1 + $0x1f4] sm:$0xf]
  %v158 = vld [vmem:[%s1 + $0x1f8] sm:$0xf]
  %v159 = vld [vmem:[%s1 + $0x1fc] sm:$0xf]
  %v168 = vunpack.c.l.b16 %v24
  %v169 = vunpack.c.h.b16 %v24
  %v170 = vunpack.c.l.b16 %v25
  %v171 = vunpack.c.h.b16 %v25
  %v172 = vunpack.c.l.b16 %v26
  %v173 = vunpack.c.h.b16 %v26
  %v174 = vunpack.c.l.b16 %v27
  %v175 = vunpack.c.h.b16 %v27
  %v176 = vunpack.c.l.b16 %v28
  %v177 = vunpack.c.h.b16 %v28
  %v178 = vunpack.c.l.b16 %v29
  %v179 = vunpack.c.h.b16 %v29
  %v180 = vunpack.c.l.b16 %v30
  %v181 = vunpack.c.h.b16 %v30
  %v182 = vunpack.c.l.b16 %v31
  %v183 = vunpack.c.h.b16 %v31
  %v184 = vpack.c.b16 %v176, %v168
  %v185 = vpack.c.b16 %v177, %v169
  %v186 = vpack.c.b16 %v178, %v170
  %v187 = vpack.c.b16 %v179, %v171
  %v188 = vpack.c.b16 %v180, %v172
  %v189 = vpack.c.b16 %v181, %v173
  %v190 = vpack.c.b16 %v182, %v174
  %v191 = vpack.c.b16 %v183, %v175
  %v328 = vunpack.c.l.b16 %v32
  %v329 = vunpack.c.l.b16 %v33
  %v330 = vunpack.c.l.b16 %v34
  %v331 = vunpack.c.l.b16 %v35
  %v332 = vunpack.c.l.b16 %v36
  %v333 = vunpack.c.l.b16 %v37
  %v334 = vunpack.c.l.b16 %v38
  %v335 = vunpack.c.l.b16 %v39
  %v336 = vunpack.c.l.b16 %v40
  %v337 = vunpack.c.l.b16 %v41
  %v338 = vunpack.c.l.b16 %v42
  %v339 = vunpack.c.l.b16 %v43
  %v340 = vunpack.c.l.b16 %v44
  %v341 = vunpack.c.l.b16 %v45
  %v342 = vunpack.c.l.b16 %v46
  %v343 = vunpack.c.l.b16 %v47
  %v344 = vunpack.c.l.b16 %v48
  %v345 = vunpack.c.l.b16 %v49
  %v346 = vunpack.c.l.b16 %v50
  %v347 = vunpack.c.l.b16 %v51
  %v348 = vunpack.c.l.b16 %v52
  %v349 = vunpack.c.l.b16 %v53
  %v350 = vunpack.c.l.b16 %v54
  %v351 = vunpack.c.l.b16 %v55
  %v352 = vunpack.c.l.b16 %v56
  %v353 = vunpack.c.l.b16 %v57
  %v354 = vunpack.c.l.b16 %v58
  %v355 = vunpack.c.l.b16 %v59
  %v356 = vunpack.c.l.b16 %v60
  %v357 = vunpack.c.l.b16 %v61
  %v358 = vunpack.c.l.b16 %v62
  %v359 = vunpack.c.l.b16 %v63
  %v360 = vunpack.c.l.b16 %v64
  %v361 = vunpack.c.l.b16 %v65
  %v362 = vunpack.c.l.b16 %v66
  %v363 = vunpack.c.l.b16 %v67
  %v364 = vunpack.c.l.b16 %v68
  %v365 = vunpack.c.l.b16 %v69
  %v366 = vunpack.c.l.b16 %v70
  %v367 = vunpack.c.l.b16 %v71
  %v368 = vunpack.c.l.b16 %v72
  %v369 = vunpack.c.l.b16 %v73
  %v370 = vunpack.c.l.b16 %v74
  %v371 = vunpack.c.l.b16 %v75
  %v372 = vunpack.c.l.b16 %v76
  %v373 = vunpack.c.l.b16 %v77
  %v374 = vunpack.c.l.b16 %v78
  %v375 = vunpack.c.l.b16 %v79
  %v376 = vunpack.c.l.b16 %v80
  %v377 = vunpack.c.l.b16 %v81
  %v378 = vunpack.c.l.b16 %v82
  %v379 = vunpack.c.l.b16 %v83
  %v380 = vunpack.c.l.b16 %v84
  %v381 = vunpack.c.l.b16 %v85
  %v382 = vunpack.c.l.b16 %v86
  %v383 = vunpack.c.l.b16 %v87
  %v384 = vunpack.c.l.b16 %v88
  %v385 = vunpack.c.l.b16 %v89
  %v386 = vunpack.c.l.b16 %v90
  %v387 = vunpack.c.l.b16 %v91
  %v388 = vunpack.c.l.b16 %v92
  %v389 = vunpack.c.l.b16 %v93
  %v390 = vunpack.c.l.b16 %v94
  %v391 = vunpack.c.l.b16 %v95
  %v392 = vunpack.c.l.b16 %v96
  %v393 = vunpack.c.l.b16 %v97
  %v394 = vunpack.c.l.b16 %v98
  %v395 = vunpack.c.l.b16 %v99
  %v396 = vunpack.c.l.b16 %v100
  %v397 = vunpack.c.l.b16 %v101
  %v398 = vunpack.c.l.b16 %v102
  %v399 = vunpack.c.l.b16 %v103
  %v400 = vunpack.c.l.b16 %v104
  %v401 = vunpack.c.l.b16 %v105
  %v402 = vunpack.c.l.b16 %v106
  %v403 = vunpack.c.l.b16 %v107
  %v404 = vunpack.c.l.b16 %v108
  %v405 = vunpack.c.l.b16 %v109
  %v406 = vunpack.c.l.b16 %v110
  %v407 = vunpack.c.l.b16 %v111
  %v408 = vunpack.c.l.b16 %v112
  %v409 = vunpack.c.l.b16 %v113
  %v410 = vunpack.c.l.b16 %v114
  %v411 = vunpack.c.l.b16 %v115
  %v412 = vunpack.c.l.b16 %v116
  %v413 = vunpack.c.l.b16 %v117
  %v414 = vunpack.c.l.b16 %v118
  %v415 = vunpack.c.l.b16 %v119
  %v416 = vunpack.c.l.b16 %v120
  %v417 = vunpack.c.l.b16 %v121
  %v418 = vunpack.c.l.b16 %v122
  %v419 = vunpack.c.l.b16 %v123
  %v420 = vunpack.c.l.b16 %v124
  %v421 = vunpack.c.l.b16 %v125
  %v422 = vunpack.c.l.b16 %v126
  %v423 = vunpack.c.l.b16 %v127
  %v424 = vunpack.c.l.b16 %v128
  %v425 = vunpack.c.l.b16 %v129
  %v426 = vunpack.c.l.b16 %v130
  %v427 = vunpack.c.l.b16 %v131
  %v428 = vunpack.c.l.b16 %v132
  %v429 = vunpack.c.l.b16 %v133
  %v430 = vunpack.c.l.b16 %v134
  %v431 = vunpack.c.l.b16 %v135
  %v432 = vunpack.c.l.b16 %v136
  %v433 = vunpack.c.l.b16 %v137
  %v434 = vunpack.c.l.b16 %v138
  %v435 = vunpack.c.l.b16 %v139
  %v436 = vunpack.c.l.b16 %v140
  %v437 = vunpack.c.l.b16 %v141
  %v438 = vunpack.c.l.b16 %v142
  %v439 = vunpack.c.l.b16 %v143
  %v440 = vunpack.c.l.b16 %v144
  %v441 = vunpack.c.l.b16 %v145
  %v442 = vunpack.c.l.b16 %v146
  %v443 = vunpack.c.l.b16 %v147
  %v444 = vunpack.c.l.b16 %v148
  %v445 = vunpack.c.l.b16 %v149
  %v446 = vunpack.c.l.b16 %v150
  %v447 = vunpack.c.l.b16 %v151
  %v448 = vunpack.c.l.b16 %v152
  %v449 = vunpack.c.l.b16 %v153
  %v450 = vunpack.c.l.b16 %v154
  %v451 = vunpack.c.l.b16 %v155
  %v452 = vunpack.c.l.b16 %v156
  %v453 = vunpack.c.l.b16 %v157
  %v454 = vunpack.c.l.b16 %v158
  %v455 = vunpack.c.l.b16 %v159
  %v456 = vpack.c.b16 %v329, %v328
  %v457 = vpack.c.b16 %v331, %v330
  %v458 = vpack.c.b16 %v333, %v332
  %v459 = vpack.c.b16 %v335, %v334
  %v460 = vpack.c.b16 %v337, %v336
  %v461 = vpack.c.b16 %v339, %v338
  %v462 = vpack.c.b16 %v341, %v340
  %v463 = vpack.c.b16 %v343, %v342
  %v464 = vpack.c.b16 %v345, %v344
  %v465 = vpack.c.b16 %v347, %v346
  %v466 = vpack.c.b16 %v349, %v348
  %v467 = vpack.c.b16 %v351, %v350
  %v468 = vpack.c.b16 %v353, %v352
  %v469 = vpack.c.b16 %v355, %v354
  %v470 = vpack.c.b16 %v357, %v356
  %v471 = vpack.c.b16 %v359, %v358
  %v472 = vpack.c.b16 %v361, %v360
  %v473 = vpack.c.b16 %v363, %v362
  %v474 = vpack.c.b16 %v365, %v364
  %v475 = vpack.c.b16 %v367, %v366
  %v476 = vpack.c.b16 %v369, %v368
  %v477 = vpack.c.b16 %v371, %v370
  %v478 = vpack.c.b16 %v373, %v372
  %v479 = vpack.c.b16 %v375, %v374
  %v480 = vpack.c.b16 %v377, %v376
  %v481 = vpack.c.b16 %v379, %v378
  %v482 = vpack.c.b16 %v381, %v380
  %v483 = vpack.c.b16 %v383, %v382
  %v484 = vpack.c.b16 %v385, %v384
  %v485 = vpack.c.b16 %v387, %v386
  %v486 = vpack.c.b16 %v389, %v388
  %v487 = vpack.c.b16 %v391, %v390
  %v488 = vpack.c.b16 %v393, %v392
  %v489 = vpack.c.b16 %v395, %v394
  %v490 = vpack.c.b16 %v397, %v396
  %v491 = vpack.c.b16 %v399, %v398
  %v492 = vpack.c.b16 %v401, %v400
  %v493 = vpack.c.b16 %v403, %v402
  %v494 = vpack.c.b16 %v405, %v404
  %v495 = vpack.c.b16 %v407, %v406
  %v496 = vpack.c.b16 %v409, %v408
  %v497 = vpack.c.b16 %v411, %v410
  %v498 = vpack.c.b16 %v413, %v412
  %v499 = vpack.c.b16 %v415, %v414
  %v500 = vpack.c.b16 %v417, %v416
  %v501 = vpack.c.b16 %v419, %v418
  %v502 = vpack.c.b16 %v421, %v420
  %v503 = vpack.c.b16 %v423, %v422
  %v504 = vpack.c.b16 %v425, %v424
  %v505 = vpack.c.b16 %v427, %v426
  %v506 = vpack.c.b16 %v429, %v428
  %v507 = vpack.c.b16 %v431, %v430
  %v508 = vpack.c.b16 %v433, %v432
  %v509 = vpack.c.b16 %v435, %v434
  %v510 = vpack.c.b16 %v437, %v436
  %v511 = vpack.c.b16 %v439, %v438
  %v512 = vpack.c.b16 %v441, %v440
  %v513 = vpack.c.b16 %v443, %v442
  %v514 = vpack.c.b16 %v445, %v444
  %v515 = vpack.c.b16 %v447, %v446
  %v516 = vpack.c.b16 %v449, %v448
  %v517 = vpack.c.b16 %v451, %v450
  %v518 = vpack.c.b16 %v453, %v452
  %v519 = vpack.c.b16 %v455, %v454
  %584 = vmatprep.subr.bf16.mxu0 0
  %585 = vmatpush1.bf16.msra.mxu0 %v456
  %586 = vmatprep.subr.bf16.mxu0 0
  %587 = vmatpush1.bf16.msra.mxu0 %v457
  %588 = vmatprep.subr.bf16.mxu0 0
  %589 = vmatpush1.bf16.msra.mxu0 %v458
  %590 = vmatprep.subr.bf16.mxu0 0
  %591 = vmatpush1.bf16.msra.mxu0 %v459
  %592 = vmatprep.subr.bf16.mxu0 0
  %593 = vmatpush1.bf16.msra.mxu0 %v460
  %594 = vmatprep.subr.bf16.mxu0 0
  %595 = vmatpush1.bf16.msra.mxu0 %v461
  %596 = vmatprep.subr.bf16.mxu0 0
  %597 = vmatpush1.bf16.msra.mxu0 %v462
  %598 = vmatprep.subr.bf16.mxu0 0
  %599 = vmatpush1.bf16.msra.mxu0 %v463
  %600 = vmatprep.subr.bf16.mxu0 0
  %601 = vmatpush1.bf16.msra.mxu0 %v464
  %602 = vmatprep.subr.bf16.mxu0 0
  %603 = vmatpush1.bf16.msra.mxu0 %v465
  %604 = vmatprep.subr.bf16.mxu0 0
  %605 = vmatpush1.bf16.msra.mxu0 %v466
  %606 = vmatprep.subr.bf16.mxu0 0
  %607 = vmatpush1.bf16.msra.mxu0 %v467
  %608 = vmatprep.subr.bf16.mxu0 0
  %609 = vmatpush1.bf16.msra.mxu0 %v468
  %610 = vmatprep.subr.bf16.mxu0 0
  %611 = vmatpush1.bf16.msra.mxu0 %v469
  %612 = vmatprep.subr.bf16.mxu0 0
  %613 = vmatpush1.bf16.msra.mxu0 %v470
  %614 = vmatprep.subr.bf16.mxu0 0
  %615 = vmatpush1.bf16.msra.mxu0 %v471
  %616 = vmatprep.mubr.bf16.mxu0 %v185
  %617 = vmatmul.mubr.bf16.gmra.mrb[0].mxu0 %v184
  %v618 = vpop.f32.mrb[0].mxu0
  %v619 = vadd.f32 0.0, %v618
  %v620 = vpop.f32.mrb[0].mxu0
  %v621 = vpop.f32.mrb[0].mxu0
  %v622 = vadd.f32 0.0, %v621
  %v623 = vpop.f32.mrb[0].mxu0
  %624 = vdwg.mxu0
  %625 = vmatprep.subr.bf16.mxu0 0
  %626 = vmatpush1.bf16.msra.mxu0 %v472
  %627 = vmatprep.subr.bf16.mxu0 0
  %628 = vmatpush1.bf16.msra.mxu0 %v473
  %629 = vmatprep.subr.bf16.mxu0 0
  %630 = vmatpush1.bf16.msra.mxu0 %v474
  %631 = vmatprep.subr.bf16.mxu0 0
  %632 = vmatpush1.bf16.msra.mxu0 %v475
  %633 = vmatprep.subr.bf16.mxu0 0
  %634 = vmatpush1.bf16.msra.mxu0 %v476
  %635 = vmatprep.subr.bf16.mxu0 0
  %636 = vmatpush1.bf16.msra.mxu0 %v477
  %637 = vmatprep.subr.bf16.mxu0 0
  %638 = vmatpush1.bf16.msra.mxu0 %v478
  %639 = vmatprep.subr.bf16.mxu0 0
  %640 = vmatpush1.bf16.msra.mxu0 %v479
  %641 = vmatprep.subr.bf16.mxu0 0
  %642 = vmatpush1.bf16.msra.mxu0 %v480
  %643 = vmatprep.subr.bf16.mxu0 0
  %644 = vmatpush1.bf16.msra.mxu0 %v481
  %645 = vmatprep.subr.bf16.mxu0 0
  %646 = vmatpush1.bf16.msra.mxu0 %v482
  %647 = vmatprep.subr.bf16.mxu0 0
  %648 = vmatpush1.bf16.msra.mxu0 %v483
  %649 = vmatprep.subr.bf16.mxu0 0
  %650 = vmatpush1.bf16.msra.mxu0 %v484
  %651 = vmatprep.subr.bf16.mxu0 0
  %652 = vmatpush1.bf16.msra.mxu0 %v485
  %653 = vmatprep.subr.bf16.mxu0 0
  %654 = vmatpush1.bf16.msra.mxu0 %v486
  %655 = vmatprep.subr.bf16.mxu0 0
  %656 = vmatpush1.bf16.msra.mxu0 %v487
  %657 = vmatprep.mubr.bf16.mxu0 %v187
  %658 = vmatmul.mubr.bf16.gmra.mrb[0].mxu0 %v186
  %v659 = vpop.f32.mrb[0].mxu0
  %v660 = vadd.f32 %v619, %v659
  %v661 = vpop.f32.mrb[0].mxu0
  %v662 = vpop.f32.mrb[0].mxu0
  %v663 = vadd.f32 %v622, %v662
  %v664 = vpop.f32.mrb[0].mxu0
  %665 = vdwg.mxu0
  %666 = vmatprep.subr.bf16.mxu0 0
  %667 = vmatpush1.bf16.msra.mxu0 %v488
  %668 = vmatprep.subr.bf16.mxu0 0
  %669 = vmatpush1.bf16.msra.mxu0 %v489
  %670 = vmatprep.subr.bf16.mxu0 0
  %671 = vmatpush1.bf16.msra.mxu0 %v490
  %672 = vmatprep.subr.bf16.mxu0 0
  %673 = vmatpush1.bf16.msra.mxu0 %v491
  %674 = vmatprep.subr.bf16.mxu0 0
  %675 = vmatpush1.bf16.msra.mxu0 %v492
  %676 = vmatprep.subr.bf16.mxu0 0
  %677 = vmatpush1.bf16.msra.mxu0 %v493
  %678 = vmatprep.subr.bf16.mxu0 0
  %679 = vmatpush1.bf16.msra.mxu0 %v494
  %680 = vmatprep.subr.bf16.mxu0 0
  %681 = vmatpush1.bf16.msra.mxu0 %v495
  %682 = vmatprep.subr.bf16.mxu0 0
  %683 = vmatpush1.bf16.msra.mxu0 %v496
  %684 = vmatprep.subr.bf16.mxu0 0
  %685 = vmatpush1.bf16.msra.mxu0 %v497
  %686 = vmatprep.subr.bf16.mxu0 0
  %687 = vmatpush1.bf16.msra.mxu0 %v498
  %688 = vmatprep.subr.bf16.mxu0 0
  %689 = vmatpush1.bf16.msra.mxu0 %v499
  %690 = vmatprep.subr.bf16.mxu0 0
  %691 = vmatpush1.bf16.msra.mxu0 %v500
  %692 = vmatprep.subr.bf16.mxu0 0
  %693 = vmatpush1.bf16.msra.mxu0 %v501
  %694 = vmatprep.subr.bf16.mxu0 0
  %695 = vmatpush1.bf16.msra.mxu0 %v502
  %696 = vmatprep.subr.bf16.mxu0 0
  %697 = vmatpush1.bf16.msra.mxu0 %v503
  %698 = vmatprep.mubr.bf16.mxu0 %v189
  %699 = vmatmul.mubr.bf16.gmra.mrb[0].mxu0 %v188
  %v700 = vpop.f32.mrb[0].mxu0
  %v701 = vadd.f32 %v660, %v700
  %v702 = vpop.f32.mrb[0].mxu0
  %v703 = vpop.f32.mrb[0].mxu0
  %v704 = vadd.f32 %v663, %v703
  %v705 = vpop.f32.mrb[0].mxu0
  %706 = vdwg.mxu0
  %707 = vmatprep.subr.bf16.mxu0 0
  %708 = vmatpush1.bf16.msra.mxu0 %v504
  %709 = vmatprep.subr.bf16.mxu0 0
  %710 = vmatpush1.bf16.msra.mxu0 %v505
  %711 = vmatprep.subr.bf16.mxu0 0
  %712 = vmatpush1.bf16.msra.mxu0 %v506
  %713 = vmatprep.subr.bf16.mxu0 0
  %714 = vmatpush1.bf16.msra.mxu0 %v507
  %715 = vmatprep.subr.bf16.mxu0 0
  %716 = vmatpush1.bf16.msra.mxu0 %v508
  %717 = vmatprep.subr.bf16.mxu0 0
  %718 = vmatpush1.bf16.msra.mxu0 %v509
  %719 = vmatprep.subr.bf16.mxu0 0
  %720 = vmatpush1.bf16.msra.mxu0 %v510
  %721 = vmatprep.subr.bf16.mxu0 0
  %722 = vmatpush1.bf16.msra.mxu0 %v511
  %723 = vmatprep.subr.bf16.mxu0 0
  %724 = vmatpush1.bf16.msra.mxu0 %v512
  %725 = vmatprep.subr.bf16.mxu0 0
  %726 = vmatpush1.bf16.msra.mxu0 %v513
  %727 = vmatprep.subr.bf16.mxu0 0
  %728 = vmatpush1.bf16.msra.mxu0 %v514
  %729 = vmatprep.subr.bf16.mxu0 0
  %730 = vmatpush1.bf16.msra.mxu0 %v515
  %731 = vmatprep.subr.bf16.mxu0 0
  %732 = vmatpush1.bf16.msra.mxu0 %v516
  %733 = vmatprep.subr.bf16.mxu0 0
  %734 = vmatpush1.bf16.msra.mxu0 %v517
  %735 = vmatprep.subr.bf16.mxu0 0
  %736 = vmatpush1.bf16.msra.mxu0 %v518
  %737 = vmatprep.subr.bf16.mxu0 0
  %738 = vmatpush1.bf16.msra.mxu0 %v519
  %739 = vmatprep.mubr.bf16.mxu0 %v191
  %740 = vmatmul.mubr.bf16.gmra.mrb[0].mxu0 %v190
  %v741 = vpop.f32.mrb[0].mxu0
  %v742 = vadd.f32 %v701, %v741
  %v743 = vpop.f32.mrb[0].mxu0
  %v744 = vpop.f32.mrb[0].mxu0
  %v745 = vadd.f32 %v704, %v744
  %v746 = vpop.f32.mrb[0].mxu0
  %747 = vdwg.mxu0
  %v748 = vadd.f32 %v22, %v742
  %v749 = vadd.f32 %v23, %v745
  %vm750 = vcmask 39936
  %751 = vst.msk [vmem:[#allocation2] sm:$0xff] %vm750, %v748
  %752 = vst.msk [vmem:[#allocation2 + $0x8] sm:$0xff] %vm750, %v749
  // Predicated region
  $region18: #{forward.9} parent=0 // pred_check
    %p753 = pneg %p15
  $region19: #{forward.9} parent=0 // pred_check_branch
    %755 = sbr.rel (%p753) target = $region21
  $region20: #{forward.9} parent=0 // pred_region
    %v756 = vld [vmem:[#allocation2] sm:$0xff]
    %v757 = vld [vmem:[#allocation2 + $0x8] sm:$0xff]
    %v758 = vld [vmem:[%s2] sm:$0x1]
    %v760 = vlaneseq
    %v761 = vshrl.u32 %v760, 7
    %v762 = vsub.s32 0, %v761
    %v763 = vrot.slane %v758, %v762
    %v765 = vadd.f32 %v756, %v763
    %v766 = vadd.f32 %v757, %v763
    %767 = vst.msk [vmem:[%s3] sm:$0xff] %vm750, %v765
    %768 = vst.msk [vmem:[%s3 + $0x8] sm:$0xff] %vm750, %v766
  $region21: #{forward.9} parent=0 // pred_fallthru
    _
  // Predicated region
  $region22: #{forward.9} parent=0 // pred_check
    _
  $region23: #{forward.9} parent=0 // pred_check_branch
    %770 = sbr.rel (0) target = $region25
  $region24: #{forward.9} parent=0 // pred_region
    _
  $region25: #{forward.9} parent=0 // pred_fallthru
    _
  // Predicated region
  $region26: #{forward.9} parent=0 // pred_check
    _
  $region27: #{forward.9} parent=0 // pred_check_branch
    %772 = sbr.rel (0) target = $region29
  $region28: #{forward.9} parent=0 // pred_region
    _
  $region29: #{forward.9} parent=0 // pred_fallthru
    _

// kernel: forward.7
$region0: #{forward.7}
  #allocation0 [shape = 'u32[]', space=smem, size = 0x4, offset = 0x4, fixed_abs, tag = 'smem constant byte address 0x4 - core index']
  #allocation1 [shape = 'u32[144,128]{1,0:T(1,128)}', space=vmem, size = 0x12000, scoped, tag = 'internal scratch']
  #allocation2 [shape = 'f32[16,256]{1,0:T(8,128)}', space=vmem, size = 0x4000, scoped, tag = 'scratch operand']
  %s0 = inlined_call_operand.vmem [shape: bf16[16,2048], index: 0, kind: input, shape index: {}]
  %s1 = inlined_call_operand.vmem [shape: bf16[2048,256], index: 1, kind: input, shape index: {}]
  %s2 = inlined_call_operand.vmem [shape: f32[1,256], index: 2, kind: input, shape index: {}]
  %s3 = inlined_call_operand.vmem [shape: bf16[16,256], index: 3, kind: output, shape index: {}]
  %s4 = sld [smem:[#allocation0]]
  $region30: #{forward.7} parent=0
    _
  %s6 = ssub.s32 1, %s4
  %s7 = scalar_select 0, %s6, %s4
  // Predicated region
  $region2: #{forward.7} parent=0 // pred_check
    _
  $region3: #{forward.7} parent=0 // pred_check_branch
    %9 = sbr.rel (0) target = $region5
  $region4: #{forward.7} parent=0 // pred_region
    _
  $region5: #{forward.7} parent=0 // pred_fallthru
    _
  // Predicated region
  $region6: #{forward.7} parent=0 // pred_check
    _
  $region7: #{forward.7} parent=0 // pred_check_branch
    %11 = sbr.rel (0) target = $region9
  $region8: #{forward.7} parent=0 // pred_region
    _
  $region9: #{forward.7} parent=0 // pred_fallthru
    _
  // Predicated region
  $region10: #{forward.7} parent=0 // pred_check
    _
  $region11: #{forward.7} parent=0 // pred_check_branch
    %13 = sbr.rel (0) target = $region13
  $region12: #{forward.7} parent=0 // pred_region
    _
  $region13: #{forward.7} parent=0 // pred_fallthru
    _
  %p14 = scmp.eq.s32.totalorder 0, 0
  // Predicated region
  $region14: #{forward.7} parent=0 // pred_check
    %p15 = pneg %p14
  $region15: #{forward.7} parent=0 // pred_check_branch
    %17 = sbr.rel (%p15) target = $region17
  $region16: #{forward.7} parent=0 // pred_region
    %18 = vst [vmem:[#allocation2] sm:$0xff] 0.0
    %19 = vst [vmem:[#allocation2 + $0x8] sm:$0xff] 0.0
    %20 = vst [vmem:[#allocation2 + $0x10] sm:$0xff] 0.0
    %21 = vst [vmem:[#allocation2 + $0x18] sm:$0xff] 0.0
  $region17: #{forward.7} parent=0 // pred_fallthru
    _
  %v22 = vld [vmem:[#allocation2] sm:$0xff]
  %v23 = vld [vmem:[#allocation2 + $0x8] sm:$0xff]
  %v24 = vld [vmem:[#allocation2 + $0x10] sm:$0xff]
  %v25 = vld [vmem:[#allocation2 + $0x18] sm:$0xff]
  %v26 = vld [vmem:[%s0] sm:$0xff]
  %v27 = vld [vmem:[%s0 + $0x8] sm:$0xff]
  %v28 = vld [vmem:[%s0 + $0x10] sm:$0xff]
  %v29 = vld [vmem:[%s0 + $0x18] sm:$0xff]
  %v30 = vld [vmem:[%s0 + $0x20] sm:$0xff]
  %v31 = vld [vmem:[%s0 + $0x28] sm:$0xff]
  %v32 = vld [vmem:[%s0 + $0x30] sm:$0xff]
  %v33 = vld [vmem:[%s0 + $0x38] sm:$0xff]
  %v34 = vld [vmem:[%s0 + $0x40] sm:$0xff]
  %v35 = vld [vmem:[%s0 + $0x48] sm:$0xff]
  %v36 = vld [vmem:[%s0 + $0x50] sm:$0xff]
  %v37 = vld [vmem:[%s0 + $0x58] sm:$0xff]
  %v38 = vld [vmem:[%s0 + $0x60] sm:$0xff]
  %v39 = vld [vmem:[%s0 + $0x68] sm:$0xff]
  %v40 = vld [vmem:[%s0 + $0x70] sm:$0xff]
  %v41 = vld [vmem:[%s0 + $0x78] sm:$0xff]
  %v42 = vld [vmem:[%s1] sm:$0xff]
  %v43 = vld [vmem:[%s1 + $0x8] sm:$0xff]
  %v44 = vld [vmem:[%s1 + $0x10] sm:$0xff]
  %v45 = vld [vmem:[%s1 + $0x18] sm:$0xff]
  %v46 = vld [vmem:[%s1 + $0x20] sm:$0xff]
  %v47 = vld [vmem:[%s1 + $0x28] sm:$0xff]
  %v48 = vld [vmem:[%s1 + $0x30] sm:$0xff]
  %v49 = vld [vmem:[%s1 + $0x38] sm:$0xff]
  %v50 = vld [vmem:[%s1 + $0x40] sm:$0xff]
  %v51 = vld [vmem:[%s1 + $0x48] sm:$0xff]
  %v52 = vld [vmem:[%s1 + $0x50] sm:$0xff]
  %v53 = vld [vmem:[%s1 + $0x58] sm:$0xff]
  %v54 = vld [vmem:[%s1 + $0x60] sm:$0xff]
  %v55 = vld [vmem:[%s1 + $0x68] sm:$0xff]
  %v56 = vld [vmem:[%s1 + $0x70] sm:$0xff]
  %v57 = vld [vmem:[%s1 + $0x78] sm:$0xff]
  %v58 = vld [vmem:[%s1 + $0x80] sm:$0xff]
  %v59 = vld [vmem:[%s1 + $0x88] sm:$0xff]
  %v60 = vld [vmem:[%s1 + $0x90] sm:$0xff]
  %v61 = vld [vmem:[%s1 + $0x98] sm:$0xff]
  %v62 = vld [vmem:[%s1 + $0xa0] sm:$0xff]
  %v63 = vld [vmem:[%s1 + $0xa8] sm:$0xff]
  %v64 = vld [vmem:[%s1 + $0xb0] sm:$0xff]
  %v65 = vld [vmem:[%s1 + $0xb8] sm:$0xff]
  %v66 = vld [vmem:[%s1 + $0xc0] sm:$0xff]
  %v67 = vld [vmem:[%s1 + $0xc8] sm:$0xff]
  %v68 = vld [vmem:[%s1 + $0xd0] sm:$0xff]
  %v69 = vld [vmem:[%s1 + $0xd8] sm:$0xff]
  %v70 = vld [vmem:[%s1 + $0xe0] sm:$0xff]
  %v71 = vld [vmem:[%s1 + $0xe8] sm:$0xff]
  %v72 = vld [vmem:[%s1 + $0xf0] sm:$0xff]
  %v73 = vld [vmem:[%s1 + $0xf8] sm:$0xff]
  %v74 = vld [vmem:[%s1 + $0x100] sm:$0xff]
  %v75 = vld [vmem:[%s1 + $0x108] sm:$0xff]
  %v76 = vld [vmem:[%s1 + $0x110] sm:$0xff]
  %v77 = vld [vmem:[%s1 + $0x118] sm:$0xff]
  %v78 = vld [vmem:[%s1 + $0x120] sm:$0xff]
  %v79 = vld [vmem:[%s1 + $0x128] sm:$0xff]
  %v80 = vld [vmem:[%s1 + $0x130] sm:$0xff]
  %v81 = vld [vmem:[%s1 + $0x138] sm:$0xff]
  %v82 = vld [vmem:[%s1 + $0x140] sm:$0xff]
  %v83 = vld [vmem:[%s1 + $0x148] sm:$0xff]
  %v84 = vld [vmem:[%s1 + $0x150] sm:$0xff]
  %v85 = vld [vmem:[%s1 + $0x158] sm:$0xff]
  %v86 = vld [vmem:[%s1 + $0x160] sm:$0xff]
  %v87 = vld [vmem:[%s1 + $0x168] sm:$0xff]
  %v88 = vld [vmem:[%s1 + $0x170] sm:$0xff]
  %v89 = vld [vmem:[%s1 + $0x178] sm:$0xff]
  %v90 = vld [vmem:[%s1 + $0x180] sm:$0xff]
  %v91 = vld [vmem:[%s1 + $0x188] sm:$0xff]
  %v92 = vld [vmem:[%s1 + $0x190] sm:$0xff]
  %v93 = vld [vmem:[%s1 + $0x198] sm:$0xff]
  %v94 = vld [vmem:[%s1 + $0x1a0] sm:$0xff]
  %v95 = vld [vmem:[%s1 + $0x1a8] sm:$0xff]
  %v96 = vld [vmem:[%s1 + $0x1b0] sm:$0xff]
  %v97 = vld [vmem:[%s1 + $0x1b8] sm:$0xff]
  %v98 = vld [vmem:[%s1 + $0x1c0] sm:$0xff]
  %v99 = vld [vmem:[%s1 + $0x1c8] sm:$0xff]
  %v100 = vld [vmem:[%s1 + $0x1d0] sm:$0xff]
  %v101 = vld [vmem:[%s1 + $0x1d8] sm:$0xff]
  %v102 = vld [vmem:[%s1 + $0x1e0] sm:$0xff]
  %v103 = vld [vmem:[%s1 + $0x1e8] sm:$0xff]
  %v104 = vld [vmem:[%s1 + $0x1f0] sm:$0xff]
  %v105 = vld [vmem:[%s1 + $0x1f8] sm:$0xff]
  %v106 = vld [vmem:[%s1 + $0x200] sm:$0xff]
  %v107 = vld [vmem:[%s1 + $0x208] sm:$0xff]
  %v108 = vld [vmem:[%s1 + $0x210] sm:$0xff]
  %v109 = vld [vmem:[%s1 + $0x218] sm:$0xff]
  %v110 = vld [vmem:[%s1 + $0x220] sm:$0xff]
  %v111 = vld [vmem:[%s1 + $0x228] sm:$0xff]
  %v112 = vld [vmem:[%s1 + $0x230] sm:$0xff]
  %v113 = vld [vmem:[%s1 + $0x238] sm:$0xff]
  %v114 = vld [vmem:[%s1 + $0x240] sm:$0xff]
  %v115 = vld [vmem:[%s1 + $0x248] sm:$0xff]
  %v116 = vld [vmem:[%s1 + $0x250] sm:$0xff]
  %v117 = vld [vmem:[%s1 + $0x258] sm:$0xff]
  %v118 = vld [vmem:[%s1 + $0x260] sm:$0xff]
  %v119 = vld [vmem:[%s1 + $0x268] sm:$0xff]
  %v120 = vld [vmem:[%s1 + $0x270] sm:$0xff]
  %v121 = vld [vmem:[%s1 + $0x278] sm:$0xff]
  %v122 = vld [vmem:[%s1 + $0x280] sm:$0xff]
  %v123 = vld [vmem:[%s1 + $0x288] sm:$0xff]
  %v124 = vld [vmem:[%s1 + $0x290] sm:$0xff]
  %v125 = vld [vmem:[%s1 + $0x298] sm:$0xff]
  %v126 = vld [vmem:[%s1 + $0x2a0] sm:$0xff]
  %v127 = vld [vmem:[%s1 + $0x2a8] sm:$0xff]
  %v128 = vld [vmem:[%s1 + $0x2b0] sm:$0xff]
  %v129 = vld [vmem:[%s1 + $0x2b8] sm:$0xff]
  %v130 = vld [vmem:[%s1 + $0x2c0] sm:$0xff]
  %v131 = vld [vmem:[%s1 + $0x2c8] sm:$0xff]
  %v132 = vld [vmem:[%s1 + $0x2d0] sm:$0xff]
  %v133 = vld [vmem:[%s1 + $0x2d8] sm:$0xff]
  %v134 = vld [vmem:[%s1 + $0x2e0] sm:$0xff]
  %v135 = vld [vmem:[%s1 + $0x2e8] sm:$0xff]
  %v136 = vld [vmem:[%s1 + $0x2f0] sm:$0xff]
  %v137 = vld [vmem:[%s1 + $0x2f8] sm:$0xff]
  %v138 = vld [vmem:[%s1 + $0x300] sm:$0xff]
  %v139 = vld [vmem:[%s1 + $0x308] sm:$0xff]
  %v140 = vld [vmem:[%s1 + $0x310] sm:$0xff]
  %v141 = vld [vmem:[%s1 + $0x318] sm:$0xff]
  %v142 = vld [vmem:[%s1 + $0x320] sm:$0xff]
  %v143 = vld [vmem:[%s1 + $0x328] sm:$0xff]
  %v144 = vld [vmem:[%s1 + $0x330] sm:$0xff]
  %v145 = vld [vmem:[%s1 + $0x338] sm:$0xff]
  %v146 = vld [vmem:[%s1 + $0x340] sm:$0xff]
  %v147 = vld [vmem:[%s1 + $0x348] sm:$0xff]
  %v148 = vld [vmem:[%s1 + $0x350] sm:$0xff]
  %v149 = vld [vmem:[%s1 + $0x358] sm:$0xff]
  %v150 = vld [vmem:[%s1 + $0x360] sm:$0xff]
  %v151 = vld [vmem:[%s1 + $0x368] sm:$0xff]
  %v152 = vld [vmem:[%s1 + $0x370] sm:$0xff]
  %v153 = vld [vmem:[%s1 + $0x378] sm:$0xff]
  %v154 = vld [vmem:[%s1 + $0x380] sm:$0xff]
  %v155 = vld [vmem:[%s1 + $0x388] sm:$0xff]
  %v156 = vld [vmem:[%s1 + $0x390] sm:$0xff]
  %v157 = vld [vmem:[%s1 + $0x398] sm:$0xff]
  %v158 = vld [vmem:[%s1 + $0x3a0] sm:$0xff]
  %v159 = vld [vmem:[%s1 + $0x3a8] sm:$0xff]
  %v160 = vld [vmem:[%s1 + $0x3b0] sm:$0xff]
  %v161 = vld [vmem:[%s1 + $0x3b8] sm:$0xff]
  %v162 = vld [vmem:[%s1 + $0x3c0] sm:$0xff]
  %v163 = vld [vmem:[%s1 + $0x3c8] sm:$0xff]
  %v164 = vld [vmem:[%s1 + $0x3d0] sm:$0xff]
  %v165 = vld [vmem:[%s1 + $0x3d8] sm:$0xff]
  %v166 = vld [vmem:[%s1 + $0x3e0] sm:$0xff]
  %v167 = vld [vmem:[%s1 + $0x3e8] sm:$0xff]
  %v168 = vld [vmem:[%s1 + $0x3f0] sm:$0xff]
  %v169 = vld [vmem:[%s1 + $0x3f8] sm:$0xff]
  %v170 = vld [vmem:[%s1 + $0x400] sm:$0xff]
  %v171 = vld [vmem:[%s1 + $0x408] sm:$0xff]
  %v172 = vld [vmem:[%s1 + $0x410] sm:$0xff]
  %v173 = vld [vmem:[%s1 + $0x418] sm:$0xff]
  %v174 = vld [vmem:[%s1 + $0x420] sm:$0xff]
  %v175 = vld [vmem:[%s1 + $0x428] sm:$0xff]
  %v176 = vld [vmem:[%s1 + $0x430] sm:$0xff]
  %v177 = vld [vmem:[%s1 + $0x438] sm:$0xff]
  %v178 = vld [vmem:[%s1 + $0x440] sm:$0xff]
  %v179 = vld [vmem:[%s1 + $0x448] sm:$0xff]
  %v180 = vld [vmem:[%s1 + $0x450] sm:$0xff]
  %v181 = vld [vmem:[%s1 + $0x458] sm:$0xff]
  %v182 = vld [vmem:[%s1 + $0x460] sm:$0xff]
  %v183 = vld [vmem:[%s1 + $0x468] sm:$0xff]
  %v184 = vld [vmem:[%s1 + $0x470] sm:$0xff]
  %v185 = vld [vmem:[%s1 + $0x478] sm:$0xff]
  %v186 = vld [vmem:[%s1 + $0x480] sm:$0xff]
  %v187 = vld [vmem:[%s1 + $0x488] sm:$0xff]
  %v188 = vld [vmem:[%s1 + $0x490] sm:$0xff]
  %v189 = vld [vmem:[%s1 + $0x498] sm:$0xff]
  %v190 = vld [vmem:[%s1 + $0x4a0] sm:$0xff]
  %v191 = vld [vmem:[%s1 + $0x4a8] sm:$0xff]
  %v192 = vld [vmem:[%s1 + $0x4b0] sm:$0xff]
  %v193 = vld [vmem:[%s1 + $0x4b8] sm:$0xff]
  %v194 = vld [vmem:[%s1 + $0x4c0] sm:$0xff]
  %v195 = vld [vmem:[%s1 + $0x4c8] sm:$0xff]
  %v196 = vld [vmem:[%s1 + $0x4d0] sm:$0xff]
  %v197 = vld [vmem:[%s1 + $0x4d8] sm:$0xff]
  %v198 = vld [vmem:[%s1 + $0x4e0] sm:$0xff]
  %v199 = vld [vmem:[%s1 + $0x4e8] sm:$0xff]
  %v200 = vld [vmem:[%s1 + $0x4f0] sm:$0xff]
  %v201 = vld [vmem:[%s1 + $0x4f8] sm:$0xff]
  %v202 = vld [vmem:[%s1 + $0x500] sm:$0xff]
  %v203 = vld [vmem:[%s1 + $0x508] sm:$0xff]
  %v204 = vld [vmem:[%s1 + $0x510] sm:$0xff]
  %v205 = vld [vmem:[%s1 + $0x518] sm:$0xff]
  %v206 = vld [vmem:[%s1 + $0x520] sm:$0xff]
  %v207 = vld [vmem:[%s1 + $0x528] sm:$0xff]
  %v208 = vld [vmem:[%s1 + $0x530] sm:$0xff]
  %v209 = vld [vmem:[%s1 + $0x538] sm:$0xff]
  %v210 = vld [vmem:[%s1 + $0x540] sm:$0xff]
  %v211 = vld [vmem:[%s1 + $0x548] sm:$0xff]
  %v212 = vld [vmem:[%s1 + $0x550] sm:$0xff]
  %v213 = vld [vmem:[%s1 + $0x558] sm:$0xff]
  %v214 = vld [vmem:[%s1 + $0x560] sm:$0xff]
  %v215 = vld [vmem:[%s1 + $0x568] sm:$0xff]
  %v216 = vld [vmem:[%s1 + $0x570] sm:$0xff]
  %v217 = vld [vmem:[%s1 + $0x578] sm:$0xff]
  %v218 = vld [vmem:[%s1 + $0x580] sm:$0xff]
  %v219 = vld [vmem:[%s1 + $0x588] sm:$0xff]
  %v220 = vld [vmem:[%s1 + $0x590] sm:$0xff]
  %v221 = vld [vmem:[%s1 + $0x598] sm:$0xff]
  %v222 = vld [vmem:[%s1 + $0x5a0] sm:$0xff]
  %v223 = vld [vmem:[%s1 + $0x5a8] sm:$0xff]
  %v224 = vld [vmem:[%s1 + $0x5b0] sm:$0xff]
  %v225 = vld [vmem:[%s1 + $0x5b8] sm:$0xff]
  %v226 = vld [vmem:[%s1 + $0x5c0] sm:$0xff]
  %v227 = vld [vmem:[%s1 + $0x5c8] sm:$0xff]
  %v228 = vld [vmem:[%s1 + $0x5d0] sm:$0xff]
  %v229 = vld [vmem:[%s1 + $0x5d8] sm:$0xff]
  %v230 = vld [vmem:[%s1 + $0x5e0] sm:$0xff]
  %v231 = vld [vmem:[%s1 + $0x5e8] sm:$0xff]
  %v232 = vld [vmem:[%s1 + $0x5f0] sm:$0xff]
  %v233 = vld [vmem:[%s1 + $0x5f8] sm:$0xff]
  %v234 = vld [vmem:[%s1 + $0x600] sm:$0xff]
  %v235 = vld [vmem:[%s1 + $0x608] sm:$0xff]
  %v236 = vld [vmem:[%s1 + $0x610] sm:$0xff]
  %v237 = vld [vmem:[%s1 + $0x618] sm:$0xff]
  %v238 = vld [vmem:[%s1 + $0x620] sm:$0xff]
  %v239 = vld [vmem:[%s1 + $0x628] sm:$0xff]
  %v240 = vld [vmem:[%s1 + $0x630] sm:$0xff]
  %v241 = vld [vmem:[%s1 + $0x638] sm:$0xff]
  %v242 = vld [vmem:[%s1 + $0x640] sm:$0xff]
  %v243 = vld [vmem:[%s1 + $0x648] sm:$0xff]
  %v244 = vld [vmem:[%s1 + $0x650] sm:$0xff]
  %v245 = vld [vmem:[%s1 + $0x658] sm:$0xff]
  %v246 = vld [vmem:[%s1 + $0x660] sm:$0xff]
  %v247 = vld [vmem:[%s1 + $0x668] sm:$0xff]
  %v248 = vld [vmem:[%s1 + $0x670] sm:$0xff]
  %v249 = vld [vmem:[%s1 + $0x678] sm:$0xff]
  %v250 = vld [vmem:[%s1 + $0x680] sm:$0xff]
  %v251 = vld [vmem:[%s1 + $0x688] sm:$0xff]
  %v252 = vld [vmem:[%s1 + $0x690] sm:$0xff]
  %v253 = vld [vmem:[%s1 + $0x698] sm:$0xff]
  %v254 = vld [vmem:[%s1 + $0x6a0] sm:$0xff]
  %v255 = vld [vmem:[%s1 + $0x6a8] sm:$0xff]
  %v256 = vld [vmem:[%s1 + $0x6b0] sm:$0xff]
  %v257 = vld [vmem:[%s1 + $0x6b8] sm:$0xff]
  %v258 = vld [vmem:[%s1 + $0x6c0] sm:$0xff]
  %v259 = vld [vmem:[%s1 + $0x6c8] sm:$0xff]
  %v260 = vld [vmem:[%s1 + $0x6d0] sm:$0xff]
  %v261 = vld [vmem:[%s1 + $0x6d8] sm:$0xff]
  %v262 = vld [vmem:[%s1 + $0x6e0] sm:$0xff]
  %v263 = vld [vmem:[%s1 + $0x6e8] sm:$0xff]
  %v264 = vld [vmem:[%s1 + $0x6f0] sm:$0xff]
  %v265 = vld [vmem:[%s1 + $0x6f8] sm:$0xff]
  %v266 = vld [vmem:[%s1 + $0x700] sm:$0xff]
  %v267 = vld [vmem:[%s1 + $0x708] sm:$0xff]
  %v268 = vld [vmem:[%s1 + $0x710] sm:$0xff]
  %v269 = vld [vmem:[%s1 + $0x718] sm:$0xff]
  %v270 = vld [vmem:[%s1 + $0x720] sm:$0xff]
  %v271 = vld [vmem:[%s1 + $0x728] sm:$0xff]
  %v272 = vld [vmem:[%s1 + $0x730] sm:$0xff]
  %v273 = vld [vmem:[%s1 + $0x738] sm:$0xff]
  %v274 = vld [vmem:[%s1 + $0x740] sm:$0xff]
  %v275 = vld [vmem:[%s1 + $0x748] sm:$0xff]
  %v276 = vld [vmem:[%s1 + $0x750] sm:$0xff]
  %v277 = vld [vmem:[%s1 + $0x758] sm:$0xff]
  %v278 = vld [vmem:[%s1 + $0x760] sm:$0xff]
  %v279 = vld [vmem:[%s1 + $0x768] sm:$0xff]
  %v280 = vld [vmem:[%s1 + $0x770] sm:$0xff]
  %v281 = vld [vmem:[%s1 + $0x778] sm:$0xff]
  %v282 = vld [vmem:[%s1 + $0x780] sm:$0xff]
  %v283 = vld [vmem:[%s1 + $0x788] sm:$0xff]
  %v284 = vld [vmem:[%s1 + $0x790] sm:$0xff]
  %v285 = vld [vmem:[%s1 + $0x798] sm:$0xff]
  %v286 = vld [vmem:[%s1 + $0x7a0] sm:$0xff]
  %v287 = vld [vmem:[%s1 + $0x7a8] sm:$0xff]
  %v288 = vld [vmem:[%s1 + $0x7b0] sm:$0xff]
  %v289 = vld [vmem:[%s1 + $0x7b8] sm:$0xff]
  %v290 = vld [vmem:[%s1 + $0x7c0] sm:$0xff]
  %v291 = vld [vmem:[%s1 + $0x7c8] sm:$0xff]
  %v292 = vld [vmem:[%s1 + $0x7d0] sm:$0xff]
  %v293 = vld [vmem:[%s1 + $0x7d8] sm:$0xff]
  %v294 = vld [vmem:[%s1 + $0x7e0] sm:$0xff]
  %v295 = vld [vmem:[%s1 + $0x7e8] sm:$0xff]
  %v296 = vld [vmem:[%s1 + $0x7f0] sm:$0xff]
  %v297 = vld [vmem:[%s1 + $0x7f8] sm:$0xff]
  %v314 = vunpack.c.l.b16 %v26
  %v315 = vunpack.c.h.b16 %v26
  %v316 = vunpack.c.l.b16 %v27
  %v317 = vunpack.c.h.b16 %v27
  %v318 = vunpack.c.l.b16 %v28
  %v319 = vunpack.c.h.b16 %v28
  %v320 = vunpack.c.l.b16 %v29
  %v321 = vunpack.c.h.b16 %v29
  %v322 = vunpack.c.l.b16 %v30
  %v323 = vunpack.c.h.b16 %v30
  %v324 = vunpack.c.l.b16 %v31
  %v325 = vunpack.c.h.b16 %v31
  %v326 = vunpack.c.l.b16 %v32
  %v327 = vunpack.c.h.b16 %v32
  %v328 = vunpack.c.l.b16 %v33
  %v329 = vunpack.c.h.b16 %v33
  %v330 = vunpack.c.l.b16 %v34
  %v331 = vunpack.c.h.b16 %v34
  %v332 = vunpack.c.l.b16 %v35
  %v333 = vunpack.c.h.b16 %v35
  %v334 = vunpack.c.l.b16 %v36
  %v335 = vunpack.c.h.b16 %v36
  %v336 = vunpack.c.l.b16 %v37
  %v337 = vunpack.c.h.b16 %v37
  %v338 = vunpack.c.l.b16 %v38
  %v339 = vunpack.c.h.b16 %v38
  %v340 = vunpack.c.l.b16 %v39
  %v341 = vunpack.c.h.b16 %v39
  %v342 = vunpack.c.l.b16 %v40
  %v343 = vunpack.c.h.b16 %v40
  %v344 = vunpack.c.l.b16 %v41
  %v345 = vunpack.c.h.b16 %v41
  %v346 = vpack.c.b16 %v330, %v314
  %v347 = vpack.c.b16 %v331, %v315
  %v348 = vpack.c.b16 %v332, %v316
  %v349 = vpack.c.b16 %v333, %v317
  %v350 = vpack.c.b16 %v334, %v318
  %v351 = vpack.c.b16 %v335, %v319
  %v352 = vpack.c.b16 %v336, %v320
  %v353 = vpack.c.b16 %v337, %v321
  %v354 = vpack.c.b16 %v338, %v322
  %v355 = vpack.c.b16 %v339, %v323
  %v356 = vpack.c.b16 %v340, %v324
  %v357 = vpack.c.b16 %v341, %v325
  %v358 = vpack.c.b16 %v342, %v326
  %v359 = vpack.c.b16 %v343, %v327
  %v360 = vpack.c.b16 %v344, %v328
  %v361 = vpack.c.b16 %v345, %v329
  %v634 = vunpack.c.l.b16 %v42
  %v635 = vunpack.c.h.b16 %v42
  %v636 = vunpack.c.l.b16 %v43
  %v637 = vunpack.c.h.b16 %v43
  %v638 = vunpack.c.l.b16 %v44
  %v639 = vunpack.c.h.b16 %v44
  %v640 = vunpack.c.l.b16 %v45
  %v641 = vunpack.c.h.b16 %v45
  %v642 = vunpack.c.l.b16 %v46
  %v643 = vunpack.c.h.b16 %v46
  %v644 = vunpack.c.l.b16 %v47
  %v645 = vunpack.c.h.b16 %v47
  %v646 = vunpack.c.l.b16 %v48
  %v647 = vunpack.c.h.b16 %v48
  %v648 = vunpack.c.l.b16 %v49
  %v649 = vunpack.c.h.b16 %v49
  %v650 = vunpack.c.l.b16 %v50
  %v651 = vunpack.c.h.b16 %v50
  %v652 = vunpack.c.l.b16 %v51
  %v653 = vunpack.c.h.b16 %v51
  %v654 = vunpack.c.l.b16 %v52
  %v655 = vunpack.c.h.b16 %v52
  %v656 = vunpack.c.l.b16 %v53
  %v657 = vunpack.c.h.b16 %v53
  %v658 = vunpack.c.l.b16 %v54
  %v659 = vunpack.c.h.b16 %v54
  %v660 = vunpack.c.l.b16 %v55
  %v661 = vunpack.c.h.b16 %v55
  %v662 = vunpack.c.l.b16 %v56
  %v663 = vunpack.c.h.b16 %v56
  %v664 = vunpack.c.l.b16 %v57
  %v665 = vunpack.c.h.b16 %v57
  %v666 = vunpack.c.l.b16 %v58
  %v667 = vunpack.c.h.b16 %v58
  %v668 = vunpack.c.l.b16 %v59
  %v669 = vunpack.c.h.b16 %v59
  %v670 = vunpack.c.l.b16 %v60
  %v671 = vunpack.c.h.b16 %v60
  %v672 = vunpack.c.l.b16 %v61
  %v673 = vunpack.c.h.b16 %v61
  %v674 = vunpack.c.l.b16 %v62
  %v675 = vunpack.c.h.b16 %v62
  %v676 = vunpack.c.l.b16 %v63
  %v677 = vunpack.c.h.b16 %v63
  %v678 = vunpack.c.l.b16 %v64
  %v679 = vunpack.c.h.b16 %v64
  %v680 = vunpack.c.l.b16 %v65
  %v681 = vunpack.c.h.b16 %v65
  %v682 = vunpack.c.l.b16 %v66
  %v683 = vunpack.c.h.b16 %v66
  %v684 = vunpack.c.l.b16 %v67
  %v685 = vunpack.c.h.b16 %v67
  %v686 = vunpack.c.l.b16 %v68
  %v687 = vunpack.c.h.b16 %v68
  %v688 = vunpack.c.l.b16 %v69
  %v689 = vunpack.c.h.b16 %v69
  %v690 = vunpack.c.l.b16 %v70
  %v691 = vunpack.c.h.b16 %v70
  %v692 = vunpack.c.l.b16 %v71
  %v693 = vunpack.c.h.b16 %v71
  %v694 = vunpack.c.l.b16 %v72
  %v695 = vunpack.c.h.b16 %v72
  %v696 = vunpack.c.l.b16 %v73
  %v697 = vunpack.c.h.b16 %v73
  %v698 = vunpack.c.l.b16 %v74
  %v699 = vunpack.c.h.b16 %v74
  %v700 = vunpack.c.l.b16 %v75
  %v701 = vunpack.c.h.b16 %v75
  %v702 = vunpack.c.l.b16 %v76
  %v703 = vunpack.c.h.b16 %v76
  %v704 = vunpack.c.l.b16 %v77
  %v705 = vunpack.c.h.b16 %v77
  %v706 = vunpack.c.l.b16 %v78
  %v707 = vunpack.c.h.b16 %v78
  %v708 = vunpack.c.l.b16 %v79
  %v709 = vunpack.c.h.b16 %v79
  %v710 = vunpack.c.l.b16 %v80
  %v711 = vunpack.c.h.b16 %v80
  %v712 = vunpack.c.l.b16 %v81
  %v713 = vunpack.c.h.b16 %v81
  %v714 = vunpack.c.l.b16 %v82
  %v715 = vunpack.c.h.b16 %v82
  %v716 = vunpack.c.l.b16 %v83
  %v717 = vunpack.c.h.b16 %v83
  %v718 = vunpack.c.l.b16 %v84
  %v719 = vunpack.c.h.b16 %v84
  %v720 = vunpack.c.l.b16 %v85
  %v721 = vunpack.c.h.b16 %v85
  %v722 = vunpack.c.l.b16 %v86
  %v723 = vunpack.c.h.b16 %v86
  %v724 = vunpack.c.l.b16 %v87
  %v725 = vunpack.c.h.b16 %v87
  %v726 = vunpack.c.l.b16 %v88
  %v727 = vunpack.c.h.b16 %v88
  %v728 = vunpack.c.l.b16 %v89
  %v729 = vunpack.c.h.b16 %v89
  %v730 = vunpack.c.l.b16 %v90
  %v731 = vunpack.c.h.b16 %v90
  %v732 = vunpack.c.l.b16 %v91
  %v733 = vunpack.c.h.b16 %v91
  %v734 = vunpack.c.l.b16 %v92
  %v735 = vunpack.c.h.b16 %v92
  %v736 = vunpack.c.l.b16 %v93
  %v737 = vunpack.c.h.b16 %v93
  %v738 = vunpack.c.l.b16 %v94
  %v739 = vunpack.c.h.b16 %v94
  %v740 = vunpack.c.l.b16 %v95
  %v741 = vunpack.c.h.b16 %v95
  %v742 = vunpack.c.l.b16 %v96
  %v743 = vunpack.c.h.b16 %v96
  %v744 = vunpack.c.l.b16 %v97
  %v745 = vunpack.c.h.b16 %v97
  %v746 = vunpack.c.l.b16 %v98
  %v747 = vunpack.c.h.b16 %v98
  %v748 = vunpack.c.l.b16 %v99
  %v749 = vunpack.c.h.b16 %v99
  %v750 = vunpack.c.l.b16 %v100
  %v751 = vunpack.c.h.b16 %v100
  %v752 = vunpack.c.l.b16 %v101
  %v753 = vunpack.c.h.b16 %v101
  %v754 = vunpack.c.l.b16 %v102
  %v755 = vunpack.c.h.b16 %v102
  %v756 = vunpack.c.l.b16 %v103
  %v757 = vunpack.c.h.b16 %v103
  %v758 = vunpack.c.l.b16 %v104
  %v759 = vunpack.c.h.b16 %v104
  %v760 = vunpack.c.l.b16 %v105
  %v761 = vunpack.c.h.b16 %v105
  %v762 = vunpack.c.l.b16 %v106
  %v763 = vunpack.c.h.b16 %v106
  %v764 = vunpack.c.l.b16 %v107
  %v765 = vunpack.c.h.b16 %v107
  %v766 = vunpack.c.l.b16 %v108
  %v767 = vunpack.c.h.b16 %v108
  %v768 = vunpack.c.l.b16 %v109
  %v769 = vunpack.c.h.b16 %v109
  %v770 = vunpack.c.l.b16 %v110
  %v771 = vunpack.c.h.b16 %v110
  %v772 = vunpack.c.l.b16 %v111
  %v773 = vunpack.c.h.b16 %v111
  %v774 = vunpack.c.l.b16 %v112
  %v775 = vunpack.c.h.b16 %v112
  %v776 = vunpack.c.l.b16 %v113
  %v777 = vunpack.c.h.b16 %v113
  %v778 = vunpack.c.l.b16 %v114
  %v779 = vunpack.c.h.b16 %v114
  %v780 = vunpack.c.l.b16 %v115
  %v781 = vunpack.c.h.b16 %v115
  %v782 = vunpack.c.l.b16 %v116
  %v783 = vunpack.c.h.b16 %v116
  %v784 = vunpack.c.l.b16 %v117
  %v785 = vunpack.c.h.b16 %v117
  %v786 = vunpack.c.l.b16 %v118
  %v787 = vunpack.c.h.b16 %v118
  %v788 = vunpack.c.l.b16 %v119
  %v789 = vunpack.c.h.b16 %v119
  %v790 = vunpack.c.l.b16 %v120
  %v791 = vunpack.c.h.b16 %v120
  %v792 = vunpack.c.l.b16 %v121
  %v793 = vunpack.c.h.b16 %v121
  %v794 = vunpack.c.l.b16 %v122
  %v795 = vunpack.c.h.b16 %v122
  %v796 = vunpack.c.l.b16 %v123
  %v797 = vunpack.c.h.b16 %v123
  %v798 = vunpack.c.l.b16 %v124
  %v799 = vunpack.c.h.b16 %v124
  %v800 = vunpack.c.l.b16 %v125
  %v801 = vunpack.c.h.b16 %v125
  %v802 = vunpack.c.l.b16 %v126
  %v803 = vunpack.c.h.b16 %v126
  %v804 = vunpack.c.l.b16 %v127
  %v805 = vunpack.c.h.b16 %v127
  %v806 = vunpack.c.l.b16 %v128
  %v807 = vunpack.c.h.b16 %v128
  %v808 = vunpack.c.l.b16 %v129
  %v809 = vunpack.c.h.b16 %v129
  %v810 = vunpack.c.l.b16 %v130
  %v811 = vunpack.c.h.b16 %v130
  %v812 = vunpack.c.l.b16 %v131
  %v813 = vunpack.c.h.b16 %v131
  %v814 = vunpack.c.l.b16 %v132
  %v815 = vunpack.c.h.b16 %v132
  %v816 = vunpack.c.l.b16 %v133
  %v817 = vunpack.c.h.b16 %v133
  %v818 = vunpack.c.l.b16 %v134
  %v819 = vunpack.c.h.b16 %v134
  %v820 = vunpack.c.l.b16 %v135
  %v821 = vunpack.c.h.b16 %v135
  %v822 = vunpack.c.l.b16 %v136
  %v823 = vunpack.c.h.b16 %v136
  %v824 = vunpack.c.l.b16 %v137
  %v825 = vunpack.c.h.b16 %v137
  %v826 = vunpack.c.l.b16 %v138
  %v827 = vunpack.c.h.b16 %v138
  %v828 = vunpack.c.l.b16 %v139
  %v829 = vunpack.c.h.b16 %v139
  %v830 = vunpack.c.l.b16 %v140
  %v831 = vunpack.c.h.b16 %v140
  %v832 = vunpack.c.l.b16 %v141
  %v833 = vunpack.c.h.b16 %v141
  %v834 = vunpack.c.l.b16 %v142
  %v835 = vunpack.c.h.b16 %v142
  %v836 = vunpack.c.l.b16 %v143
  %v837 = vunpack.c.h.b16 %v143
  %v838 = vunpack.c.l.b16 %v144
  %v839 = vunpack.c.h.b16 %v144
  %v840 = vunpack.c.l.b16 %v145
  %v841 = vunpack.c.h.b16 %v145
  %v842 = vunpack.c.l.b16 %v146
  %v843 = vunpack.c.h.b16 %v146
  %v844 = vunpack.c.l.b16 %v147
  %v845 = vunpack.c.h.b16 %v147
  %v846 = vunpack.c.l.b16 %v148
  %v847 = vunpack.c.h.b16 %v148
  %v848 = vunpack.c.l.b16 %v149
  %v849 = vunpack.c.h.b16 %v149
  %v850 = vunpack.c.l.b16 %v150
  %v851 = vunpack.c.h.b16 %v150
  %v852 = vunpack.c.l.b16 %v151
  %v853 = vunpack.c.h.b16 %v151
  %v854 = vunpack.c.l.b16 %v152
  %v855 = vunpack.c.h.b16 %v152
  %v856 = vunpack.c.l.b16 %v153
  %v857 = vunpack.c.h.b16 %v153
  %v858 = vunpack.c.l.b16 %v154
  %v859 = vunpack.c.h.b16 %v154
  %v860 = vunpack.c.l.b16 %v155
  %v861 = vunpack.c.h.b16 %v155
  %v862 = vunpack.c.l.b16 %v156
  %v863 = vunpack.c.h.b16 %v156
  %v864 = vunpack.c.l.b16 %v157
  %v865 = vunpack.c.h.b16 %v157
  %v866 = vunpack.c.l.b16 %v158
  %v867 = vunpack.c.h.b16 %v158
  %v868 = vunpack.c.l.b16 %v159
  %v869 = vunpack.c.h.b16 %v159
  %v870 = vunpack.c.l.b16 %v160
  %v871 = vunpack.c.h.b16 %v160
  %v872 = vunpack.c.l.b16 %v161
  %v873 = vunpack.c.h.b16 %v161
  %v874 = vunpack.c.l.b16 %v162
  %v875 = vunpack.c.h.b16 %v162
  %v876 = vunpack.c.l.b16 %v163
  %v877 = vunpack.c.h.b16 %v163
  %v878 = vunpack.c.l.b16 %v164
  %v879 = vunpack.c.h.b16 %v164
  %v880 = vunpack.c.l.b16 %v165
  %v881 = vunpack.c.h.b16 %v165
  %v882 = vunpack.c.l.b16 %v166
  %v883 = vunpack.c.h.b16 %v166
  %v884 = vunpack.c.l.b16 %v167
  %v885 = vunpack.c.h.b16 %v167
  %v886 = vunpack.c.l.b16 %v168
  %v887 = vunpack.c.h.b16 %v168
  %v888 = vunpack.c.l.b16 %v169
  %v889 = vunpack.c.h.b16 %v169
  %v890 = vunpack.c.l.b16 %v170
  %v891 = vunpack.c.h.b16 %v170
  %v892 = vunpack.c.l.b16 %v171
  %v893 = vunpack.c.h.b16 %v171
  %v894 = vunpack.c.l.b16 %v172
  %v895 = vunpack.c.h.b16 %v172
  %v896 = vunpack.c.l.b16 %v173
  %v897 = vunpack.c.h.b16 %v173
  %v898 = vunpack.c.l.b16 %v174
  %v899 = vunpack.c.h.b16 %v174
  %v900 = vunpack.c.l.b16 %v175
  %v901 = vunpack.c.h.b16 %v175
  %v902 = vunpack.c.l.b16 %v176
  %v903 = vunpack.c.h.b16 %v176
  %v904 = vunpack.c.l.b16 %v177
  %v905 = vunpack.c.h.b16 %v177
  %v906 = vunpack.c.l.b16 %v178
  %v907 = vunpack.c.h.b16 %v178
  %v908 = vunpack.c.l.b16 %v179
  %v909 = vunpack.c.h.b16 %v179
  %v910 = vunpack.c.l.b16 %v180
  %v911 = vunpack.c.h.b16 %v180
  %v912 = vunpack.c.l.b16 %v181
  %v913 = vunpack.c.h.b16 %v181
  %v914 = vunpack.c.l.b16 %v182
  %v915 = vunpack.c.h.b16 %v182
  %v916 = vunpack.c.l.b16 %v183
  %v917 = vunpack.c.h.b16 %v183
  %v918 = vunpack.c.l.b16 %v184
  %v919 = vunpack.c.h.b16 %v184
  %v920 = vunpack.c.l.b16 %v185
  %v921 = vunpack.c.h.b16 %v185
  %v922 = vunpack.c.l.b16 %v186
  %v923 = vunpack.c.h.b16 %v186
  %v924 = vunpack.c.l.b16 %v187
  %v925 = vunpack.c.h.b16 %v187
  %v926 = vunpack.c.l.b16 %v188
  %v927 = vunpack.c.h.b16 %v188
  %v928 = vunpack.c.l.b16 %v189
  %v929 = vunpack.c.h.b16 %v189
  %v930 = vunpack.c.l.b16 %v190
  %v931 = vunpack.c.h.b16 %v190
  %v932 = vunpack.c.l.b16 %v191
  %v933 = vunpack.c.h.b16 %v191
  %v934 = vunpack.c.l.b16 %v192
  %v935 = vunpack.c.h.b16 %v192
  %v936 = vunpack.c.l.b16 %v193
  %v937 = vunpack.c.h.b16 %v193
  %v938 = vunpack.c.l.b16 %v194
  %v939 = vunpack.c.h.b16 %v194
  %v940 = vunpack.c.l.b16 %v195
  %v941 = vunpack.c.h.b16 %v195
  %v942 = vunpack.c.l.b16 %v196
  %v943 = vunpack.c.h.b16 %v196
  %v944 = vunpack.c.l.b16 %v197
  %v945 = vunpack.c.h.b16 %v197
  %v946 = vunpack.c.l.b16 %v198
  %v947 = vunpack.c.h.b16 %v198
  %v948 = vunpack.c.l.b16 %v199
  %v949 = vunpack.c.h.b16 %v199
  %v950 = vunpack.c.l.b16 %v200
  %v951 = vunpack.c.h.b16 %v200
  %v952 = vunpack.c.l.b16 %v201
  %v953 = vunpack.c.h.b16 %v201
  %v954 = vunpack.c.l.b16 %v202
  %v955 = vunpack.c.h.b16 %v202
  %v956 = vunpack.c.l.b16 %v203
  %v957 = vunpack.c.h.b16 %v203
  %v958 = vunpack.c.l.b16 %v204
  %v959 = vunpack.c.h.b16 %v204
  %v960 = vunpack.c.l.b16 %v205
  %v961 = vunpack.c.h.b16 %v205
  %v962 = vunpack.c.l.b16 %v206
  %v963 = vunpack.c.h.b16 %v206
  %v964 = vunpack.c.l.b16 %v207
  %v965 = vunpack.c.h.b16 %v207
  %v966 = vunpack.c.l.b16 %v208
  %v967 = vunpack.c.h.b16 %v208
  %v968 = vunpack.c.l.b16 %v209
  %v969 = vunpack.c.h.b16 %v209
  %v970 = vunpack.c.l.b16 %v210
  %v971 = vunpack.c.h.b16 %v210
  %v972 = vunpack.c.l.b16 %v211
  %v973 = vunpack.c.h.b16 %v211
  %v974 = vunpack.c.l.b16 %v212
  %v975 = vunpack.c.h.b16 %v212
  %v976 = vunpack.c.l.b16 %v213
  %v977 = vunpack.c.h.b16 %v213
  %v978 = vunpack.c.l.b16 %v214
  %v979 = vunpack.c.h.b16 %v214
  %v980 = vunpack.c.l.b16 %v215
  %v981 = vunpack.c.h.b16 %v215
  %v982 = vunpack.c.l.b16 %v216
  %v983 = vunpack.c.h.b16 %v216
  %v984 = vunpack.c.l.b16 %v217
  %v985 = vunpack.c.h.b16 %v217
  %v986 = vunpack.c.l.b16 %v218
  %v987 = vunpack.c.h.b16 %v218
  %v988 = vunpack.c.l.b16 %v219
  %v989 = vunpack.c.h.b16 %v219
  %v990 = vunpack.c.l.b16 %v220
  %v991 = vunpack.c.h.b16 %v220
  %v992 = vunpack.c.l.b16 %v221
  %v993 = vunpack.c.h.b16 %v221
  %v994 = vunpack.c.l.b16 %v222
  %v995 = vunpack.c.h.b16 %v222
  %v996 = vunpack.c.l.b16 %v223
  %v997 = vunpack.c.h.b16 %v223
  %v998 = vunpack.c.l.b16 %v224
  %v999 = vunpack.c.h.b16 %v224
  %v1000 = vunpack.c.l.b16 %v225
  %v1001 = vunpack.c.h.b16 %v225
  %v1002 = vunpack.c.l.b16 %v226
  %v1003 = vunpack.c.h.b16 %v226
  %v1004 = vunpack.c.l.b16 %v227
  %v1005 = vunpack.c.h.b16 %v227
  %v1006 = vunpack.c.l.b16 %v228
  %v1007 = vunpack.c.h.b16 %v228
  %v1008 = vunpack.c.l.b16 %v229
  %v1009 = vunpack.c.h.b16 %v229
  %v1010 = vunpack.c.l.b16 %v230
  %v1011 = vunpack.c.h.b16 %v230
  %v1012 = vunpack.c.l.b16 %v231
  %v1013 = vunpack.c.h.b16 %v231
  %v1014 = vunpack.c.l.b16 %v232
  %v1015 = vunpack.c.h.b16 %v232
  %v1016 = vunpack.c.l.b16 %v233
  %v1017 = vunpack.c.h.b16 %v233
  %v1018 = vunpack.c.l.b16 %v234
  %v1019 = vunpack.c.h.b16 %v234
  %v1020 = vunpack.c.l.b16 %v235
  %v1021 = vunpack.c.h.b16 %v235
  %v1022 = vunpack.c.l.b16 %v236
  %v1023 = vunpack.c.h.b16 %v236
  %v1024 = vunpack.c.l.b16 %v237
  %v1025 = vunpack.c.h.b16 %v237
  %v1026 = vunpack.c.l.b16 %v238
  %v1027 = vunpack.c.h.b16 %v238
  %v1028 = vunpack.c.l.b16 %v239
  %v1029 = vunpack.c.h.b16 %v239
  %v1030 = vunpack.c.l.b16 %v240
  %v1031 = vunpack.c.h.b16 %v240
  %v1032 = vunpack.c.l.b16 %v241
  %v1033 = vunpack.c.h.b16 %v241
  %v1034 = vunpack.c.l.b16 %v242
  %v1035 = vunpack.c.h.b16 %v242
  %v1036 = vunpack.c.l.b16 %v243
  %v1037 = vunpack.c.h.b16 %v243
  %v1038 = vunpack.c.l.b16 %v244
  %v1039 = vunpack.c.h.b16 %v244
  %v1040 = vunpack.c.l.b16 %v245
  %v1041 = vunpack.c.h.b16 %v245
  %v1042 = vunpack.c.l.b16 %v246
  %v1043 = vunpack.c.h.b16 %v246
  %v1044 = vunpack.c.l.b16 %v247
  %v1045 = vunpack.c.h.b16 %v247
  %v1046 = vunpack.c.l.b16 %v248
  %v1047 = vunpack.c.h.b16 %v248
  %v1048 = vunpack.c.l.b16 %v249
  %v1049 = vunpack.c.h.b16 %v249
  %v1050 = vunpack.c.l.b16 %v250
  %v1051 = vunpack.c.h.b16 %v250
  %v1052 = vunpack.c.l.b16 %v251
  %v1053 = vunpack.c.h.b16 %v251
  %v1054 = vunpack.c.l.b16 %v252
  %v1055 = vunpack.c.h.b16 %v252
  %v1056 = vunpack.c.l.b16 %v253
  %v1057 = vunpack.c.h.b16 %v253
  %v1058 = vunpack.c.l.b16 %v254
  %v1059 = vunpack.c.h.b16 %v254
  %v1060 = vunpack.c.l.b16 %v255
  %v1061 = vunpack.c.h.b16 %v255
  %v1062 = vunpack.c.l.b16 %v256
  %v1063 = vunpack.c.h.b16 %v256
  %v1064 = vunpack.c.l.b16 %v257
  %v1065 = vunpack.c.h.b16 %v257
  %v1066 = vunpack.c.l.b16 %v258
  %v1067 = vunpack.c.h.b16 %v258
  %v1068 = vunpack.c.l.b16 %v259
  %v1069 = vunpack.c.h.b16 %v259
  %v1070 = vunpack.c.l.b16 %v260
  %v1071 = vunpack.c.h.b16 %v260
  %v1072 = vunpack.c.l.b16 %v261
  %v1073 = vunpack.c.h.b16 %v261
  %v1074 = vunpack.c.l.b16 %v262
  %v1075 = vunpack.c.h.b16 %v262
  %v1076 = vunpack.c.l.b16 %v263
  %v1077 = vunpack.c.h.b16 %v263
  %v1078 = vunpack.c.l.b16 %v264
  %v1079 = vunpack.c.h.b16 %v264
  %v1080 = vunpack.c.l.b16 %v265
  %v1081 = vunpack.c.h.b16 %v265
  %v1082 = vunpack.c.l.b16 %v266
  %v1083 = vunpack.c.h.b16 %v266
  %v1084 = vunpack.c.l.b16 %v267
  %v1085 = vunpack.c.h.b16 %v267
  %v1086 = vunpack.c.l.b16 %v268
  %v1087 = vunpack.c.h.b16 %v268
  %v1088 = vunpack.c.l.b16 %v269
  %v1089 = vunpack.c.h.b16 %v269
  %v1090 = vunpack.c.l.b16 %v270
  %v1091 = vunpack.c.h.b16 %v270
  %v1092 = vunpack.c.l.b16 %v271
  %v1093 = vunpack.c.h.b16 %v271
  %v1094 = vunpack.c.l.b16 %v272
  %v1095 = vunpack.c.h.b16 %v272
  %v1096 = vunpack.c.l.b16 %v273
  %v1097 = vunpack.c.h.b16 %v273
  %v1098 = vunpack.c.l.b16 %v274
  %v1099 = vunpack.c.h.b16 %v274
  %v1100 = vunpack.c.l.b16 %v275
  %v1101 = vunpack.c.h.b16 %v275
  %v1102 = vunpack.c.l.b16 %v276
  %v1103 = vunpack.c.h.b16 %v276
  %v1104 = vunpack.c.l.b16 %v277
  %v1105 = vunpack.c.h.b16 %v277
  %v1106 = vunpack.c.l.b16 %v278
  %v1107 = vunpack.c.h.b16 %v278
  %v1108 = vunpack.c.l.b16 %v279
  %v1109 = vunpack.c.h.b16 %v279
  %v1110 = vunpack.c.l.b16 %v280
  %v1111 = vunpack.c.h.b16 %v280
  %v1112 = vunpack.c.l.b16 %v281
  %v1113 = vunpack.c.h.b16 %v281
  %v1114 = vunpack.c.l.b16 %v282
  %v1115 = vunpack.c.h.b16 %v282
  %v1116 = vunpack.c.l.b16 %v283
  %v1117 = vunpack.c.h.b16 %v283
  %v1118 = vunpack.c.l.b16 %v284
  %v1119 = vunpack.c.h.b16 %v284
  %v1120 = vunpack.c.l.b16 %v285
  %v1121 = vunpack.c.h.b16 %v285
  %v1122 = vunpack.c.l.b16 %v286
  %v1123 = vunpack.c.h.b16 %v286
  %v1124 = vunpack.c.l.b16 %v287
  %v1125 = vunpack.c.h.b16 %v287
  %v1126 = vunpack.c.l.b16 %v288
  %v1127 = vunpack.c.h.b16 %v288
  %v1128 = vunpack.c.l.b16 %v289
  %v1129 = vunpack.c.h.b16 %v289
  %v1130 = vunpack.c.l.b16 %v290
  %v1131 = vunpack.c.h.b16 %v290
  %v1132 = vunpack.c.l.b16 %v291
  %v1133 = vunpack.c.h.b16 %v291
  %v1134 = vunpack.c.l.b16 %v292
  %v1135 = vunpack.c.h.b16 %v292
  %v1136 = vunpack.c.l.b16 %v293
  %v1137 = vunpack.c.h.b16 %v293
  %v1138 = vunpack.c.l.b16 %v294
  %v1139 = vunpack.c.h.b16 %v294
  %v1140 = vunpack.c.l.b16 %v295
  %v1141 = vunpack.c.h.b16 %v295
  %v1142 = vunpack.c.l.b16 %v296
  %v1143 = vunpack.c.h.b16 %v296
  %v1144 = vunpack.c.l.b16 %v297
  %v1145 = vunpack.c.h.b16 %v297
  %v1146 = vpack.c.b16 %v636, %v634
  %v1147 = vpack.c.b16 %v637, %v635
  %v1148 = vpack.c.b16 %v640, %v638
  %v1149 = vpack.c.b16 %v641, %v639
  %v1150 = vpack.c.b16 %v644, %v642
  %v1151 = vpack.c.b16 %v645, %v643
  %v1152 = vpack.c.b16 %v648, %v646
  %v1153 = vpack.c.b16 %v649, %v647
  %v1154 = vpack.c.b16 %v652, %v650
  %v1155 = vpack.c.b16 %v653, %v651
  %v1156 = vpack.c.b16 %v656, %v654
  %v1157 = vpack.c.b16 %v657, %v655
  %v1158 = vpack.c.b16 %v660, %v658
  %v1159 = vpack.c.b16 %v661, %v659
  %v1160 = vpack.c.b16 %v664, %v662
  %v1161 = vpack.c.b16 %v665, %v663
  %v1162 = vpack.c.b16 %v668, %v666
  %v1163 = vpack.c.b16 %v669, %v667
  %v1164 = vpack.c.b16 %v672, %v670
  %v1165 = vpack.c.b16 %v673, %v671
  %v1166 = vpack.c.b16 %v676, %v674
  %v1167 = vpack.c.b16 %v677, %v675
  %v1168 = vpack.c.b16 %v680, %v678
  %v1169 = vpack.c.b16 %v681, %v679
  %v1170 = vpack.c.b16 %v684, %v682
  %v1171 = vpack.c.b16 %v685, %v683
  %v1172 = vpack.c.b16 %v688, %v686
  %v1173 = vpack.c.b16 %v689, %v687
  %v1174 = vpack.c.b16 %v692, %v690
  %v1175 = vpack.c.b16 %v693, %v691
  %v1176 = vpack.c.b16 %v696, %v694
  %v1177 = vpack.c.b16 %v697, %v695
  %v1178 = vpack.c.b16 %v700, %v698
  %v1179 = vpack.c.b16 %v701, %v699
  %v1180 = vpack.c.b16 %v704, %v702
  %v1181 = vpack.c.b16 %v705, %v703
  %v1182 = vpack.c.b16 %v708, %v706
  %v1183 = vpack.c.b16 %v709, %v707
  %v1184 = vpack.c.b16 %v712, %v710
  %v1185 = vpack.c.b16 %v713, %v711
  %v1186 = vpack.c.b16 %v716, %v714
  %v1187 = vpack.c.b16 %v717, %v715
  %v1188 = vpack.c.b16 %v720, %v718
  %v1189 = vpack.c.b16 %v721, %v719
  %v1190 = vpack.c.b16 %v724, %v722
  %v1191 = vpack.c.b16 %v725, %v723
  %v1192 = vpack.c.b16 %v728, %v726
  %v1193 = vpack.c.b16 %v729, %v727
  %v1194 = vpack.c.b16 %v732, %v730
  %v1195 = vpack.c.b16 %v733, %v731
  %v1196 = vpack.c.b16 %v736, %v734
  %v1197 = vpack.c.b16 %v737, %v735
  %v1198 = vpack.c.b16 %v740, %v738
  %v1199 = vpack.c.b16 %v741, %v739
  %v1200 = vpack.c.b16 %v744, %v742
  %v1201 = vpack.c.b16 %v745, %v743
  %v1202 = vpack.c.b16 %v748, %v746
  %v1203 = vpack.c.b16 %v749, %v747
  %v1204 = vpack.c.b16 %v752, %v750
  %v1205 = vpack.c.b16 %v753, %v751
  %v1206 = vpack.c.b16 %v756, %v754
  %v1207 = vpack.c.b16 %v757, %v755
  %v1208 = vpack.c.b16 %v760, %v758
  %v1209 = vpack.c.b16 %v761, %v759
  %v1210 = vpack.c.b16 %v764, %v762
  %v1211 = vpack.c.b16 %v765, %v763
  %v1212 = vpack.c.b16 %v768, %v766
  %v1213 = vpack.c.b16 %v769, %v767
  %v1214 = vpack.c.b16 %v772, %v770
  %v1215 = vpack.c.b16 %v773, %v771
  %v1216 = vpack.c.b16 %v776, %v774
  %v1217 = vpack.c.b16 %v777, %v775
  %v1218 = vpack.c.b16 %v780, %v778
  %v1219 = vpack.c.b16 %v781, %v779
  %v1220 = vpack.c.b16 %v784, %v782
  %v1221 = vpack.c.b16 %v785, %v783
  %v1222 = vpack.c.b16 %v788, %v786
  %v1223 = vpack.c.b16 %v789, %v787
  %v1224 = vpack.c.b16 %v792, %v790
  %v1225 = vpack.c.b16 %v793, %v791
  %v1226 = vpack.c.b16 %v796, %v794
  %v1227 = vpack.c.b16 %v797, %v795
  %v1228 = vpack.c.b16 %v800, %v798
  %v1229 = vpack.c.b16 %v801, %v799
  %v1230 = vpack.c.b16 %v804, %v802
  %v1231 = vpack.c.b16 %v805, %v803
  %v1232 = vpack.c.b16 %v808, %v806
  %v1233 = vpack.c.b16 %v809, %v807
  %v1234 = vpack.c.b16 %v812, %v810
  %v1235 = vpack.c.b16 %v813, %v811
  %v1236 = vpack.c.b16 %v816, %v814
  %v1237 = vpack.c.b16 %v817, %v815
  %v1238 = vpack.c.b16 %v820, %v818
  %v1239 = vpack.c.b16 %v821, %v819
  %v1240 = vpack.c.b16 %v824, %v822
  %v1241 = vpack.c.b16 %v825, %v823
  %v1242 = vpack.c.b16 %v828, %v826
  %v1243 = vpack.c.b16 %v829, %v827
  %v1244 = vpack.c.b16 %v832, %v830
  %v1245 = vpack.c.b16 %v833, %v831
  %v1246 = vpack.c.b16 %v836, %v834
  %v1247 = vpack.c.b16 %v837, %v835
  %v1248 = vpack.c.b16 %v840, %v838
  %v1249 = vpack.c.b16 %v841, %v839
  %v1250 = vpack.c.b16 %v844, %v842
  %v1251 = vpack.c.b16 %v845, %v843
  %v1252 = vpack.c.b16 %v848, %v846
  %v1253 = vpack.c.b16 %v849, %v847
  %v1254 = vpack.c.b16 %v852, %v850
  %v1255 = vpack.c.b16 %v853, %v851
  %v1256 = vpack.c.b16 %v856, %v854
  %v1257 = vpack.c.b16 %v857, %v855
  %v1258 = vpack.c.b16 %v860, %v858
  %v1259 = vpack.c.b16 %v861, %v859
  %v1260 = vpack.c.b16 %v864, %v862
  %v1261 = vpack.c.b16 %v865, %v863
  %v1262 = vpack.c.b16 %v868, %v866
  %v1263 = vpack.c.b16 %v869, %v867
  %v1264 = vpack.c.b16 %v872, %v870
  %v1265 = vpack.c.b16 %v873, %v871
  %v1266 = vpack.c.b16 %v876, %v874
  %v1267 = vpack.c.b16 %v877, %v875
  %v1268 = vpack.c.b16 %v880, %v878
  %v1269 = vpack.c.b16 %v881, %v879
  %v1270 = vpack.c.b16 %v884, %v882
  %v1271 = vpack.c.b16 %v885, %v883
  %v1272 = vpack.c.b16 %v888, %v886
  %v1273 = vpack.c.b16 %v889, %v887
  %v1274 = vpack.c.b16 %v892, %v890
  %v1275 = vpack.c.b16 %v893, %v891
  %v1276 = vpack.c.b16 %v896, %v894
  %v1277 = vpack.c.b16 %v897, %v895
  %v1278 = vpack.c.b16 %v900, %v898
  %v1279 = vpack.c.b16 %v901, %v899
  %v1280 = vpack.c.b16 %v904, %v902
  %v1281 = vpack.c.b16 %v905, %v903
  %v1282 = vpack.c.b16 %v908, %v906
  %v1283 = vpack.c.b16 %v909, %v907
  %v1284 = vpack.c.b16 %v912, %v910
  %v1285 = vpack.c.b16 %v913, %v911
  %v1286 = vpack.c.b16 %v916, %v914
  %v1287 = vpack.c.b16 %v917, %v915
  %v1288 = vpack.c.b16 %v920, %v918
  %v1289 = vpack.c.b16 %v921, %v919
  %v1290 = vpack.c.b16 %v924, %v922
  %v1291 = vpack.c.b16 %v925, %v923
  %v1292 = vpack.c.b16 %v928, %v926
  %v1293 = vpack.c.b16 %v929, %v927
  %v1294 = vpack.c.b16 %v932, %v930
  %v1295 = vpack.c.b16 %v933, %v931
  %v1296 = vpack.c.b16 %v936, %v934
  %v1297 = vpack.c.b16 %v937, %v935
  %v1298 = vpack.c.b16 %v940, %v938
  %v1299 = vpack.c.b16 %v941, %v939
  %v1300 = vpack.c.b16 %v944, %v942
  %v1301 = vpack.c.b16 %v945, %v943
  %v1302 = vpack.c.b16 %v948, %v946
  %v1303 = vpack.c.b16 %v949, %v947
  %v1304 = vpack.c.b16 %v952, %v950
  %v1305 = vpack.c.b16 %v953, %v951
  %v1306 = vpack.c.b16 %v956, %v954
  %v1307 = vpack.c.b16 %v957, %v955
  %v1308 = vpack.c.b16 %v960, %v958
  %v1309 = vpack.c.b16 %v961, %v959
  %v1310 = vpack.c.b16 %v964, %v962
  %v1311 = vpack.c.b16 %v965, %v963
  %v1312 = vpack.c.b16 %v968, %v966
  %v1313 = vpack.c.b16 %v969, %v967
  %v1314 = vpack.c.b16 %v972, %v970
  %v1315 = vpack.c.b16 %v973, %v971
  %v1316 = vpack.c.b16 %v976, %v974
  %v1317 = vpack.c.b16 %v977, %v975
  %v1318 = vpack.c.b16 %v980, %v978
  %v1319 = vpack.c.b16 %v981, %v979
  %v1320 = vpack.c.b16 %v984, %v982
  %v1321 = vpack.c.b16 %v985, %v983
  %v1322 = vpack.c.b16 %v988, %v986
  %v1323 = vpack.c.b16 %v989, %v987
  %v1324 = vpack.c.b16 %v992, %v990
  %v1325 = vpack.c.b16 %v993, %v991
  %v1326 = vpack.c.b16 %v996, %v994
  %v1327 = vpack.c.b16 %v997, %v995
  %v1328 = vpack.c.b16 %v1000, %v998
  %v1329 = vpack.c.b16 %v1001, %v999
  %v1330 = vpack.c.b16 %v1004, %v1002
  %v1331 = vpack.c.b16 %v1005, %v1003
  %v1332 = vpack.c.b16 %v1008, %v1006
  %v1333 = vpack.c.b16 %v1009, %v1007
  %v1334 = vpack.c.b16 %v1012, %v1010
  %v1335 = vpack.c.b16 %v1013, %v1011
  %v1336 = vpack.c.b16 %v1016, %v1014
  %v1337 = vpack.c.b16 %v1017, %v1015
  %v1338 = vpack.c.b16 %v1020, %v1018
  %v1339 = vpack.c.b16 %v1021, %v1019
  %v1340 = vpack.c.b16 %v1024, %v1022
  %v1341 = vpack.c.b16 %v1025, %v1023
  %v1342 = vpack.c.b16 %v1028, %v1026
  %v1343 = vpack.c.b16 %v1029, %v1027
  %v1344 = vpack.c.b16 %v1032, %v1030
  %v1345 = vpack.c.b16 %v1033, %v1031
  %v1346 = vpack.c.b16 %v1036, %v1034
  %v1347 = vpack.c.b16 %v1037, %v1035
  %v1348 = vpack.c.b16 %v1040, %v1038
  %v1349 = vpack.c.b16 %v1041, %v1039
  %v1350 = vpack.c.b16 %v1044, %v1042
  %v1351 = vpack.c.b16 %v1045, %v1043
  %v1352 = vpack.c.b16 %v1048, %v1046
  %v1353 = vpack.c.b16 %v1049, %v1047
  %v1354 = vpack.c.b16 %v1052, %v1050
  %v1355 = vpack.c.b16 %v1053, %v1051
  %v1356 = vpack.c.b16 %v1056, %v1054
  %v1357 = vpack.c.b16 %v1057, %v1055
  %v1358 = vpack.c.b16 %v1060, %v1058
  %v1359 = vpack.c.b16 %v1061, %v1059
  %v1360 = vpack.c.b16 %v1064, %v1062
  %v1361 = vpack.c.b16 %v1065, %v1063
  %v1362 = vpack.c.b16 %v1068, %v1066
  %v1363 = vpack.c.b16 %v1069, %v1067
  %v1364 = vpack.c.b16 %v1072, %v1070
  %v1365 = vpack.c.b16 %v1073, %v1071
  %v1366 = vpack.c.b16 %v1076, %v1074
  %v1367 = vpack.c.b16 %v1077, %v1075
  %v1368 = vpack.c.b16 %v1080, %v1078
  %v1369 = vpack.c.b16 %v1081, %v1079
  %v1370 = vpack.c.b16 %v1084, %v1082
  %v1371 = vpack.c.b16 %v1085, %v1083
  %v1372 = vpack.c.b16 %v1088, %v1086
  %v1373 = vpack.c.b16 %v1089, %v1087
  %v1374 = vpack.c.b16 %v1092, %v1090
  %v1375 = vpack.c.b16 %v1093, %v1091
  %v1376 = vpack.c.b16 %v1096, %v1094
  %v1377 = vpack.c.b16 %v1097, %v1095
  %v1378 = vpack.c.b16 %v1100, %v1098
  %v1379 = vpack.c.b16 %v1101, %v1099
  %v1380 = vpack.c.b16 %v1104, %v1102
  %v1381 = vpack.c.b16 %v1105, %v1103
  %v1382 = vpack.c.b16 %v1108, %v1106
  %v1383 = vpack.c.b16 %v1109, %v1107
  %v1384 = vpack.c.b16 %v1112, %v1110
  %v1385 = vpack.c.b16 %v1113, %v1111
  %v1386 = vpack.c.b16 %v1116, %v1114
  %v1387 = vpack.c.b16 %v1117, %v1115
  %v1388 = vpack.c.b16 %v1120, %v1118
  %v1389 = vpack.c.b16 %v1121, %v1119
  %v1390 = vpack.c.b16 %v1124, %v1122
  %v1391 = vpack.c.b16 %v1125, %v1123
  %v1392 = vpack.c.b16 %v1128, %v1126
  %v1393 = vpack.c.b16 %v1129, %v1127
  %v1394 = vpack.c.b16 %v1132, %v1130
  %v1395 = vpack.c.b16 %v1133, %v1131
  %v1396 = vpack.c.b16 %v1136, %v1134
  %v1397 = vpack.c.b16 %v1137, %v1135
  %v1398 = vpack.c.b16 %v1140, %v1138
  %v1399 = vpack.c.b16 %v1141, %v1139
  %v1400 = vpack.c.b16 %v1144, %v1142
  %v1401 = vpack.c.b16 %v1145, %v1143
  %1658 = vmatprep.subr.bf16.mxu0 %v1147
  %1659 = vmatpush1.bf16.msra.mxu0 %v1146
  %1660 = vmatprep.subr.bf16.mxu0 %v1149
  %1661 = vmatpush1.bf16.msra.mxu0 %v1148
  %1662 = vmatprep.subr.bf16.mxu0 %v1151
  %1663 = vmatpush1.bf16.msra.mxu0 %v1150
  %1664 = vmatprep.subr.bf16.mxu0 %v1153
  %1665 = vmatpush1.bf16.msra.mxu0 %v1152
  %1666 = vmatprep.subr.bf16.mxu0 %v1155
  %1667 = vmatpush1.bf16.msra.mxu0 %v1154
  %1668 = vmatprep.subr.bf16.mxu0 %v1157
  %1669 = vmatpush1.bf16.msra.mxu0 %v1156
  %1670 = vmatprep.subr.bf16.mxu0 %v1159
  %1671 = vmatpush1.bf16.msra.mxu0 %v1158
  %1672 = vmatprep.subr.bf16.mxu0 %v1161
  %1673 = vmatpush1.bf16.msra.mxu0 %v1160
  %1674 = vmatprep.subr.bf16.mxu0 %v1163
  %1675 = vmatpush1.bf16.msra.mxu0 %v1162
  %1676 = vmatprep.subr.bf16.mxu0 %v1165
  %1677 = vmatpush1.bf16.msra.mxu0 %v1164
  %1678 = vmatprep.subr.bf16.mxu0 %v1167
  %1679 = vmatpush1.bf16.msra.mxu0 %v1166
  %1680 = vmatprep.subr.bf16.mxu0 %v1169
  %1681 = vmatpush1.bf16.msra.mxu0 %v1168
  %1682 = vmatprep.subr.bf16.mxu0 %v1171
  %1683 = vmatpush1.bf16.msra.mxu0 %v1170
  %1684 = vmatprep.subr.bf16.mxu0 %v1173
  %1685 = vmatpush1.bf16.msra.mxu0 %v1172
  %1686 = vmatprep.subr.bf16.mxu0 %v1175
  %1687 = vmatpush1.bf16.msra.mxu0 %v1174
  %1688 = vmatprep.subr.bf16.mxu0 %v1177
  %1689 = vmatpush1.bf16.msra.mxu0 %v1176
  %1690 = vmatprep.mubr.bf16.mxu0 %v347
  %1691 = vmatmul.mubr.bf16.gmra.mrb[0].mxu0 %v346
  %v1692 = vpop.f32.mrb[0].mxu0
  %v1693 = vadd.f32 0.0, %v1692
  %v1694 = vpop.f32.mrb[0].mxu0
  %v1695 = vadd.f32 0.0, %v1694
  %v1696 = vpop.f32.mrb[0].mxu0
  %v1697 = vadd.f32 0.0, %v1696
  %v1698 = vpop.f32.mrb[0].mxu0
  %v1699 = vadd.f32 0.0, %v1698
  %1700 = vdwg.mxu0
  %1701 = vmatprep.subr.bf16.mxu0 %v1179
  %1702 = vmatpush1.bf16.msra.mxu0 %v1178
  %1703 = vmatprep.subr.bf16.mxu0 %v1181
  %1704 = vmatpush1.bf16.msra.mxu0 %v1180
  %1705 = vmatprep.subr.bf16.mxu0 %v1183
  %1706 = vmatpush1.bf16.msra.mxu0 %v1182
  %1707 = vmatprep.subr.bf16.mxu0 %v1185
  %1708 = vmatpush1.bf16.msra.mxu0 %v1184
  %1709 = vmatprep.subr.bf16.mxu0 %v1187
  %1710 = vmatpush1.bf16.msra.mxu0 %v1186
  %1711 = vmatprep.subr.bf16.mxu0 %v1189
  %1712 = vmatpush1.bf16.msra.mxu0 %v1188
  %1713 = vmatprep.subr.bf16.mxu0 %v1191
  %1714 = vmatpush1.bf16.msra.mxu0 %v1190
  %1715 = vmatprep.subr.bf16.mxu0 %v1193
  %1716 = vmatpush1.bf16.msra.mxu0 %v1192
  %1717 = vmatprep.subr.bf16.mxu0 %v1195
  %1718 = vmatpush1.bf16.msra.mxu0 %v1194
  %1719 = vmatprep.subr.bf16.mxu0 %v1197
  %1720 = vmatpush1.bf16.msra.mxu0 %v1196
  %1721 = vmatprep.subr.bf16.mxu0 %v1199
  %1722 = vmatpush1.bf16.msra.mxu0 %v1198
  %1723 = vmatprep.subr.bf16.mxu0 %v1201
  %1724 = vmatpush1.bf16.msra.mxu0 %v1200
  %1725 = vmatprep.subr.bf16.mxu0 %v1203
  %1726 = vmatpush1.bf16.msra.mxu0 %v1202
  %1727 = vmatprep.subr.bf16.mxu0 %v1205
  %1728 = vmatpush1.bf16.msra.mxu0 %v1204
  %1729 = vmatprep.subr.bf16.mxu0 %v1207
  %1730 = vmatpush1.bf16.msra.mxu0 %v1206
  %1731 = vmatprep.subr.bf16.mxu0 %v1209
  %1732 = vmatpush1.bf16.msra.mxu0 %v1208
  %1733 = vmatprep.mubr.bf16.mxu0 %v349
  %1734 = vmatmul.mubr.bf16.gmra.mrb[0].mxu0 %v348
  %v1735 = vpop.f32.mrb[0].mxu0
  %v1736 = vadd.f32 %v1693, %v1735
  %v1737 = vpop.f32.mrb[0].mxu0
  %v1738 = vadd.f32 %v1695, %v1737
  %v1739 = vpop.f32.mrb[0].mxu0
  %v1740 = vadd.f32 %v1697, %v1739
  %v1741 = vpop.f32.mrb[0].mxu0
  %v1742 = vadd.f32 %v1699, %v1741
  %1743 = vdwg.mxu0
  %1744 = vmatprep.subr.bf16.mxu0 %v1211
  %1745 = vmatpush1.bf16.msra.mxu0 %v1210
  %1746 = vmatprep.subr.bf16.mxu0 %v1213
  %1747 = vmatpush1.bf16.msra.mxu0 %v1212
  %1748 = vmatprep.subr.bf16.mxu0 %v1215
  %1749 = vmatpush1.bf16.msra.mxu0 %v1214
  %1750 = vmatprep.subr.bf16.mxu0 %v1217
  %1751 = vmatpush1.bf16.msra.mxu0 %v1216
  %1752 = vmatprep.subr.bf16.mxu0 %v1219
  %1753 = vmatpush1.bf16.msra.mxu0 %v1218
  %1754 = vmatprep.subr.bf16.mxu0 %v1221
  %1755 = vmatpush1.bf16.msra.mxu0 %v1220
  %1756 = vmatprep.subr.bf16.mxu0 %v1223
  %1757 = vmatpush1.bf16.msra.mxu0 %v1222
  %1758 = vmatprep.subr.bf16.mxu0 %v1225
  %1759 = vmatpush1.bf16.msra.mxu0 %v1224
  %1760 = vmatprep.subr.bf16.mxu0 %v1227
  %1761 = vmatpush1.bf16.msra.mxu0 %v1226
  %1762 = vmatprep.subr.bf16.mxu0 %v1229
  %1763 = vmatpush1.bf16.msra.mxu0 %v1228
  %1764 = vmatprep.subr.bf16.mxu0 %v1231
  %1765 = vmatpush1.bf16.msra.mxu0 %v1230
  %1766 = vmatprep.subr.bf16.mxu0 %v1233
  %1767 = vmatpush1.bf16.msra.mxu0 %v1232
  %1768 = vmatprep.subr.bf16.mxu0 %v1235
  %1769 = vmatpush1.bf16.msra.mxu0 %v1234
  %1770 = vmatprep.subr.bf16.mxu0 %v1237
  %1771 = vmatpush1.bf16.msra.mxu0 %v1236
  %1772 = vmatprep.subr.bf16.mxu0 %v1239
  %1773 = vmatpush1.bf16.msra.mxu0 %v1238
  %1774 = vmatprep.subr.bf16.mxu0 %v1241
  %1775 = vmatpush1.bf16.msra.mxu0 %v1240
  %1776 = vmatprep.mubr.bf16.mxu0 %v351
  %1777 = vmatmul.mubr.bf16.gmra.mrb[0].mxu0 %v350
  %v1778 = vpop.f32.mrb[0].mxu0
  %v1779 = vadd.f32 %v1736, %v1778
  %v1780 = vpop.f32.mrb[0].mxu0
  %v1781 = vadd.f32 %v1738, %v1780
  %v1782 = vpop.f32.mrb[0].mxu0
  %v1783 = vadd.f32 %v1740, %v1782
  %v1784 = vpop.f32.mrb[0].mxu0
  %v1785 = vadd.f32 %v1742, %v1784
  %1786 = vdwg.mxu0
  %1787 = vmatprep.subr.bf16.mxu0 %v1243
  %1788 = vmatpush1.bf16.msra.mxu0 %v1242
  %1789 = vmatprep.subr.bf16.mxu0 %v1245
  %1790 = vmatpush1.bf16.msra.mxu0 %v1244
  %1791 = vmatprep.subr.bf16.mxu0 %v1247
  %1792 = vmatpush1.bf16.msra.mxu0 %v1246
  %1793 = vmatprep.subr.bf16.mxu0 %v1249
  %1794 = vmatpush1.bf16.msra.mxu0 %v1248
  %1795 = vmatprep.subr.bf16.mxu0 %v1251
  %1796 = vmatpush1.bf16.msra.mxu0 %v1250
  %1797 = vmatprep.subr.bf16.mxu0 %v1253
  %1798 = vmatpush1.bf16.msra.mxu0 %v1252
  %1799 = vmatprep.subr.bf16.mxu0 %v1255
  %1800 = vmatpush1.bf16.msra.mxu0 %v1254
  %1801 = vmatprep.subr.bf16.mxu0 %v1257
  %1802 = vmatpush1.bf16.msra.mxu0 %v1256
  %1803 = vmatprep.subr.bf16.mxu0 %v1259
  %1804 = vmatpush1.bf16.msra.mxu0 %v1258
  %1805 = vmatprep.subr.bf16.mxu0 %v1261
  %1806 = vmatpush1.bf16.msra.mxu0 %v1260
  %1807 = vmatprep.subr.bf16.mxu0 %v1263
  %1808 = vmatpush1.bf16.msra.mxu0 %v1262
  %1809 = vmatprep.subr.bf16.mxu0 %v1265
  %1810 = vmatpush1.bf16.msra.mxu0 %v1264
  %1811 = vmatprep.subr.bf16.mxu0 %v1267
  %1812 = vmatpush1.bf16.msra.mxu0 %v1266
  %1813 = vmatprep.subr.bf16.mxu0 %v1269
  %1814 = vmatpush1.bf16.msra.mxu0 %v1268
  %1815 = vmatprep.subr.bf16.mxu0 %v1271
  %1816 = vmatpush1.bf16.msra.mxu0 %v1270
  %1817 = vmatprep.subr.bf16.mxu0 %v1273
  %1818 = vmatpush1.bf16.msra.mxu0 %v1272
  %1819 = vmatprep.mubr.bf16.mxu0 %v353
  %1820 = vmatmul.mubr.bf16.gmra.mrb[0].mxu0 %v352
  %v1821 = vpop.f32.mrb[0].mxu0
  %v1822 = vadd.f32 %v1779, %v1821
  %v1823 = vpop.f32.mrb[0].mxu0
  %v1824 = vadd.f32 %v1781, %v1823
  %v1825 = vpop.f32.mrb[0].mxu0
  %v1826 = vadd.f32 %v1783, %v1825
  %v1827 = vpop.f32.mrb[0].mxu0
  %v1828 = vadd.f32 %v1785, %v1827
  %1829 = vdwg.mxu0
  %1830 = vmatprep.subr.bf16.mxu0 %v1275
  %1831 = vmatpush1.bf16.msra.mxu0 %v1274
  %1832 = vmatprep.subr.bf16.mxu0 %v1277
  %1833 = vmatpush1.bf16.msra.mxu0 %v1276
  %1834 = vmatprep.subr.bf16.mxu0 %v1279
  %1835 = vmatpush1.bf16.msra.mxu0 %v1278
  %1836 = vmatprep.subr.bf16.mxu0 %v1281
  %1837 = vmatpush1.bf16.msra.mxu0 %v1280
  %1838 = vmatprep.subr.bf16.mxu0 %v1283
  %1839 = vmatpush1.bf16.msra.mxu0 %v1282
  %1840 = vmatprep.subr.bf16.mxu0 %v1285
  %1841 = vmatpush1.bf16.msra.mxu0 %v1284
  %1842 = vmatprep.subr.bf16.mxu0 %v1287
  %1843 = vmatpush1.bf16.msra.mxu0 %v1286
  %1844 = vmatprep.subr.bf16.mxu0 %v1289
  %1845 = vmatpush1.bf16.msra.mxu0 %v1288
  %1846 = vmatprep.subr.bf16.mxu0 %v1291
  %1847 = vmatpush1.bf16.msra.mxu0 %v1290
  %1848 = vmatprep.subr.bf16.mxu0 %v1293
  %1849 = vmatpush1.bf16.msra.mxu0 %v1292
  %1850 = vmatprep.subr.bf16.mxu0 %v1295
  %1851 = vmatpush1.bf16.msra.mxu0 %v1294
  %1852 = vmatprep.subr.bf16.mxu0 %v1297
  %1853 = vmatpush1.bf16.msra.mxu0 %v1296
  %1854 = vmatprep.subr.bf16.mxu0 %v1299
  %1855 = vmatpush1.bf16.msra.mxu0 %v1298
  %1856 = vmatprep.subr.bf16.mxu0 %v1301
  %1857 = vmatpush1.bf16.msra.mxu0 %v1300
  %1858 = vmatprep.subr.bf16.mxu0 %v1303
  %1859 = vmatpush1.bf16.msra.mxu0 %v1302
  %1860 = vmatprep.subr.bf16.mxu0 %v1305
  %1861 = vmatpush1.bf16.msra.mxu0 %v1304
  %1862 = vmatprep.mubr.bf16.mxu0 %v355
  %1863 = vmatmul.mubr.bf16.gmra.mrb[0].mxu0 %v354
  %v1864 = vpop.f32.mrb[0].mxu0
  %v1865 = vadd.f32 %v1822, %v1864
  %v1866 = vpop.f32.mrb[0].mxu0
  %v1867 = vadd.f32 %v1824, %v1866
  %v1868 = vpop.f32.mrb[0].mxu0
  %v1869 = vadd.f32 %v1826, %v1868
  %v1870 = vpop.f32.mrb[0].mxu0
  %v1871 = vadd.f32 %v1828, %v1870
  %1872 = vdwg.mxu0
  %1873 = vmatprep.subr.bf16.mxu0 %v1307
  %1874 = vmatpush1.bf16.msra.mxu0 %v1306
  %1875 = vmatprep.subr.bf16.mxu0 %v1309
  %1876 = vmatpush1.bf16.msra.mxu0 %v1308
  %1877 = vmatprep.subr.bf16.mxu0 %v1311
  %1878 = vmatpush1.bf16.msra.mxu0 %v1310
  %1879 = vmatprep.subr.bf16.mxu0 %v1313
  %1880 = vmatpush1.bf16.msra.mxu0 %v1312
  %1881 = vmatprep.subr.bf16.mxu0 %v1315
  %1882 = vmatpush1.bf16.msra.mxu0 %v1314
  %1883 = vmatprep.subr.bf16.mxu0 %v1317
  %1884 = vmatpush1.bf16.msra.mxu0 %v1316
  %1885 = vmatprep.subr.bf16.mxu0 %v1319
  %1886 = vmatpush1.bf16.msra.mxu0 %v1318
  %1887 = vmatprep.subr.bf16.mxu0 %v1321
  %1888 = vmatpush1.bf16.msra.mxu0 %v1320
  %1889 = vmatprep.subr.bf16.mxu0 %v1323
  %1890 = vmatpush1.bf16.msra.mxu0 %v1322
  %1891 = vmatprep.subr.bf16.mxu0 %v1325
  %1892 = vmatpush1.bf16.msra.mxu0 %v1324
  %1893 = vmatprep.subr.bf16.mxu0 %v1327
  %1894 = vmatpush1.bf16.msra.mxu0 %v1326
  %1895 = vmatprep.subr.bf16.mxu0 %v1329
  %1896 = vmatpush1.bf16.msra.mxu0 %v1328
  %1897 = vmatprep.subr.bf16.mxu0 %v1331
  %1898 = vmatpush1.bf16.msra.mxu0 %v1330
  %1899 = vmatprep.subr.bf16.mxu0 %v1333
  %1900 = vmatpush1.bf16.msra.mxu0 %v1332
  %1901 = vmatprep.subr.bf16.mxu0 %v1335
  %1902 = vmatpush1.bf16.msra.mxu0 %v1334
  %1903 = vmatprep.subr.bf16.mxu0 %v1337
  %1904 = vmatpush1.bf16.msra.mxu0 %v1336
  %1905 = vmatprep.mubr.bf16.mxu0 %v357
  %1906 = vmatmul.mubr.bf16.gmra.mrb[0].mxu0 %v356
  %v1907 = vpop.f32.mrb[0].mxu0
  %v1908 = vadd.f32 %v1865, %v1907
  %v1909 = vpop.f32.mrb[0].mxu0
  %v1910 = vadd.f32 %v1867, %v1909
  %v1911 = vpop.f32.mrb[0].mxu0
  %v1912 = vadd.f32 %v1869, %v1911
  %v1913 = vpop.f32.mrb[0].mxu0
  %v1914 = vadd.f32 %v1871, %v1913
  %1915 = vdwg.mxu0
  %1916 = vmatprep.subr.bf16.mxu0 %v1339
  %1917 = vmatpush1.bf16.msra.mxu0 %v1338
  %1918 = vmatprep.subr.bf16.mxu0 %v1341
  %1919 = vmatpush1.bf16.msra.mxu0 %v1340
  %1920 = vmatprep.subr.bf16.mxu0 %v1343
  %1921 = vmatpush1.bf16.msra.mxu0 %v1342
  %1922 = vmatprep.subr.bf16.mxu0 %v1345
  %1923 = vmatpush1.bf16.msra.mxu0 %v1344
  %1924 = vmatprep.subr.bf16.mxu0 %v1347
  %1925 = vmatpush1.bf16.msra.mxu0 %v1346
  %1926 = vmatprep.subr.bf16.mxu0 %v1349
  %1927 = vmatpush1.bf16.msra.mxu0 %v1348
  %1928 = vmatprep.subr.bf16.mxu0 %v1351
  %1929 = vmatpush1.bf16.msra.mxu0 %v1350
  %1930 = vmatprep.subr.bf16.mxu0 %v1353
  %1931 = vmatpush1.bf16.msra.mxu0 %v1352
  %1932 = vmatprep.subr.bf16.mxu0 %v1355
  %1933 = vmatpush1.bf16.msra.mxu0 %v1354
  %1934 = vmatprep.subr.bf16.mxu0 %v1357
  %1935 = vmatpush1.bf16.msra.mxu0 %v1356
  %1936 = vmatprep.subr.bf16.mxu0 %v1359
  %1937 = vmatpush1.bf16.msra.mxu0 %v1358
  %1938 = vmatprep.subr.bf16.mxu0 %v1361
  %1939 = vmatpush1.bf16.msra.mxu0 %v1360
  %1940 = vmatprep.subr.bf16.mxu0 %v1363
  %1941 = vmatpush1.bf16.msra.mxu0 %v1362
  %1942 = vmatprep.subr.bf16.mxu0 %v1365
  %1943 = vmatpush1.bf16.msra.mxu0 %v1364
  %1944 = vmatprep.subr.bf16.mxu0 %v1367
  %1945 = vmatpush1.bf16.msra.mxu0 %v1366
  %1946 = vmatprep.subr.bf16.mxu0 %v1369
  %1947 = vmatpush1.bf16.msra.mxu0 %v1368
  %1948 = vmatprep.mubr.bf16.mxu0 %v359
  %1949 = vmatmul.mubr.bf16.gmra.mrb[0].mxu0 %v358
  %v1950 = vpop.f32.mrb[0].mxu0
  %v1951 = vadd.f32 %v1908, %v1950
  %v1952 = vpop.f32.mrb[0].mxu0
  %v1953 = vadd.f32 %v1910, %v1952
  %v1954 = vpop.f32.mrb[0].mxu0
  %v1955 = vadd.f32 %v1912, %v1954
  %v1956 = vpop.f32.mrb[0].mxu0
  %v1957 = vadd.f32 %v1914, %v1956
  %1958 = vdwg.mxu0
  %1959 = vmatprep.subr.bf16.mxu0 %v1371
  %1960 = vmatpush1.bf16.msra.mxu0 %v1370
  %1961 = vmatprep.subr.bf16.mxu0 %v1373
  %1962 = vmatpush1.bf16.msra.mxu0 %v1372
  %1963 = vmatprep.subr.bf16.mxu0 %v1375
  %1964 = vmatpush1.bf16.msra.mxu0 %v1374
  %1965 = vmatprep.subr.bf16.mxu0 %v1377
  %1966 = vmatpush1.bf16.msra.mxu0 %v1376
  %1967 = vmatprep.subr.bf16.mxu0 %v1379
  %1968 = vmatpush1.bf16.msra.mxu0 %v1378
  %1969 = vmatprep.subr.bf16.mxu0 %v1381
  %1970 = vmatpush1.bf16.msra.mxu0 %v1380
  %1971 = vmatprep.subr.bf16.mxu0 %v1383
  %1972 = vmatpush1.bf16.msra.mxu0 %v1382
  %1973 = vmatprep.subr.bf16.mxu0 %v1385
  %1974 = vmatpush1.bf16.msra.mxu0 %v1384
  %1975 = vmatprep.subr.bf16.mxu0 %v1387
  %1976 = vmatpush1.bf16.msra.mxu0 %v1386
  %1977 = vmatprep.subr.bf16.mxu0 %v1389
  %1978 = vmatpush1.bf16.msra.mxu0 %v1388
  %1979 = vmatprep.subr.bf16.mxu0 %v1391
  %1980 = vmatpush1.bf16.msra.mxu0 %v1390
  %1981 = vmatprep.subr.bf16.mxu0 %v1393
  %1982 = vmatpush1.bf16.msra.mxu0 %v1392
  %1983 = vmatprep.subr.bf16.mxu0 %v1395
  %1984 = vmatpush1.bf16.msra.mxu0 %v1394
  %1985 = vmatprep.subr.bf16.mxu0 %v1397
  %1986 = vmatpush1.bf16.msra.mxu0 %v1396
  %1987 = vmatprep.subr.bf16.mxu0 %v1399
  %1988 = vmatpush1.bf16.msra.mxu0 %v1398
  %1989 = vmatprep.subr.bf16.mxu0 %v1401
  %1990 = vmatpush1.bf16.msra.mxu0 %v1400
  %1991 = vmatprep.mubr.bf16.mxu0 %v361
  %1992 = vmatmul.mubr.bf16.gmra.mrb[0].mxu0 %v360
  %v1993 = vpop.f32.mrb[0].mxu0
  %v1994 = vadd.f32 %v1951, %v1993
  %v1995 = vpop.f32.mrb[0].mxu0
  %v1996 = vadd.f32 %v1953, %v1995
  %v1997 = vpop.f32.mrb[0].mxu0
  %v1998 = vadd.f32 %v1955, %v1997
  %v1999 = vpop.f32.mrb[0].mxu0
  %v2000 = vadd.f32 %v1957, %v1999
  %2001 = vdwg.mxu0
  %v2002 = vadd.f32 %v22, %v1994
  %v2003 = vadd.f32 %v23, %v1996
  %v2004 = vadd.f32 %v24, %v1998
  %v2005 = vadd.f32 %v25, %v2000
  %2006 = vst [vmem:[#allocation2] sm:$0xff] %v2002
  %2007 = vst [vmem:[#allocation2 + $0x8] sm:$0xff] %v2003
  %2008 = vst [vmem:[#allocation2 + $0x10] sm:$0xff] %v2004
  %2009 = vst [vmem:[#allocation2 + $0x18] sm:$0xff] %v2005
  // Predicated region
  $region18: #{forward.7} parent=0 // pred_check
    %p2010 = pneg %p14
  $region19: #{forward.7} parent=0 // pred_check_branch
    %2012 = sbr.rel (%p2010) target = $region21
  $region20: #{forward.7} parent=0 // pred_region
    %v2013 = vld [vmem:[#allocation2] sm:$0xff]
    %v2014 = vld [vmem:[#allocation2 + $0x8] sm:$0xff]
    %v2015 = vld [vmem:[#allocation2 + $0x10] sm:$0xff]
    %v2016 = vld [vmem:[#allocation2 + $0x18] sm:$0xff]
    %v2017 = vld [vmem:[%s2] sm:$0x3]
    %v2019 = vlaneseq
    %v2020 = vshrl.u32 %v2019, 7
    %v2021 = vsub.s32 0, %v2020
    %v2022 = vrot.slane %v2017, %v2021
    %v2023 = vlaneseq
    %v2024 = vshrl.u32 %v2023, 7
    %v2025 = vsub.s32 1, %v2024
    %v2026 = vrot.slane %v2017, %v2025
    %v2029 = vadd.f32 %v2013, %v2022
    %v2030 = vadd.f32 %v2014, %v2026
    %v2031 = vadd.f32 %v2015, %v2022
    %v2032 = vadd.f32 %v2016, %v2026
    %vm2033 = vcmp.ge.f32.partialorder %v2029, 0.0
    %vm2034 = vcmp.ge.f32.partialorder %v2030, 0.0
    %vm2035 = vcmp.ge.f32.partialorder %v2031, 0.0
    %vm2036 = vcmp.ge.f32.partialorder %v2032, 0.0
    %v2037 = vmul.f32 %v2029, 0.01
    %v2038 = vmul.f32 %v2030, 0.01
    %v2039 = vmul.f32 %v2031, 0.01
    %v2040 = vmul.f32 %v2032, 0.01
    %v2041 = vsel %vm2033, %v2029, %v2037
    %v2042 = vsel %vm2034, %v2030, %v2038
    %v2043 = vsel %vm2035, %v2031, %v2039
    %v2044 = vsel %vm2036, %v2032, %v2040
    %v2045 = vpack.c.bf16 %v2043, %v2041
    %v2046 = vpack.c.bf16 %v2044, %v2042
    %v2049 = vunpack.c.l.b16 %v2045
    %v2050 = vunpack.c.l.b16 %v2046
    %v2051 = vunpack.c.h.b16 %v2045
    %v2052 = vunpack.c.h.b16 %v2046
    %v2053 = vpack.c.b16 %v2050, %v2049
    %v2054 = vpack.c.b16 %v2052, %v2051
    %2057 = vst [vmem:[%s3] sm:$0xff] %v2053
    %2058 = vst [vmem:[%s3 + $0x8] sm:$0xff] %v2054
  $region21: #{forward.7} parent=0 // pred_fallthru
    _
  // Predicated region
  $region22: #{forward.7} parent=0 // pred_check
    _
  $region23: #{forward.7} parent=0 // pred_check_branch
    %2060 = sbr.rel (0) target = $region25
  $region24: #{forward.7} parent=0 // pred_region
    _
  $region25: #{forward.7} parent=0 // pred_fallthru
    _
  // Predicated region
  $region26: #{forward.7} parent=0 // pred_check
    _
  $region27: #{forward.7} parent=0 // pred_check_branch
    %2062 = sbr.rel (0) target = $region29
  $region28: #{forward.7} parent=0 // pred_region
    _
  $region29: #{forward.7} parent=0 // pred_fallthru
    _

// kernel: forward.8
$region0: #{forward.8}
  #allocation0 [shape = 'u32[]', space=smem, size = 0x4, offset = 0x4, fixed_abs, tag = 'smem constant byte address 0x4 - core index']
  #allocation1 [shape = 'u32[144,128]{1,0:T(1,128)}', space=vmem, size = 0x12000, scoped, tag = 'internal scratch']
  #allocation2 [shape = 'f32[16,1]{1,0:T(8,128)}', space=vmem, size = 0x2000, scoped, tag = 'scratch operand']
  #allocation3 [shape = 'f32[1,1]{1,0:T(1,128)S(1)}', space=vmem, size = 0x200, scoped, tag = 'scoped memory for forward.8']
  %s0 = inlined_call_operand.vmem [shape: bf16[16,2304], index: 0, kind: input, shape index: {}]
  %s1 = inlined_call_operand.vmem [shape: bf16[2304,1], index: 1, kind: input, shape index: {}]
  %s2 = inlined_call_operand.<no memory space> [shape: f32[1,1], index: 2, kind: input, shape index: {}]
  %s3 = inlined_call_operand.vmem [shape: f32[16,1], index: 3, kind: output, shape index: {}]
  %s4 = sld [smem:[#allocation0]]
  $region30: #{forward.8} parent=0
    _
  %s6 = ssub.s32 1, %s4
  %s7 = scalar_select 0, %s6, %s4
  %v8 = vstv %s2
  %9 = vst [vmem:[#allocation3] sm:$0x1] %v8
  // Predicated region
  $region2: #{forward.8} parent=0 // pred_check
    _
  $region3: #{forward.8} parent=0 // pred_check_branch
    %11 = sbr.rel (0) target = $region5
  $region4: #{forward.8} parent=0 // pred_region
    _
  $region5: #{forward.8} parent=0 // pred_fallthru
    _
  // Predicated region
  $region6: #{forward.8} parent=0 // pred_check
    _
  $region7: #{forward.8} parent=0 // pred_check_branch
    %13 = sbr.rel (0) target = $region9
  $region8: #{forward.8} parent=0 // pred_region
    _
  $region9: #{forward.8} parent=0 // pred_fallthru
    _
  // Predicated region
  $region10: #{forward.8} parent=0 // pred_check
    _
  $region11: #{forward.8} parent=0 // pred_check_branch
    %15 = sbr.rel (0) target = $region13
  $region12: #{forward.8} parent=0 // pred_region
    _
  $region13: #{forward.8} parent=0 // pred_fallthru
    _
  %p17 = scmp.eq.s32.totalorder 0, 0
  // Predicated region
  $region14: #{forward.8} parent=0 // pred_check
    %p18 = pneg %p17
  $region15: #{forward.8} parent=0 // pred_check_branch
    %20 = sbr.rel (%p18) target = $region17
  $region16: #{forward.8} parent=0 // pred_region
    %vm21 = vcmask 7168
    %22 = vst.msk [vmem:[#allocation2] sm:$0xff] %vm21, 0.0
    %23 = vst.msk [vmem:[#allocation2 + $0x8] sm:$0xff] %vm21, 0.0
  $region17: #{forward.8} parent=0 // pred_fallthru
    _
  %v24 = vld [vmem:[#allocation2] sm:$0xff]
  %v25 = vld [vmem:[#allocation2 + $0x8] sm:$0xff]
  %v26 = vld [vmem:[%s0] sm:$0xff]
  %v27 = vld [vmem:[%s0 + $0x8] sm:$0xff]
  %v28 = vld [vmem:[%s0 + $0x10] sm:$0xff]
  %v29 = vld [vmem:[%s0 + $0x18] sm:$0xff]
  %v30 = vld [vmem:[%s0 + $0x20] sm:$0xff]
  %v31 = vld [vmem:[%s0 + $0x28] sm:$0xff]
  %v32 = vld [vmem:[%s0 + $0x30] sm:$0xff]
  %v33 = vld [vmem:[%s0 + $0x38] sm:$0xff]
  %v34 = vld [vmem:[%s0 + $0x40] sm:$0xff]
  %v35 = vld [vmem:[%s0 + $0x48] sm:$0xff]
  %v36 = vld [vmem:[%s0 + $0x50] sm:$0xff]
  %v37 = vld [vmem:[%s0 + $0x58] sm:$0xff]
  %v38 = vld [vmem:[%s0 + $0x60] sm:$0xff]
  %v39 = vld [vmem:[%s0 + $0x68] sm:$0xff]
  %v40 = vld [vmem:[%s0 + $0x70] sm:$0xff]
  %v41 = vld [vmem:[%s0 + $0x78] sm:$0xff]
  %v42 = vld [vmem:[%s0 + $0x80] sm:$0xff]
  %v43 = vld [vmem:[%s0 + $0x88] sm:$0xff]
  %v44 = vld [vmem:[%s1] sm:$0xf]
  %v45 = vld [vmem:[%s1 + $0x4] sm:$0xf]
  %v46 = vld [vmem:[%s1 + $0x8] sm:$0xf]
  %v47 = vld [vmem:[%s1 + $0xc] sm:$0xf]
  %v48 = vld [vmem:[%s1 + $0x10] sm:$0xf]
  %v49 = vld [vmem:[%s1 + $0x14] sm:$0xf]
  %v50 = vld [vmem:[%s1 + $0x18] sm:$0xf]
  %v51 = vld [vmem:[%s1 + $0x1c] sm:$0xf]
  %v52 = vld [vmem:[%s1 + $0x20] sm:$0xf]
  %v53 = vld [vmem:[%s1 + $0x24] sm:$0xf]
  %v54 = vld [vmem:[%s1 + $0x28] sm:$0xf]
  %v55 = vld [vmem:[%s1 + $0x2c] sm:$0xf]
  %v56 = vld [vmem:[%s1 + $0x30] sm:$0xf]
  %v57 = vld [vmem:[%s1 + $0x34] sm:$0xf]
  %v58 = vld [vmem:[%s1 + $0x38] sm:$0xf]
  %v59 = vld [vmem:[%s1 + $0x3c] sm:$0xf]
  %v60 = vld [vmem:[%s1 + $0x40] sm:$0xf]
  %v61 = vld [vmem:[%s1 + $0x44] sm:$0xf]
  %v62 = vld [vmem:[%s1 + $0x48] sm:$0xf]
  %v63 = vld [vmem:[%s1 + $0x4c] sm:$0xf]
  %v64 = vld [vmem:[%s1 + $0x50] sm:$0xf]
  %v65 = vld [vmem:[%s1 + $0x54] sm:$0xf]
  %v66 = vld [vmem:[%s1 + $0x58] sm:$0xf]
  %v67 = vld [vmem:[%s1 + $0x5c] sm:$0xf]
  %v68 = vld [vmem:[%s1 + $0x60] sm:$0xf]
  %v69 = vld [vmem:[%s1 + $0x64] sm:$0xf]
  %v70 = vld [vmem:[%s1 + $0x68] sm:$0xf]
  %v71 = vld [vmem:[%s1 + $0x6c] sm:$0xf]
  %v72 = vld [vmem:[%s1 + $0x70] sm:$0xf]
  %v73 = vld [vmem:[%s1 + $0x74] sm:$0xf]
  %v74 = vld [vmem:[%s1 + $0x78] sm:$0xf]
  %v75 = vld [vmem:[%s1 + $0x7c] sm:$0xf]
  %v76 = vld [vmem:[%s1 + $0x80] sm:$0xf]
  %v77 = vld [vmem:[%s1 + $0x84] sm:$0xf]
  %v78 = vld [vmem:[%s1 + $0x88] sm:$0xf]
  %v79 = vld [vmem:[%s1 + $0x8c] sm:$0xf]
  %v80 = vld [vmem:[%s1 + $0x90] sm:$0xf]
  %v81 = vld [vmem:[%s1 + $0x94] sm:$0xf]
  %v82 = vld [vmem:[%s1 + $0x98] sm:$0xf]
  %v83 = vld [vmem:[%s1 + $0x9c] sm:$0xf]
  %v84 = vld [vmem:[%s1 + $0xa0] sm:$0xf]
  %v85 = vld [vmem:[%s1 + $0xa4] sm:$0xf]
  %v86 = vld [vmem:[%s1 + $0xa8] sm:$0xf]
  %v87 = vld [vmem:[%s1 + $0xac] sm:$0xf]
  %v88 = vld [vmem:[%s1 + $0xb0] sm:$0xf]
  %v89 = vld [vmem:[%s1 + $0xb4] sm:$0xf]
  %v90 = vld [vmem:[%s1 + $0xb8] sm:$0xf]
  %v91 = vld [vmem:[%s1 + $0xbc] sm:$0xf]
  %v92 = vld [vmem:[%s1 + $0xc0] sm:$0xf]
  %v93 = vld [vmem:[%s1 + $0xc4] sm:$0xf]
  %v94 = vld [vmem:[%s1 + $0xc8] sm:$0xf]
  %v95 = vld [vmem:[%s1 + $0xcc] sm:$0xf]
  %v96 = vld [vmem:[%s1 + $0xd0] sm:$0xf]
  %v97 = vld [vmem:[%s1 + $0xd4] sm:$0xf]
  %v98 = vld [vmem:[%s1 + $0xd8] sm:$0xf]
  %v99 = vld [vmem:[%s1 + $0xdc] sm:$0xf]
  %v100 = vld [vmem:[%s1 + $0xe0] sm:$0xf]
  %v101 = vld [vmem:[%s1 + $0xe4] sm:$0xf]
  %v102 = vld [vmem:[%s1 + $0xe8] sm:$0xf]
  %v103 = vld [vmem:[%s1 + $0xec] sm:$0xf]
  %v104 = vld [vmem:[%s1 + $0xf0] sm:$0xf]
  %v105 = vld [vmem:[%s1 + $0xf4] sm:$0xf]
  %v106 = vld [vmem:[%s1 + $0xf8] sm:$0xf]
  %v107 = vld [vmem:[%s1 + $0xfc] sm:$0xf]
  %v108 = vld [vmem:[%s1 + $0x100] sm:$0xf]
  %v109 = vld [vmem:[%s1 + $0x104] sm:$0xf]
  %v110 = vld [vmem:[%s1 + $0x108] sm:$0xf]
  %v111 = vld [vmem:[%s1 + $0x10c] sm:$0xf]
  %v112 = vld [vmem:[%s1 + $0x110] sm:$0xf]
  %v113 = vld [vmem:[%s1 + $0x114] sm:$0xf]
  %v114 = vld [vmem:[%s1 + $0x118] sm:$0xf]
  %v115 = vld [vmem:[%s1 + $0x11c] sm:$0xf]
  %v116 = vld [vmem:[%s1 + $0x120] sm:$0xf]
  %v117 = vld [vmem:[%s1 + $0x124] sm:$0xf]
  %v118 = vld [vmem:[%s1 + $0x128] sm:$0xf]
  %v119 = vld [vmem:[%s1 + $0x12c] sm:$0xf]
  %v120 = vld [vmem:[%s1 + $0x130] sm:$0xf]
  %v121 = vld [vmem:[%s1 + $0x134] sm:$0xf]
  %v122 = vld [vmem:[%s1 + $0x138] sm:$0xf]
  %v123 = vld [vmem:[%s1 + $0x13c] sm:$0xf]
  %v124 = vld [vmem:[%s1 + $0x140] sm:$0xf]
  %v125 = vld [vmem:[%s1 + $0x144] sm:$0xf]
  %v126 = vld [vmem:[%s1 + $0x148] sm:$0xf]
  %v127 = vld [vmem:[%s1 + $0x14c] sm:$0xf]
  %v128 = vld [vmem:[%s1 + $0x150] sm:$0xf]
  %v129 = vld [vmem:[%s1 + $0x154] sm:$0xf]
  %v130 = vld [vmem:[%s1 + $0x158] sm:$0xf]
  %v131 = vld [vmem:[%s1 + $0x15c] sm:$0xf]
  %v132 = vld [vmem:[%s1 + $0x160] sm:$0xf]
  %v133 = vld [vmem:[%s1 + $0x164] sm:$0xf]
  %v134 = vld [vmem:[%s1 + $0x168] sm:$0xf]
  %v135 = vld [vmem:[%s1 + $0x16c] sm:$0xf]
  %v136 = vld [vmem:[%s1 + $0x170] sm:$0xf]
  %v137 = vld [vmem:[%s1 + $0x174] sm:$0xf]
  %v138 = vld [vmem:[%s1 + $0x178] sm:$0xf]
  %v139 = vld [vmem:[%s1 + $0x17c] sm:$0xf]
  %v140 = vld [vmem:[%s1 + $0x180] sm:$0xf]
  %v141 = vld [vmem:[%s1 + $0x184] sm:$0xf]
  %v142 = vld [vmem:[%s1 + $0x188] sm:$0xf]
  %v143 = vld [vmem:[%s1 + $0x18c] sm:$0xf]
  %v144 = vld [vmem:[%s1 + $0x190] sm:$0xf]
  %v145 = vld [vmem:[%s1 + $0x194] sm:$0xf]
  %v146 = vld [vmem:[%s1 + $0x198] sm:$0xf]
  %v147 = vld [vmem:[%s1 + $0x19c] sm:$0xf]
  %v148 = vld [vmem:[%s1 + $0x1a0] sm:$0xf]
  %v149 = vld [vmem:[%s1 + $0x1a4] sm:$0xf]
  %v150 = vld [vmem:[%s1 + $0x1a8] sm:$0xf]
  %v151 = vld [vmem:[%s1 + $0x1ac] sm:$0xf]
  %v152 = vld [vmem:[%s1 + $0x1b0] sm:$0xf]
  %v153 = vld [vmem:[%s1 + $0x1b4] sm:$0xf]
  %v154 = vld [vmem:[%s1 + $0x1b8] sm:$0xf]
  %v155 = vld [vmem:[%s1 + $0x1bc] sm:$0xf]
  %v156 = vld [vmem:[%s1 + $0x1c0] sm:$0xf]
  %v157 = vld [vmem:[%s1 + $0x1c4] sm:$0xf]
  %v158 = vld [vmem:[%s1 + $0x1c8] sm:$0xf]
  %v159 = vld [vmem:[%s1 + $0x1cc] sm:$0xf]
  %v160 = vld [vmem:[%s1 + $0x1d0] sm:$0xf]
  %v161 = vld [vmem:[%s1 + $0x1d4] sm:$0xf]
  %v162 = vld [vmem:[%s1 + $0x1d8] sm:$0xf]
  %v163 = vld [vmem:[%s1 + $0x1dc] sm:$0xf]
  %v164 = vld [vmem:[%s1 + $0x1e0] sm:$0xf]
  %v165 = vld [vmem:[%s1 + $0x1e4] sm:$0xf]
  %v166 = vld [vmem:[%s1 + $0x1e8] sm:$0xf]
  %v167 = vld [vmem:[%s1 + $0x1ec] sm:$0xf]
  %v168 = vld [vmem:[%s1 + $0x1f0] sm:$0xf]
  %v169 = vld [vmem:[%s1 + $0x1f4] sm:$0xf]
  %v170 = vld [vmem:[%s1 + $0x1f8] sm:$0xf]
  %v171 = vld [vmem:[%s1 + $0x1fc] sm:$0xf]
  %v172 = vld [vmem:[%s1 + $0x200] sm:$0xf]
  %v173 = vld [vmem:[%s1 + $0x204] sm:$0xf]
  %v174 = vld [vmem:[%s1 + $0x208] sm:$0xf]
  %v175 = vld [vmem:[%s1 + $0x20c] sm:$0xf]
  %v176 = vld [vmem:[%s1 + $0x210] sm:$0xf]
  %v177 = vld [vmem:[%s1 + $0x214] sm:$0xf]
  %v178 = vld [vmem:[%s1 + $0x218] sm:$0xf]
  %v179 = vld [vmem:[%s1 + $0x21c] sm:$0xf]
  %v180 = vld [vmem:[%s1 + $0x220] sm:$0xf]
  %v181 = vld [vmem:[%s1 + $0x224] sm:$0xf]
  %v182 = vld [vmem:[%s1 + $0x228] sm:$0xf]
  %v183 = vld [vmem:[%s1 + $0x22c] sm:$0xf]
  %v184 = vld [vmem:[%s1 + $0x230] sm:$0xf]
  %v185 = vld [vmem:[%s1 + $0x234] sm:$0xf]
  %v186 = vld [vmem:[%s1 + $0x238] sm:$0xf]
  %v187 = vld [vmem:[%s1 + $0x23c] sm:$0xf]
  %v188 = vld [vmem:[%s1 + $0x240] sm:$0xf]
  %v189 = vld [vmem:[%s1 + $0x244] sm:$0xf]
  %v190 = vld [vmem:[%s1 + $0x248] sm:$0xf]
  %v191 = vld [vmem:[%s1 + $0x24c] sm:$0xf]
  %v192 = vld [vmem:[%s1 + $0x250] sm:$0xf]
  %v193 = vld [vmem:[%s1 + $0x254] sm:$0xf]
  %v194 = vld [vmem:[%s1 + $0x258] sm:$0xf]
  %v195 = vld [vmem:[%s1 + $0x25c] sm:$0xf]
  %v196 = vld [vmem:[%s1 + $0x260] sm:$0xf]
  %v197 = vld [vmem:[%s1 + $0x264] sm:$0xf]
  %v198 = vld [vmem:[%s1 + $0x268] sm:$0xf]
  %v199 = vld [vmem:[%s1 + $0x26c] sm:$0xf]
  %v200 = vld [vmem:[%s1 + $0x270] sm:$0xf]
  %v201 = vld [vmem:[%s1 + $0x274] sm:$0xf]
  %v202 = vld [vmem:[%s1 + $0x278] sm:$0xf]
  %v203 = vld [vmem:[%s1 + $0x27c] sm:$0xf]
  %v204 = vld [vmem:[%s1 + $0x280] sm:$0xf]
  %v205 = vld [vmem:[%s1 + $0x284] sm:$0xf]
  %v206 = vld [vmem:[%s1 + $0x288] sm:$0xf]
  %v207 = vld [vmem:[%s1 + $0x28c] sm:$0xf]
  %v208 = vld [vmem:[%s1 + $0x290] sm:$0xf]
  %v209 = vld [vmem:[%s1 + $0x294] sm:$0xf]
  %v210 = vld [vmem:[%s1 + $0x298] sm:$0xf]
  %v211 = vld [vmem:[%s1 + $0x29c] sm:$0xf]
  %v212 = vld [vmem:[%s1 + $0x2a0] sm:$0xf]
  %v213 = vld [vmem:[%s1 + $0x2a4] sm:$0xf]
  %v214 = vld [vmem:[%s1 + $0x2a8] sm:$0xf]
  %v215 = vld [vmem:[%s1 + $0x2ac] sm:$0xf]
  %v216 = vld [vmem:[%s1 + $0x2b0] sm:$0xf]
  %v217 = vld [vmem:[%s1 + $0x2b4] sm:$0xf]
  %v218 = vld [vmem:[%s1 + $0x2b8] sm:$0xf]
  %v219 = vld [vmem:[%s1 + $0x2bc] sm:$0xf]
  %v220 = vld [vmem:[%s1 + $0x2c0] sm:$0xf]
  %v221 = vld [vmem:[%s1 + $0x2c4] sm:$0xf]
  %v222 = vld [vmem:[%s1 + $0x2c8] sm:$0xf]
  %v223 = vld [vmem:[%s1 + $0x2cc] sm:$0xf]
  %v224 = vld [vmem:[%s1 + $0x2d0] sm:$0xf]
  %v225 = vld [vmem:[%s1 + $0x2d4] sm:$0xf]
  %v226 = vld [vmem:[%s1 + $0x2d8] sm:$0xf]
  %v227 = vld [vmem:[%s1 + $0x2dc] sm:$0xf]
  %v228 = vld [vmem:[%s1 + $0x2e0] sm:$0xf]
  %v229 = vld [vmem:[%s1 + $0x2e4] sm:$0xf]
  %v230 = vld [vmem:[%s1 + $0x2e8] sm:$0xf]
  %v231 = vld [vmem:[%s1 + $0x2ec] sm:$0xf]
  %v232 = vld [vmem:[%s1 + $0x2f0] sm:$0xf]
  %v233 = vld [vmem:[%s1 + $0x2f4] sm:$0xf]
  %v234 = vld [vmem:[%s1 + $0x2f8] sm:$0xf]
  %v235 = vld [vmem:[%s1 + $0x2fc] sm:$0xf]
  %v236 = vld [vmem:[%s1 + $0x300] sm:$0xf]
  %v237 = vld [vmem:[%s1 + $0x304] sm:$0xf]
  %v238 = vld [vmem:[%s1 + $0x308] sm:$0xf]
  %v239 = vld [vmem:[%s1 + $0x30c] sm:$0xf]
  %v240 = vld [vmem:[%s1 + $0x310] sm:$0xf]
  %v241 = vld [vmem:[%s1 + $0x314] sm:$0xf]
  %v242 = vld [vmem:[%s1 + $0x318] sm:$0xf]
  %v243 = vld [vmem:[%s1 + $0x31c] sm:$0xf]
  %v244 = vld [vmem:[%s1 + $0x320] sm:$0xf]
  %v245 = vld [vmem:[%s1 + $0x324] sm:$0xf]
  %v246 = vld [vmem:[%s1 + $0x328] sm:$0xf]
  %v247 = vld [vmem:[%s1 + $0x32c] sm:$0xf]
  %v248 = vld [vmem:[%s1 + $0x330] sm:$0xf]
  %v249 = vld [vmem:[%s1 + $0x334] sm:$0xf]
  %v250 = vld [vmem:[%s1 + $0x338] sm:$0xf]
  %v251 = vld [vmem:[%s1 + $0x33c] sm:$0xf]
  %v252 = vld [vmem:[%s1 + $0x340] sm:$0xf]
  %v253 = vld [vmem:[%s1 + $0x344] sm:$0xf]
  %v254 = vld [vmem:[%s1 + $0x348] sm:$0xf]
  %v255 = vld [vmem:[%s1 + $0x34c] sm:$0xf]
  %v256 = vld [vmem:[%s1 + $0x350] sm:$0xf]
  %v257 = vld [vmem:[%s1 + $0x354] sm:$0xf]
  %v258 = vld [vmem:[%s1 + $0x358] sm:$0xf]
  %v259 = vld [vmem:[%s1 + $0x35c] sm:$0xf]
  %v260 = vld [vmem:[%s1 + $0x360] sm:$0xf]
  %v261 = vld [vmem:[%s1 + $0x364] sm:$0xf]
  %v262 = vld [vmem:[%s1 + $0x368] sm:$0xf]
  %v263 = vld [vmem:[%s1 + $0x36c] sm:$0xf]
  %v264 = vld [vmem:[%s1 + $0x370] sm:$0xf]
  %v265 = vld [vmem:[%s1 + $0x374] sm:$0xf]
  %v266 = vld [vmem:[%s1 + $0x378] sm:$0xf]
  %v267 = vld [vmem:[%s1 + $0x37c] sm:$0xf]
  %v268 = vld [vmem:[%s1 + $0x380] sm:$0xf]
  %v269 = vld [vmem:[%s1 + $0x384] sm:$0xf]
  %v270 = vld [vmem:[%s1 + $0x388] sm:$0xf]
  %v271 = vld [vmem:[%s1 + $0x38c] sm:$0xf]
  %v272 = vld [vmem:[%s1 + $0x390] sm:$0xf]
  %v273 = vld [vmem:[%s1 + $0x394] sm:$0xf]
  %v274 = vld [vmem:[%s1 + $0x398] sm:$0xf]
  %v275 = vld [vmem:[%s1 + $0x39c] sm:$0xf]
  %v276 = vld [vmem:[%s1 + $0x3a0] sm:$0xf]
  %v277 = vld [vmem:[%s1 + $0x3a4] sm:$0xf]
  %v278 = vld [vmem:[%s1 + $0x3a8] sm:$0xf]
  %v279 = vld [vmem:[%s1 + $0x3ac] sm:$0xf]
  %v280 = vld [vmem:[%s1 + $0x3b0] sm:$0xf]
  %v281 = vld [vmem:[%s1 + $0x3b4] sm:$0xf]
  %v282 = vld [vmem:[%s1 + $0x3b8] sm:$0xf]
  %v283 = vld [vmem:[%s1 + $0x3bc] sm:$0xf]
  %v284 = vld [vmem:[%s1 + $0x3c0] sm:$0xf]
  %v285 = vld [vmem:[%s1 + $0x3c4] sm:$0xf]
  %v286 = vld [vmem:[%s1 + $0x3c8] sm:$0xf]
  %v287 = vld [vmem:[%s1 + $0x3cc] sm:$0xf]
  %v288 = vld [vmem:[%s1 + $0x3d0] sm:$0xf]
  %v289 = vld [vmem:[%s1 + $0x3d4] sm:$0xf]
  %v290 = vld [vmem:[%s1 + $0x3d8] sm:$0xf]
  %v291 = vld [vmem:[%s1 + $0x3dc] sm:$0xf]
  %v292 = vld [vmem:[%s1 + $0x3e0] sm:$0xf]
  %v293 = vld [vmem:[%s1 + $0x3e4] sm:$0xf]
  %v294 = vld [vmem:[%s1 + $0x3e8] sm:$0xf]
  %v295 = vld [vmem:[%s1 + $0x3ec] sm:$0xf]
  %v296 = vld [vmem:[%s1 + $0x3f0] sm:$0xf]
  %v297 = vld [vmem:[%s1 + $0x3f4] sm:$0xf]
  %v298 = vld [vmem:[%s1 + $0x3f8] sm:$0xf]
  %v299 = vld [vmem:[%s1 + $0x3fc] sm:$0xf]
  %v300 = vld [vmem:[%s1 + $0x400] sm:$0xf]
  %v301 = vld [vmem:[%s1 + $0x404] sm:$0xf]
  %v302 = vld [vmem:[%s1 + $0x408] sm:$0xf]
  %v303 = vld [vmem:[%s1 + $0x40c] sm:$0xf]
  %v304 = vld [vmem:[%s1 + $0x410] sm:$0xf]
  %v305 = vld [vmem:[%s1 + $0x414] sm:$0xf]
  %v306 = vld [vmem:[%s1 + $0x418] sm:$0xf]
  %v307 = vld [vmem:[%s1 + $0x41c] sm:$0xf]
  %v308 = vld [vmem:[%s1 + $0x420] sm:$0xf]
  %v309 = vld [vmem:[%s1 + $0x424] sm:$0xf]
  %v310 = vld [vmem:[%s1 + $0x428] sm:$0xf]
  %v311 = vld [vmem:[%s1 + $0x42c] sm:$0xf]
  %v312 = vld [vmem:[%s1 + $0x430] sm:$0xf]
  %v313 = vld [vmem:[%s1 + $0x434] sm:$0xf]
  %v314 = vld [vmem:[%s1 + $0x438] sm:$0xf]
  %v315 = vld [vmem:[%s1 + $0x43c] sm:$0xf]
  %v316 = vld [vmem:[%s1 + $0x440] sm:$0xf]
  %v317 = vld [vmem:[%s1 + $0x444] sm:$0xf]
  %v318 = vld [vmem:[%s1 + $0x448] sm:$0xf]
  %v319 = vld [vmem:[%s1 + $0x44c] sm:$0xf]
  %v320 = vld [vmem:[%s1 + $0x450] sm:$0xf]
  %v321 = vld [vmem:[%s1 + $0x454] sm:$0xf]
  %v322 = vld [vmem:[%s1 + $0x458] sm:$0xf]
  %v323 = vld [vmem:[%s1 + $0x45c] sm:$0xf]
  %v324 = vld [vmem:[%s1 + $0x460] sm:$0xf]
  %v325 = vld [vmem:[%s1 + $0x464] sm:$0xf]
  %v326 = vld [vmem:[%s1 + $0x468] sm:$0xf]
  %v327 = vld [vmem:[%s1 + $0x46c] sm:$0xf]
  %v328 = vld [vmem:[%s1 + $0x470] sm:$0xf]
  %v329 = vld [vmem:[%s1 + $0x474] sm:$0xf]
  %v330 = vld [vmem:[%s1 + $0x478] sm:$0xf]
  %v331 = vld [vmem:[%s1 + $0x47c] sm:$0xf]
  %v350 = vunpack.c.l.b16 %v26
  %v351 = vunpack.c.h.b16 %v26
  %v352 = vunpack.c.l.b16 %v27
  %v353 = vunpack.c.h.b16 %v27
  %v354 = vunpack.c.l.b16 %v28
  %v355 = vunpack.c.h.b16 %v28
  %v356 = vunpack.c.l.b16 %v29
  %v357 = vunpack.c.h.b16 %v29
  %v358 = vunpack.c.l.b16 %v30
  %v359 = vunpack.c.h.b16 %v30
  %v360 = vunpack.c.l.b16 %v31
  %v361 = vunpack.c.h.b16 %v31
  %v362 = vunpack.c.l.b16 %v32
  %v363 = vunpack.c.h.b16 %v32
  %v364 = vunpack.c.l.b16 %v33
  %v365 = vunpack.c.h.b16 %v33
  %v366 = vunpack.c.l.b16 %v34
  %v367 = vunpack.c.h.b16 %v34
  %v368 = vunpack.c.l.b16 %v35
  %v369 = vunpack.c.h.b16 %v35
  %v370 = vunpack.c.l.b16 %v36
  %v371 = vunpack.c.h.b16 %v36
  %v372 = vunpack.c.l.b16 %v37
  %v373 = vunpack.c.h.b16 %v37
  %v374 = vunpack.c.l.b16 %v38
  %v375 = vunpack.c.h.b16 %v38
  %v376 = vunpack.c.l.b16 %v39
  %v377 = vunpack.c.h.b16 %v39
  %v378 = vunpack.c.l.b16 %v40
  %v379 = vunpack.c.h.b16 %v40
  %v380 = vunpack.c.l.b16 %v41
  %v381 = vunpack.c.h.b16 %v41
  %v382 = vunpack.c.l.b16 %v42
  %v383 = vunpack.c.h.b16 %v42
  %v384 = vunpack.c.l.b16 %v43
  %v385 = vunpack.c.h.b16 %v43
  %v386 = vpack.c.b16 %v368, %v350
  %v387 = vpack.c.b16 %v369, %v351
  %v388 = vpack.c.b16 %v370, %v352
  %v389 = vpack.c.b16 %v371, %v353
  %v390 = vpack.c.b16 %v372, %v354
  %v391 = vpack.c.b16 %v373, %v355
  %v392 = vpack.c.b16 %v374, %v356
  %v393 = vpack.c.b16 %v375, %v357
  %v394 = vpack.c.b16 %v376, %v358
  %v395 = vpack.c.b16 %v377, %v359
  %v396 = vpack.c.b16 %v378, %v360
  %v397 = vpack.c.b16 %v379, %v361
  %v398 = vpack.c.b16 %v380, %v362
  %v399 = vpack.c.b16 %v381, %v363
  %v400 = vpack.c.b16 %v382, %v364
  %v401 = vpack.c.b16 %v383, %v365
  %v402 = vpack.c.b16 %v384, %v366
  %v403 = vpack.c.b16 %v385, %v367
  %v710 = vunpack.c.l.b16 %v44
  %v711 = vunpack.c.l.b16 %v45
  %v712 = vunpack.c.l.b16 %v46
  %v713 = vunpack.c.l.b16 %v47
  %v714 = vunpack.c.l.b16 %v48
  %v715 = vunpack.c.l.b16 %v49
  %v716 = vunpack.c.l.b16 %v50
  %v717 = vunpack.c.l.b16 %v51
  %v718 = vunpack.c.l.b16 %v52
  %v719 = vunpack.c.l.b16 %v53
  %v720 = vunpack.c.l.b16 %v54
  %v721 = vunpack.c.l.b16 %v55
  %v722 = vunpack.c.l.b16 %v56
  %v723 = vunpack.c.l.b16 %v57
  %v724 = vunpack.c.l.b16 %v58
  %v725 = vunpack.c.l.b16 %v59
  %v726 = vunpack.c.l.b16 %v60
  %v727 = vunpack.c.l.b16 %v61
  %v728 = vunpack.c.l.b16 %v62
  %v729 = vunpack.c.l.b16 %v63
  %v730 = vunpack.c.l.b16 %v64
  %v731 = vunpack.c.l.b16 %v65
  %v732 = vunpack.c.l.b16 %v66
  %v733 = vunpack.c.l.b16 %v67
  %v734 = vunpack.c.l.b16 %v68
  %v735 = vunpack.c.l.b16 %v69
  %v736 = vunpack.c.l.b16 %v70
  %v737 = vunpack.c.l.b16 %v71
  %v738 = vunpack.c.l.b16 %v72
  %v739 = vunpack.c.l.b16 %v73
  %v740 = vunpack.c.l.b16 %v74
  %v741 = vunpack.c.l.b16 %v75
  %v742 = vunpack.c.l.b16 %v76
  %v743 = vunpack.c.l.b16 %v77
  %v744 = vunpack.c.l.b16 %v78
  %v745 = vunpack.c.l.b16 %v79
  %v746 = vunpack.c.l.b16 %v80
  %v747 = vunpack.c.l.b16 %v81
  %v748 = vunpack.c.l.b16 %v82
  %v749 = vunpack.c.l.b16 %v83
  %v750 = vunpack.c.l.b16 %v84
  %v751 = vunpack.c.l.b16 %v85
  %v752 = vunpack.c.l.b16 %v86
  %v753 = vunpack.c.l.b16 %v87
  %v754 = vunpack.c.l.b16 %v88
  %v755 = vunpack.c.l.b16 %v89
  %v756 = vunpack.c.l.b16 %v90
  %v757 = vunpack.c.l.b16 %v91
  %v758 = vunpack.c.l.b16 %v92
  %v759 = vunpack.c.l.b16 %v93
  %v760 = vunpack.c.l.b16 %v94
  %v761 = vunpack.c.l.b16 %v95
  %v762 = vunpack.c.l.b16 %v96
  %v763 = vunpack.c.l.b16 %v97
  %v764 = vunpack.c.l.b16 %v98
  %v765 = vunpack.c.l.b16 %v99
  %v766 = vunpack.c.l.b16 %v100
  %v767 = vunpack.c.l.b16 %v101
  %v768 = vunpack.c.l.b16 %v102
  %v769 = vunpack.c.l.b16 %v103
  %v770 = vunpack.c.l.b16 %v104
  %v771 = vunpack.c.l.b16 %v105
  %v772 = vunpack.c.l.b16 %v106
  %v773 = vunpack.c.l.b16 %v107
  %v774 = vunpack.c.l.b16 %v108
  %v775 = vunpack.c.l.b16 %v109
  %v776 = vunpack.c.l.b16 %v110
  %v777 = vunpack.c.l.b16 %v111
  %v778 = vunpack.c.l.b16 %v112
  %v779 = vunpack.c.l.b16 %v113
  %v780 = vunpack.c.l.b16 %v114
  %v781 = vunpack.c.l.b16 %v115
  %v782 = vunpack.c.l.b16 %v116
  %v783 = vunpack.c.l.b16 %v117
  %v784 = vunpack.c.l.b16 %v118
  %v785 = vunpack.c.l.b16 %v119
  %v786 = vunpack.c.l.b16 %v120
  %v787 = vunpack.c.l.b16 %v121
  %v788 = vunpack.c.l.b16 %v122
  %v789 = vunpack.c.l.b16 %v123
  %v790 = vunpack.c.l.b16 %v124
  %v791 = vunpack.c.l.b16 %v125
  %v792 = vunpack.c.l.b16 %v126
  %v793 = vunpack.c.l.b16 %v127
  %v794 = vunpack.c.l.b16 %v128
  %v795 = vunpack.c.l.b16 %v129
  %v796 = vunpack.c.l.b16 %v130
  %v797 = vunpack.c.l.b16 %v131
  %v798 = vunpack.c.l.b16 %v132
  %v799 = vunpack.c.l.b16 %v133
  %v800 = vunpack.c.l.b16 %v134
  %v801 = vunpack.c.l.b16 %v135
  %v802 = vunpack.c.l.b16 %v136
  %v803 = vunpack.c.l.b16 %v137
  %v804 = vunpack.c.l.b16 %v138
  %v805 = vunpack.c.l.b16 %v139
  %v806 = vunpack.c.l.b16 %v140
  %v807 = vunpack.c.l.b16 %v141
  %v808 = vunpack.c.l.b16 %v142
  %v809 = vunpack.c.l.b16 %v143
  %v810 = vunpack.c.l.b16 %v144
  %v811 = vunpack.c.l.b16 %v145
  %v812 = vunpack.c.l.b16 %v146
  %v813 = vunpack.c.l.b16 %v147
  %v814 = vunpack.c.l.b16 %v148
  %v815 = vunpack.c.l.b16 %v149
  %v816 = vunpack.c.l.b16 %v150
  %v817 = vunpack.c.l.b16 %v151
  %v818 = vunpack.c.l.b16 %v152
  %v819 = vunpack.c.l.b16 %v153
  %v820 = vunpack.c.l.b16 %v154
  %v821 = vunpack.c.l.b16 %v155
  %v822 = vunpack.c.l.b16 %v156
  %v823 = vunpack.c.l.b16 %v157
  %v824 = vunpack.c.l.b16 %v158
  %v825 = vunpack.c.l.b16 %v159
  %v826 = vunpack.c.l.b16 %v160
  %v827 = vunpack.c.l.b16 %v161
  %v828 = vunpack.c.l.b16 %v162
  %v829 = vunpack.c.l.b16 %v163
  %v830 = vunpack.c.l.b16 %v164
  %v831 = vunpack.c.l.b16 %v165
  %v832 = vunpack.c.l.b16 %v166
  %v833 = vunpack.c.l.b16 %v167
  %v834 = vunpack.c.l.b16 %v168
  %v835 = vunpack.c.l.b16 %v169
  %v836 = vunpack.c.l.b16 %v170
  %v837 = vunpack.c.l.b16 %v171
  %v838 = vunpack.c.l.b16 %v172
  %v839 = vunpack.c.l.b16 %v173
  %v840 = vunpack.c.l.b16 %v174
  %v841 = vunpack.c.l.b16 %v175
  %v842 = vunpack.c.l.b16 %v176
  %v843 = vunpack.c.l.b16 %v177
  %v844 = vunpack.c.l.b16 %v178
  %v845 = vunpack.c.l.b16 %v179
  %v846 = vunpack.c.l.b16 %v180
  %v847 = vunpack.c.l.b16 %v181
  %v848 = vunpack.c.l.b16 %v182
  %v849 = vunpack.c.l.b16 %v183
  %v850 = vunpack.c.l.b16 %v184
  %v851 = vunpack.c.l.b16 %v185
  %v852 = vunpack.c.l.b16 %v186
  %v853 = vunpack.c.l.b16 %v187
  %v854 = vunpack.c.l.b16 %v188
  %v855 = vunpack.c.l.b16 %v189
  %v856 = vunpack.c.l.b16 %v190
  %v857 = vunpack.c.l.b16 %v191
  %v858 = vunpack.c.l.b16 %v192
  %v859 = vunpack.c.l.b16 %v193
  %v860 = vunpack.c.l.b16 %v194
  %v861 = vunpack.c.l.b16 %v195
  %v862 = vunpack.c.l.b16 %v196
  %v863 = vunpack.c.l.b16 %v197
  %v864 = vunpack.c.l.b16 %v198
  %v865 = vunpack.c.l.b16 %v199
  %v866 = vunpack.c.l.b16 %v200
  %v867 = vunpack.c.l.b16 %v201
  %v868 = vunpack.c.l.b16 %v202
  %v869 = vunpack.c.l.b16 %v203
  %v870 = vunpack.c.l.b16 %v204
  %v871 = vunpack.c.l.b16 %v205
  %v872 = vunpack.c.l.b16 %v206
  %v873 = vunpack.c.l.b16 %v207
  %v874 = vunpack.c.l.b16 %v208
  %v875 = vunpack.c.l.b16 %v209
  %v876 = vunpack.c.l.b16 %v210
  %v877 = vunpack.c.l.b16 %v211
  %v878 = vunpack.c.l.b16 %v212
  %v879 = vunpack.c.l.b16 %v213
  %v880 = vunpack.c.l.b16 %v214
  %v881 = vunpack.c.l.b16 %v215
  %v882 = vunpack.c.l.b16 %v216
  %v883 = vunpack.c.l.b16 %v217
  %v884 = vunpack.c.l.b16 %v218
  %v885 = vunpack.c.l.b16 %v219
  %v886 = vunpack.c.l.b16 %v220
  %v887 = vunpack.c.l.b16 %v221
  %v888 = vunpack.c.l.b16 %v222
  %v889 = vunpack.c.l.b16 %v223
  %v890 = vunpack.c.l.b16 %v224
  %v891 = vunpack.c.l.b16 %v225
  %v892 = vunpack.c.l.b16 %v226
  %v893 = vunpack.c.l.b16 %v227
  %v894 = vunpack.c.l.b16 %v228
  %v895 = vunpack.c.l.b16 %v229
  %v896 = vunpack.c.l.b16 %v230
  %v897 = vunpack.c.l.b16 %v231
  %v898 = vunpack.c.l.b16 %v232
  %v899 = vunpack.c.l.b16 %v233
  %v900 = vunpack.c.l.b16 %v234
  %v901 = vunpack.c.l.b16 %v235
  %v902 = vunpack.c.l.b16 %v236
  %v903 = vunpack.c.l.b16 %v237
  %v904 = vunpack.c.l.b16 %v238
  %v905 = vunpack.c.l.b16 %v239
  %v906 = vunpack.c.l.b16 %v240
  %v907 = vunpack.c.l.b16 %v241
  %v908 = vunpack.c.l.b16 %v242
  %v909 = vunpack.c.l.b16 %v243
  %v910 = vunpack.c.l.b16 %v244
  %v911 = vunpack.c.l.b16 %v245
  %v912 = vunpack.c.l.b16 %v246
  %v913 = vunpack.c.l.b16 %v247
  %v914 = vunpack.c.l.b16 %v248
  %v915 = vunpack.c.l.b16 %v249
  %v916 = vunpack.c.l.b16 %v250
  %v917 = vunpack.c.l.b16 %v251
  %v918 = vunpack.c.l.b16 %v252
  %v919 = vunpack.c.l.b16 %v253
  %v920 = vunpack.c.l.b16 %v254
  %v921 = vunpack.c.l.b16 %v255
  %v922 = vunpack.c.l.b16 %v256
  %v923 = vunpack.c.l.b16 %v257
  %v924 = vunpack.c.l.b16 %v258
  %v925 = vunpack.c.l.b16 %v259
  %v926 = vunpack.c.l.b16 %v260
  %v927 = vunpack.c.l.b16 %v261
  %v928 = vunpack.c.l.b16 %v262
  %v929 = vunpack.c.l.b16 %v263
  %v930 = vunpack.c.l.b16 %v264
  %v931 = vunpack.c.l.b16 %v265
  %v932 = vunpack.c.l.b16 %v266
  %v933 = vunpack.c.l.b16 %v267
  %v934 = vunpack.c.l.b16 %v268
  %v935 = vunpack.c.l.b16 %v269
  %v936 = vunpack.c.l.b16 %v270
  %v937 = vunpack.c.l.b16 %v271
  %v938 = vunpack.c.l.b16 %v272
  %v939 = vunpack.c.l.b16 %v273
  %v940 = vunpack.c.l.b16 %v274
  %v941 = vunpack.c.l.b16 %v275
  %v942 = vunpack.c.l.b16 %v276
  %v943 = vunpack.c.l.b16 %v277
  %v944 = vunpack.c.l.b16 %v278
  %v945 = vunpack.c.l.b16 %v279
  %v946 = vunpack.c.l.b16 %v280
  %v947 = vunpack.c.l.b16 %v281
  %v948 = vunpack.c.l.b16 %v282
  %v949 = vunpack.c.l.b16 %v283
  %v950 = vunpack.c.l.b16 %v284
  %v951 = vunpack.c.l.b16 %v285
  %v952 = vunpack.c.l.b16 %v286
  %v953 = vunpack.c.l.b16 %v287
  %v954 = vunpack.c.l.b16 %v288
  %v955 = vunpack.c.l.b16 %v289
  %v956 = vunpack.c.l.b16 %v290
  %v957 = vunpack.c.l.b16 %v291
  %v958 = vunpack.c.l.b16 %v292
  %v959 = vunpack.c.l.b16 %v293
  %v960 = vunpack.c.l.b16 %v294
  %v961 = vunpack.c.l.b16 %v295
  %v962 = vunpack.c.l.b16 %v296
  %v963 = vunpack.c.l.b16 %v297
  %v964 = vunpack.c.l.b16 %v298
  %v965 = vunpack.c.l.b16 %v299
  %v966 = vunpack.c.l.b16 %v300
  %v967 = vunpack.c.l.b16 %v301
  %v968 = vunpack.c.l.b16 %v302
  %v969 = vunpack.c.l.b16 %v303
  %v970 = vunpack.c.l.b16 %v304
  %v971 = vunpack.c.l.b16 %v305
  %v972 = vunpack.c.l.b16 %v306
  %v973 = vunpack.c.l.b16 %v307
  %v974 = vunpack.c.l.b16 %v308
  %v975 = vunpack.c.l.b16 %v309
  %v976 = vunpack.c.l.b16 %v310
  %v977 = vunpack.c.l.b16 %v311
  %v978 = vunpack.c.l.b16 %v312
  %v979 = vunpack.c.l.b16 %v313
  %v980 = vunpack.c.l.b16 %v314
  %v981 = vunpack.c.l.b16 %v315
  %v982 = vunpack.c.l.b16 %v316
  %v983 = vunpack.c.l.b16 %v317
  %v984 = vunpack.c.l.b16 %v318
  %v985 = vunpack.c.l.b16 %v319
  %v986 = vunpack.c.l.b16 %v320
  %v987 = vunpack.c.l.b16 %v321
  %v988 = vunpack.c.l.b16 %v322
  %v989 = vunpack.c.l.b16 %v323
  %v990 = vunpack.c.l.b16 %v324
  %v991 = vunpack.c.l.b16 %v325
  %v992 = vunpack.c.l.b16 %v326
  %v993 = vunpack.c.l.b16 %v327
  %v994 = vunpack.c.l.b16 %v328
  %v995 = vunpack.c.l.b16 %v329
  %v996 = vunpack.c.l.b16 %v330
  %v997 = vunpack.c.l.b16 %v331
  %v998 = vpack.c.b16 %v711, %v710
  %v999 = vpack.c.b16 %v713, %v712
  %v1000 = vpack.c.b16 %v715, %v714
  %v1001 = vpack.c.b16 %v717, %v716
  %v1002 = vpack.c.b16 %v719, %v718
  %v1003 = vpack.c.b16 %v721, %v720
  %v1004 = vpack.c.b16 %v723, %v722
  %v1005 = vpack.c.b16 %v725, %v724
  %v1006 = vpack.c.b16 %v727, %v726
  %v1007 = vpack.c.b16 %v729, %v728
  %v1008 = vpack.c.b16 %v731, %v730
  %v1009 = vpack.c.b16 %v733, %v732
  %v1010 = vpack.c.b16 %v735, %v734
  %v1011 = vpack.c.b16 %v737, %v736
  %v1012 = vpack.c.b16 %v739, %v738
  %v1013 = vpack.c.b16 %v741, %v740
  %v1014 = vpack.c.b16 %v743, %v742
  %v1015 = vpack.c.b16 %v745, %v744
  %v1016 = vpack.c.b16 %v747, %v746
  %v1017 = vpack.c.b16 %v749, %v748
  %v1018 = vpack.c.b16 %v751, %v750
  %v1019 = vpack.c.b16 %v753, %v752
  %v1020 = vpack.c.b16 %v755, %v754
  %v1021 = vpack.c.b16 %v757, %v756
  %v1022 = vpack.c.b16 %v759, %v758
  %v1023 = vpack.c.b16 %v761, %v760
  %v1024 = vpack.c.b16 %v763, %v762
  %v1025 = vpack.c.b16 %v765, %v764
  %v1026 = vpack.c.b16 %v767, %v766
  %v1027 = vpack.c.b16 %v769, %v768
  %v1028 = vpack.c.b16 %v771, %v770
  %v1029 = vpack.c.b16 %v773, %v772
  %v1030 = vpack.c.b16 %v775, %v774
  %v1031 = vpack.c.b16 %v777, %v776
  %v1032 = vpack.c.b16 %v779, %v778
  %v1033 = vpack.c.b16 %v781, %v780
  %v1034 = vpack.c.b16 %v783, %v782
  %v1035 = vpack.c.b16 %v785, %v784
  %v1036 = vpack.c.b16 %v787, %v786
  %v1037 = vpack.c.b16 %v789, %v788
  %v1038 = vpack.c.b16 %v791, %v790
  %v1039 = vpack.c.b16 %v793, %v792
  %v1040 = vpack.c.b16 %v795, %v794
  %v1041 = vpack.c.b16 %v797, %v796
  %v1042 = vpack.c.b16 %v799, %v798
  %v1043 = vpack.c.b16 %v801, %v800
  %v1044 = vpack.c.b16 %v803, %v802
  %v1045 = vpack.c.b16 %v805, %v804
  %v1046 = vpack.c.b16 %v807, %v806
  %v1047 = vpack.c.b16 %v809, %v808
  %v1048 = vpack.c.b16 %v811, %v810
  %v1049 = vpack.c.b16 %v813, %v812
  %v1050 = vpack.c.b16 %v815, %v814
  %v1051 = vpack.c.b16 %v817, %v816
  %v1052 = vpack.c.b16 %v819, %v818
  %v1053 = vpack.c.b16 %v821, %v820
  %v1054 = vpack.c.b16 %v823, %v822
  %v1055 = vpack.c.b16 %v825, %v824
  %v1056 = vpack.c.b16 %v827, %v826
  %v1057 = vpack.c.b16 %v829, %v828
  %v1058 = vpack.c.b16 %v831, %v830
  %v1059 = vpack.c.b16 %v833, %v832
  %v1060 = vpack.c.b16 %v835, %v834
  %v1061 = vpack.c.b16 %v837, %v836
  %v1062 = vpack.c.b16 %v839, %v838
  %v1063 = vpack.c.b16 %v841, %v840
  %v1064 = vpack.c.b16 %v843, %v842
  %v1065 = vpack.c.b16 %v845, %v844
  %v1066 = vpack.c.b16 %v847, %v846
  %v1067 = vpack.c.b16 %v849, %v848
  %v1068 = vpack.c.b16 %v851, %v850
  %v1069 = vpack.c.b16 %v853, %v852
  %v1070 = vpack.c.b16 %v855, %v854
  %v1071 = vpack.c.b16 %v857, %v856
  %v1072 = vpack.c.b16 %v859, %v858
  %v1073 = vpack.c.b16 %v861, %v860
  %v1074 = vpack.c.b16 %v863, %v862
  %v1075 = vpack.c.b16 %v865, %v864
  %v1076 = vpack.c.b16 %v867, %v866
  %v1077 = vpack.c.b16 %v869, %v868
  %v1078 = vpack.c.b16 %v871, %v870
  %v1079 = vpack.c.b16 %v873, %v872
  %v1080 = vpack.c.b16 %v875, %v874
  %v1081 = vpack.c.b16 %v877, %v876
  %v1082 = vpack.c.b16 %v879, %v878
  %v1083 = vpack.c.b16 %v881, %v880
  %v1084 = vpack.c.b16 %v883, %v882
  %v1085 = vpack.c.b16 %v885, %v884
  %v1086 = vpack.c.b16 %v887, %v886
  %v1087 = vpack.c.b16 %v889, %v888
  %v1088 = vpack.c.b16 %v891, %v890
  %v1089 = vpack.c.b16 %v893, %v892
  %v1090 = vpack.c.b16 %v895, %v894
  %v1091 = vpack.c.b16 %v897, %v896
  %v1092 = vpack.c.b16 %v899, %v898
  %v1093 = vpack.c.b16 %v901, %v900
  %v1094 = vpack.c.b16 %v903, %v902
  %v1095 = vpack.c.b16 %v905, %v904
  %v1096 = vpack.c.b16 %v907, %v906
  %v1097 = vpack.c.b16 %v909, %v908
  %v1098 = vpack.c.b16 %v911, %v910
  %v1099 = vpack.c.b16 %v913, %v912
  %v1100 = vpack.c.b16 %v915, %v914
  %v1101 = vpack.c.b16 %v917, %v916
  %v1102 = vpack.c.b16 %v919, %v918
  %v1103 = vpack.c.b16 %v921, %v920
  %v1104 = vpack.c.b16 %v923, %v922
  %v1105 = vpack.c.b16 %v925, %v924
  %v1106 = vpack.c.b16 %v927, %v926
  %v1107 = vpack.c.b16 %v929, %v928
  %v1108 = vpack.c.b16 %v931, %v930
  %v1109 = vpack.c.b16 %v933, %v932
  %v1110 = vpack.c.b16 %v935, %v934
  %v1111 = vpack.c.b16 %v937, %v936
  %v1112 = vpack.c.b16 %v939, %v938
  %v1113 = vpack.c.b16 %v941, %v940
  %v1114 = vpack.c.b16 %v943, %v942
  %v1115 = vpack.c.b16 %v945, %v944
  %v1116 = vpack.c.b16 %v947, %v946
  %v1117 = vpack.c.b16 %v949, %v948
  %v1118 = vpack.c.b16 %v951, %v950
  %v1119 = vpack.c.b16 %v953, %v952
  %v1120 = vpack.c.b16 %v955, %v954
  %v1121 = vpack.c.b16 %v957, %v956
  %v1122 = vpack.c.b16 %v959, %v958
  %v1123 = vpack.c.b16 %v961, %v960
  %v1124 = vpack.c.b16 %v963, %v962
  %v1125 = vpack.c.b16 %v965, %v964
  %v1126 = vpack.c.b16 %v967, %v966
  %v1127 = vpack.c.b16 %v969, %v968
  %v1128 = vpack.c.b16 %v971, %v970
  %v1129 = vpack.c.b16 %v973, %v972
  %v1130 = vpack.c.b16 %v975, %v974
  %v1131 = vpack.c.b16 %v977, %v976
  %v1132 = vpack.c.b16 %v979, %v978
  %v1133 = vpack.c.b16 %v981, %v980
  %v1134 = vpack.c.b16 %v983, %v982
  %v1135 = vpack.c.b16 %v985, %v984
  %v1136 = vpack.c.b16 %v987, %v986
  %v1137 = vpack.c.b16 %v989, %v988
  %v1138 = vpack.c.b16 %v991, %v990
  %v1139 = vpack.c.b16 %v993, %v992
  %v1140 = vpack.c.b16 %v995, %v994
  %v1141 = vpack.c.b16 %v997, %v996
  %1286 = vmatprep.subr.bf16.mxu0 0
  %1287 = vmatpush1.bf16.msra.mxu0 %v998
  %1288 = vmatprep.subr.bf16.mxu0 0
  %1289 = vmatpush1.bf16.msra.mxu0 %v999
  %1290 = vmatprep.subr.bf16.mxu0 0
  %1291 = vmatpush1.bf16.msra.mxu0 %v1000
  %1292 = vmatprep.subr.bf16.mxu0 0
  %1293 = vmatpush1.bf16.msra.mxu0 %v1001
  %1294 = vmatprep.subr.bf16.mxu0 0
  %1295 = vmatpush1.bf16.msra.mxu0 %v1002
  %1296 = vmatprep.subr.bf16.mxu0 0
  %1297 = vmatpush1.bf16.msra.mxu0 %v1003
  %1298 = vmatprep.subr.bf16.mxu0 0
  %1299 = vmatpush1.bf16.msra.mxu0 %v1004
  %1300 = vmatprep.subr.bf16.mxu0 0
  %1301 = vmatpush1.bf16.msra.mxu0 %v1005
  %1302 = vmatprep.subr.bf16.mxu0 0
  %1303 = vmatpush1.bf16.msra.mxu0 %v1006
  %1304 = vmatprep.subr.bf16.mxu0 0
  %1305 = vmatpush1.bf16.msra.mxu0 %v1007
  %1306 = vmatprep.subr.bf16.mxu0 0
  %1307 = vmatpush1.bf16.msra.mxu0 %v1008
  %1308 = vmatprep.subr.bf16.mxu0 0
  %1309 = vmatpush1.bf16.msra.mxu0 %v1009
  %1310 = vmatprep.subr.bf16.mxu0 0
  %1311 = vmatpush1.bf16.msra.mxu0 %v1010
  %1312 = vmatprep.subr.bf16.mxu0 0
  %1313 = vmatpush1.bf16.msra.mxu0 %v1011
  %1314 = vmatprep.subr.bf16.mxu0 0
  %1315 = vmatpush1.bf16.msra.mxu0 %v1012
  %1316 = vmatprep.subr.bf16.mxu0 0
  %1317 = vmatpush1.bf16.msra.mxu0 %v1013
  %1318 = vmatprep.mubr.bf16.mxu0 %v387
  %1319 = vmatmul.mubr.bf16.gmra.mrb[0].mxu0 %v386
  %v1320 = vpop.f32.mrb[0].mxu0
  %v1321 = vadd.f32 0.0, %v1320
  %v1322 = vpop.f32.mrb[0].mxu0
  %v1323 = vpop.f32.mrb[0].mxu0
  %v1324 = vadd.f32 0.0, %v1323
  %v1325 = vpop.f32.mrb[0].mxu0
  %1326 = vdwg.mxu0
  %1327 = vmatprep.subr.bf16.mxu0 0
  %1328 = vmatpush1.bf16.msra.mxu0 %v1014
  %1329 = vmatprep.subr.bf16.mxu0 0
  %1330 = vmatpush1.bf16.msra.mxu0 %v1015
  %1331 = vmatprep.subr.bf16.mxu0 0
  %1332 = vmatpush1.bf16.msra.mxu0 %v1016
  %1333 = vmatprep.subr.bf16.mxu0 0
  %1334 = vmatpush1.bf16.msra.mxu0 %v1017
  %1335 = vmatprep.subr.bf16.mxu0 0
  %1336 = vmatpush1.bf16.msra.mxu0 %v1018
  %1337 = vmatprep.subr.bf16.mxu0 0
  %1338 = vmatpush1.bf16.msra.mxu0 %v1019
  %1339 = vmatprep.subr.bf16.mxu0 0
  %1340 = vmatpush1.bf16.msra.mxu0 %v1020
  %1341 = vmatprep.subr.bf16.mxu0 0
  %1342 = vmatpush1.bf16.msra.mxu0 %v1021
  %1343 = vmatprep.subr.bf16.mxu0 0
  %1344 = vmatpush1.bf16.msra.mxu0 %v1022
  %1345 = vmatprep.subr.bf16.mxu0 0
  %1346 = vmatpush1.bf16.msra.mxu0 %v1023
  %1347 = vmatprep.subr.bf16.mxu0 0
  %1348 = vmatpush1.bf16.msra.mxu0 %v1024
  %1349 = vmatprep.subr.bf16.mxu0 0
  %1350 = vmatpush1.bf16.msra.mxu0 %v1025
  %1351 = vmatprep.subr.bf16.mxu0 0
  %1352 = vmatpush1.bf16.msra.mxu0 %v1026
  %1353 = vmatprep.subr.bf16.mxu0 0
  %1354 = vmatpush1.bf16.msra.mxu0 %v1027
  %1355 = vmatprep.subr.bf16.mxu0 0
  %1356 = vmatpush1.bf16.msra.mxu0 %v1028
  %1357 = vmatprep.subr.bf16.mxu0 0
  %1358 = vmatpush1.bf16.msra.mxu0 %v1029
  %1359 = vmatprep.mubr.bf16.mxu0 %v389
  %1360 = vmatmul.mubr.bf16.gmra.mrb[0].mxu0 %v388
  %v1361 = vpop.f32.mrb[0].mxu0
  %v1362 = vadd.f32 %v1321, %v1361
  %v1363 = vpop.f32.mrb[0].mxu0
  %v1364 = vpop.f32.mrb[0].mxu0
  %v1365 = vadd.f32 %v1324, %v1364
  %v1366 = vpop.f32.mrb[0].mxu0
  %1367 = vdwg.mxu0
  %1368 = vmatprep.subr.bf16.mxu0 0
  %1369 = vmatpush1.bf16.msra.mxu0 %v1030
  %1370 = vmatprep.subr.bf16.mxu0 0
  %1371 = vmatpush1.bf16.msra.mxu0 %v1031
  %1372 = vmatprep.subr.bf16.mxu0 0
  %1373 = vmatpush1.bf16.msra.mxu0 %v1032
  %1374 = vmatprep.subr.bf16.mxu0 0
  %1375 = vmatpush1.bf16.msra.mxu0 %v1033
  %1376 = vmatprep.subr.bf16.mxu0 0
  %1377 = vmatpush1.bf16.msra.mxu0 %v1034
  %1378 = vmatprep.subr.bf16.mxu0 0
  %1379 = vmatpush1.bf16.msra.mxu0 %v1035
  %1380 = vmatprep.subr.bf16.mxu0 0
  %1381 = vmatpush1.bf16.msra.mxu0 %v1036
  %1382 = vmatprep.subr.bf16.mxu0 0
  %1383 = vmatpush1.bf16.msra.mxu0 %v1037
  %1384 = vmatprep.subr.bf16.mxu0 0
  %1385 = vmatpush1.bf16.msra.mxu0 %v1038
  %1386 = vmatprep.subr.bf16.mxu0 0
  %1387 = vmatpush1.bf16.msra.mxu0 %v1039
  %1388 = vmatprep.subr.bf16.mxu0 0
  %1389 = vmatpush1.bf16.msra.mxu0 %v1040
  %1390 = vmatprep.subr.bf16.mxu0 0
  %1391 = vmatpush1.bf16.msra.mxu0 %v1041
  %1392 = vmatprep.subr.bf16.mxu0 0
  %1393 = vmatpush1.bf16.msra.mxu0 %v1042
  %1394 = vmatprep.subr.bf16.mxu0 0
  %1395 = vmatpush1.bf16.msra.mxu0 %v1043
  %1396 = vmatprep.subr.bf16.mxu0 0
  %1397 = vmatpush1.bf16.msra.mxu0 %v1044
  %1398 = vmatprep.subr.bf16.mxu0 0
  %1399 = vmatpush1.bf16.msra.mxu0 %v1045
  %1400 = vmatprep.mubr.bf16.mxu0 %v391
  %1401 = vmatmul.mubr.bf16.gmra.mrb[0].mxu0 %v390
  %v1402 = vpop.f32.mrb[0].mxu0
  %v1403 = vadd.f32 %v1362, %v1402
  %v1404 = vpop.f32.mrb[0].mxu0
  %v1405 = vpop.f32.mrb[0].mxu0
  %v1406 = vadd.f32 %v1365, %v1405
  %v1407 = vpop.f32.mrb[0].mxu0
  %1408 = vdwg.mxu0
  %1409 = vmatprep.subr.bf16.mxu0 0
  %1410 = vmatpush1.bf16.msra.mxu0 %v1046
  %1411 = vmatprep.subr.bf16.mxu0 0
  %1412 = vmatpush1.bf16.msra.mxu0 %v1047
  %1413 = vmatprep.subr.bf16.mxu0 0
  %1414 = vmatpush1.bf16.msra.mxu0 %v1048
  %1415 = vmatprep.subr.bf16.mxu0 0
  %1416 = vmatpush1.bf16.msra.mxu0 %v1049
  %1417 = vmatprep.subr.bf16.mxu0 0
  %1418 = vmatpush1.bf16.msra.mxu0 %v1050
  %1419 = vmatprep.subr.bf16.mxu0 0
  %1420 = vmatpush1.bf16.msra.mxu0 %v1051
  %1421 = vmatprep.subr.bf16.mxu0 0
  %1422 = vmatpush1.bf16.msra.mxu0 %v1052
  %1423 = vmatprep.subr.bf16.mxu0 0
  %1424 = vmatpush1.bf16.msra.mxu0 %v1053
  %1425 = vmatprep.subr.bf16.mxu0 0
  %1426 = vmatpush1.bf16.msra.mxu0 %v1054
  %1427 = vmatprep.subr.bf16.mxu0 0
  %1428 = vmatpush1.bf16.msra.mxu0 %v1055
  %1429 = vmatprep.subr.bf16.mxu0 0
  %1430 = vmatpush1.bf16.msra.mxu0 %v1056
  %1431 = vmatprep.subr.bf16.mxu0 0
  %1432 = vmatpush1.bf16.msra.mxu0 %v1057
  %1433 = vmatprep.subr.bf16.mxu0 0
  %1434 = vmatpush1.bf16.msra.mxu0 %v1058
  %1435 = vmatprep.subr.bf16.mxu0 0
  %1436 = vmatpush1.bf16.msra.mxu0 %v1059
  %1437 = vmatprep.subr.bf16.mxu0 0
  %1438 = vmatpush1.bf16.msra.mxu0 %v1060
  %1439 = vmatprep.subr.bf16.mxu0 0
  %1440 = vmatpush1.bf16.msra.mxu0 %v1061
  %1441 = vmatprep.mubr.bf16.mxu0 %v393
  %1442 = vmatmul.mubr.bf16.gmra.mrb[0].mxu0 %v392
  %v1443 = vpop.f32.mrb[0].mxu0
  %v1444 = vadd.f32 %v1403, %v1443
  %v1445 = vpop.f32.mrb[0].mxu0
  %v1446 = vpop.f32.mrb[0].mxu0
  %v1447 = vadd.f32 %v1406, %v1446
  %v1448 = vpop.f32.mrb[0].mxu0
  %1449 = vdwg.mxu0
  %1450 = vmatprep.subr.bf16.mxu0 0
  %1451 = vmatpush1.bf16.msra.mxu0 %v1062
  %1452 = vmatprep.subr.bf16.mxu0 0
  %1453 = vmatpush1.bf16.msra.mxu0 %v1063
  %1454 = vmatprep.subr.bf16.mxu0 0
  %1455 = vmatpush1.bf16.msra.mxu0 %v1064
  %1456 = vmatprep.subr.bf16.mxu0 0
  %1457 = vmatpush1.bf16.msra.mxu0 %v1065
  %1458 = vmatprep.subr.bf16.mxu0 0
  %1459 = vmatpush1.bf16.msra.mxu0 %v1066
  %1460 = vmatprep.subr.bf16.mxu0 0
  %1461 = vmatpush1.bf16.msra.mxu0 %v1067
  %1462 = vmatprep.subr.bf16.mxu0 0
  %1463 = vmatpush1.bf16.msra.mxu0 %v1068
  %1464 = vmatprep.subr.bf16.mxu0 0
  %1465 = vmatpush1.bf16.msra.mxu0 %v1069
  %1466 = vmatprep.subr.bf16.mxu0 0
  %1467 = vmatpush1.bf16.msra.mxu0 %v1070
  %1468 = vmatprep.subr.bf16.mxu0 0
  %1469 = vmatpush1.bf16.msra.mxu0 %v1071
  %1470 = vmatprep.subr.bf16.mxu0 0
  %1471 = vmatpush1.bf16.msra.mxu0 %v1072
  %1472 = vmatprep.subr.bf16.mxu0 0
  %1473 = vmatpush1.bf16.msra.mxu0 %v1073
  %1474 = vmatprep.subr.bf16.mxu0 0
  %1475 = vmatpush1.bf16.msra.mxu0 %v1074
  %1476 = vmatprep.subr.bf16.mxu0 0
  %1477 = vmatpush1.bf16.msra.mxu0 %v1075
  %1478 = vmatprep.subr.bf16.mxu0 0
  %1479 = vmatpush1.bf16.msra.mxu0 %v1076
  %1480 = vmatprep.subr.bf16.mxu0 0
  %1481 = vmatpush1.bf16.msra.mxu0 %v1077
  %1482 = vmatprep.mubr.bf16.mxu0 %v395
  %1483 = vmatmul.mubr.bf16.gmra.mrb[0].mxu0 %v394
  %v1484 = vpop.f32.mrb[0].mxu0
  %v1485 = vadd.f32 %v1444, %v1484
  %v1486 = vpop.f32.mrb[0].mxu0
  %v1487 = vpop.f32.mrb[0].mxu0
  %v1488 = vadd.f32 %v1447, %v1487
  %v1489 = vpop.f32.mrb[0].mxu0
  %1490 = vdwg.mxu0
  %1491 = vmatprep.subr.bf16.mxu0 0
  %1492 = vmatpush1.bf16.msra.mxu0 %v1078
  %1493 = vmatprep.subr.bf16.mxu0 0
  %1494 = vmatpush1.bf16.msra.mxu0 %v1079
  %1495 = vmatprep.subr.bf16.mxu0 0
  %1496 = vmatpush1.bf16.msra.mxu0 %v1080
  %1497 = vmatprep.subr.bf16.mxu0 0
  %1498 = vmatpush1.bf16.msra.mxu0 %v1081
  %1499 = vmatprep.subr.bf16.mxu0 0
  %1500 = vmatpush1.bf16.msra.mxu0 %v1082
  %1501 = vmatprep.subr.bf16.mxu0 0
  %1502 = vmatpush1.bf16.msra.mxu0 %v1083
  %1503 = vmatprep.subr.bf16.mxu0 0
  %1504 = vmatpush1.bf16.msra.mxu0 %v1084
  %1505 = vmatprep.subr.bf16.mxu0 0
  %1506 = vmatpush1.bf16.msra.mxu0 %v1085
  %1507 = vmatprep.subr.bf16.mxu0 0
  %1508 = vmatpush1.bf16.msra.mxu0 %v1086
  %1509 = vmatprep.subr.bf16.mxu0 0
  %1510 = vmatpush1.bf16.msra.mxu0 %v1087
  %1511 = vmatprep.subr.bf16.mxu0 0
  %1512 = vmatpush1.bf16.msra.mxu0 %v1088
  %1513 = vmatprep.subr.bf16.mxu0 0
  %1514 = vmatpush1.bf16.msra.mxu0 %v1089
  %1515 = vmatprep.subr.bf16.mxu0 0
  %1516 = vmatpush1.bf16.msra.mxu0 %v1090
  %1517 = vmatprep.subr.bf16.mxu0 0
  %1518 = vmatpush1.bf16.msra.mxu0 %v1091
  %1519 = vmatprep.subr.bf16.mxu0 0
  %1520 = vmatpush1.bf16.msra.mxu0 %v1092
  %1521 = vmatprep.subr.bf16.mxu0 0
  %1522 = vmatpush1.bf16.msra.mxu0 %v1093
  %1523 = vmatprep.mubr.bf16.mxu0 %v397
  %1524 = vmatmul.mubr.bf16.gmra.mrb[0].mxu0 %v396
  %v1525 = vpop.f32.mrb[0].mxu0
  %v1526 = vadd.f32 %v1485, %v1525
  %v1527 = vpop.f32.mrb[0].mxu0
  %v1528 = vpop.f32.mrb[0].mxu0
  %v1529 = vadd.f32 %v1488, %v1528
  %v1530 = vpop.f32.mrb[0].mxu0
  %1531 = vdwg.mxu0
  %1532 = vmatprep.subr.bf16.mxu0 0
  %1533 = vmatpush1.bf16.msra.mxu0 %v1094
  %1534 = vmatprep.subr.bf16.mxu0 0
  %1535 = vmatpush1.bf16.msra.mxu0 %v1095
  %1536 = vmatprep.subr.bf16.mxu0 0
  %1537 = vmatpush1.bf16.msra.mxu0 %v1096
  %1538 = vmatprep.subr.bf16.mxu0 0
  %1539 = vmatpush1.bf16.msra.mxu0 %v1097
  %1540 = vmatprep.subr.bf16.mxu0 0
  %1541 = vmatpush1.bf16.msra.mxu0 %v1098
  %1542 = vmatprep.subr.bf16.mxu0 0
  %1543 = vmatpush1.bf16.msra.mxu0 %v1099
  %1544 = vmatprep.subr.bf16.mxu0 0
  %1545 = vmatpush1.bf16.msra.mxu0 %v1100
  %1546 = vmatprep.subr.bf16.mxu0 0
  %1547 = vmatpush1.bf16.msra.mxu0 %v1101
  %1548 = vmatprep.subr.bf16.mxu0 0
  %1549 = vmatpush1.bf16.msra.mxu0 %v1102
  %1550 = vmatprep.subr.bf16.mxu0 0
  %1551 = vmatpush1.bf16.msra.mxu0 %v1103
  %1552 = vmatprep.subr.bf16.mxu0 0
  %1553 = vmatpush1.bf16.msra.mxu0 %v1104
  %1554 = vmatprep.subr.bf16.mxu0 0
  %1555 = vmatpush1.bf16.msra.mxu0 %v1105
  %1556 = vmatprep.subr.bf16.mxu0 0
  %1557 = vmatpush1.bf16.msra.mxu0 %v1106
  %1558 = vmatprep.subr.bf16.mxu0 0
  %1559 = vmatpush1.bf16.msra.mxu0 %v1107
  %1560 = vmatprep.subr.bf16.mxu0 0
  %1561 = vmatpush1.bf16.msra.mxu0 %v1108
  %1562 = vmatprep.subr.bf16.mxu0 0
  %1563 = vmatpush1.bf16.msra.mxu0 %v1109
  %1564 = vmatprep.mubr.bf16.mxu0 %v399
  %1565 = vmatmul.mubr.bf16.gmra.mrb[0].mxu0 %v398
  %v1566 = vpop.f32.mrb[0].mxu0
  %v1567 = vadd.f32 %v1526, %v1566
  %v1568 = vpop.f32.mrb[0].mxu0
  %v1569 = vpop.f32.mrb[0].mxu0
  %v1570 = vadd.f32 %v1529, %v1569
  %v1571 = vpop.f32.mrb[0].mxu0
  %1572 = vdwg.mxu0
  %1573 = vmatprep.subr.bf16.mxu0 0
  %1574 = vmatpush1.bf16.msra.mxu0 %v1110
  %1575 = vmatprep.subr.bf16.mxu0 0
  %1576 = vmatpush1.bf16.msra.mxu0 %v1111
  %1577 = vmatprep.subr.bf16.mxu0 0
  %1578 = vmatpush1.bf16.msra.mxu0 %v1112
  %1579 = vmatprep.subr.bf16.mxu0 0
  %1580 = vmatpush1.bf16.msra.mxu0 %v1113
  %1581 = vmatprep.subr.bf16.mxu0 0
  %1582 = vmatpush1.bf16.msra.mxu0 %v1114
  %1583 = vmatprep.subr.bf16.mxu0 0
  %1584 = vmatpush1.bf16.msra.mxu0 %v1115
  %1585 = vmatprep.subr.bf16.mxu0 0
  %1586 = vmatpush1.bf16.msra.mxu0 %v1116
  %1587 = vmatprep.subr.bf16.mxu0 0
  %1588 = vmatpush1.bf16.msra.mxu0 %v1117
  %1589 = vmatprep.subr.bf16.mxu0 0
  %1590 = vmatpush1.bf16.msra.mxu0 %v1118
  %1591 = vmatprep.subr.bf16.mxu0 0
  %1592 = vmatpush1.bf16.msra.mxu0 %v1119
  %1593 = vmatprep.subr.bf16.mxu0 0
  %1594 = vmatpush1.bf16.msra.mxu0 %v1120
  %1595 = vmatprep.subr.bf16.mxu0 0
  %1596 = vmatpush1.bf16.msra.mxu0 %v1121
  %1597 = vmatprep.subr.bf16.mxu0 0
  %1598 = vmatpush1.bf16.msra.mxu0 %v1122
  %1599 = vmatprep.subr.bf16.mxu0 0
  %1600 = vmatpush1.bf16.msra.mxu0 %v1123
  %1601 = vmatprep.subr.bf16.mxu0 0
  %1602 = vmatpush1.bf16.msra.mxu0 %v1124
  %1603 = vmatprep.subr.bf16.mxu0 0
  %1604 = vmatpush1.bf16.msra.mxu0 %v1125
  %1605 = vmatprep.mubr.bf16.mxu0 %v401
  %1606 = vmatmul.mubr.bf16.gmra.mrb[0].mxu0 %v400
  %v1607 = vpop.f32.mrb[0].mxu0
  %v1608 = vadd.f32 %v1567, %v1607
  %v1609 = vpop.f32.mrb[0].mxu0
  %v1610 = vpop.f32.mrb[0].mxu0
  %v1611 = vadd.f32 %v1570, %v1610
  %v1612 = vpop.f32.mrb[0].mxu0
  %1613 = vdwg.mxu0
  %1614 = vmatprep.subr.bf16.mxu0 0
  %1615 = vmatpush1.bf16.msra.mxu0 %v1126
  %1616 = vmatprep.subr.bf16.mxu0 0
  %1617 = vmatpush1.bf16.msra.mxu0 %v1127
  %1618 = vmatprep.subr.bf16.mxu0 0
  %1619 = vmatpush1.bf16.msra.mxu0 %v1128
  %1620 = vmatprep.subr.bf16.mxu0 0
  %1621 = vmatpush1.bf16.msra.mxu0 %v1129
  %1622 = vmatprep.subr.bf16.mxu0 0
  %1623 = vmatpush1.bf16.msra.mxu0 %v1130
  %1624 = vmatprep.subr.bf16.mxu0 0
  %1625 = vmatpush1.bf16.msra.mxu0 %v1131
  %1626 = vmatprep.subr.bf16.mxu0 0
  %1627 = vmatpush1.bf16.msra.mxu0 %v1132
  %1628 = vmatprep.subr.bf16.mxu0 0
  %1629 = vmatpush1.bf16.msra.mxu0 %v1133
  %1630 = vmatprep.subr.bf16.mxu0 0
  %1631 = vmatpush1.bf16.msra.mxu0 %v1134
  %1632 = vmatprep.subr.bf16.mxu0 0
  %1633 = vmatpush1.bf16.msra.mxu0 %v1135
  %1634 = vmatprep.subr.bf16.mxu0 0
  %1635 = vmatpush1.bf16.msra.mxu0 %v1136
  %1636 = vmatprep.subr.bf16.mxu0 0
  %1637 = vmatpush1.bf16.msra.mxu0 %v1137
  %1638 = vmatprep.subr.bf16.mxu0 0
  %1639 = vmatpush1.bf16.msra.mxu0 %v1138
  %1640 = vmatprep.subr.bf16.mxu0 0
  %1641 = vmatpush1.bf16.msra.mxu0 %v1139
  %1642 = vmatprep.subr.bf16.mxu0 0
  %1643 = vmatpush1.bf16.msra.mxu0 %v1140
  %1644 = vmatprep.subr.bf16.mxu0 0
  %1645 = vmatpush1.bf16.msra.mxu0 %v1141
  %1646 = vmatprep.mubr.bf16.mxu0 %v403
  %1647 = vmatmul.mubr.bf16.gmra.mrb[0].mxu0 %v402
  %v1648 = vpop.f32.mrb[0].mxu0
  %v1649 = vadd.f32 %v1608, %v1648
  %v1650 = vpop.f32.mrb[0].mxu0
  %v1651 = vpop.f32.mrb[0].mxu0
  %v1652 = vadd.f32 %v1611, %v1651
  %v1653 = vpop.f32.mrb[0].mxu0
  %1654 = vdwg.mxu0
  %v1655 = vadd.f32 %v24, %v1649
  %v1656 = vadd.f32 %v25, %v1652
  %vm1657 = vcmask 7168
  %1658 = vst.msk [vmem:[#allocation2] sm:$0xff] %vm1657, %v1655
  %1659 = vst.msk [vmem:[#allocation2 + $0x8] sm:$0xff] %vm1657, %v1656
  // Predicated region
  $region18: #{forward.8} parent=0 // pred_check
    %p1660 = pneg %p17
  $region19: #{forward.8} parent=0 // pred_check_branch
    %1662 = sbr.rel (%p1660) target = $region21
  $region20: #{forward.8} parent=0 // pred_region
    %v1663 = vld [vmem:[#allocation2] sm:$0xff]
    %v1664 = vld [vmem:[#allocation2 + $0x8] sm:$0xff]
    %v1665 = vld [vmem:[#allocation3] sm:$0x1]
    %v1667 = vlaneseq
    %v1668 = vshrl.u32 %v1667, 7
    %v1669 = vsub.s32 0, %v1668
    %v1670 = vrot.slane %v1665, %v1669
    %v1672 = vadd.f32 %v1663, %v1670
    %v1673 = vadd.f32 %v1664, %v1670
    %1674 = vst.msk [vmem:[%s3] sm:$0xff] %vm1657, %v1672
    %1675 = vst.msk [vmem:[%s3 + $0x8] sm:$0xff] %vm1657, %v1673
  $region21: #{forward.8} parent=0 // pred_fallthru
    _
  // Predicated region
  $region22: #{forward.8} parent=0 // pred_check
    _
  $region23: #{forward.8} parent=0 // pred_check_branch
    %1677 = sbr.rel (0) target = $region25
  $region24: #{forward.8} parent=0 // pred_region
    _
  $region25: #{forward.8} parent=0 // pred_fallthru
    _
  // Predicated region
  $region26: #{forward.8} parent=0 // pred_check
    _
  $region27: #{forward.8} parent=0 // pred_check_branch
    %1679 = sbr.rel (0) target = $region29
  $region28: #{forward.8} parent=0 // pred_region
    _
  $region29: #{forward.8} parent=0 // pred_fallthru
    _

</llo_original>
